<compile_context>
chip_gen: v7x
topology: tpu7x:2x2x1
jax: 0.10.0
libtpu: 0.0.40
codegen_flags: <defaults>
</compile_context>

<pallas_src>
import jax
import jax.numpy as jnp
from jax.experimental import pallas as pl
from jax.experimental.pallas import tpu as pltpu


H_PAD = 128    # lane-tile width of each gate/direction block
O_PAD = 128    # lane-dense padded logit width
MATMUL_DTYPE = jnp.bfloat16   # MXU operand dtype (accumulation stays f32)


# ----------------------------------------------------------------------------
# Fused Pallas kernel: bidirectional GRU + FC epilogue (one batch tile)
# ----------------------------------------------------------------------------
def sentiment_fused_kernel(x_ref,                 # (T*Bt, E)  time-major embeddings (bf16)
                           gxw_ref, gxb_ref,      # (E, 6*Hp) bf16, (1, 6*Hp) f32
                           whh_f_ref, whh_b_ref,  # (Hp, 3*Hp) bf16 fused per-direction W_hh
                           bhn_f_ref, bhn_b_ref,  # (1, Hp) f32 hidden bias of n gate
                           wfc_ref, fcb_ref,      # (T*2*Hp, Op) bf16, (1, Op) f32
                           out_ref):              # (Bt, Op) f32 logits (lane-dense)
    Hp = whh_f_ref.shape[0]
    T = wfc_ref.shape[0] // (2 * Hp)
    TB = x_ref.shape[0]
    Bt = TB // T

    # ---- Hoisted input projection: ONE MXU matmul covers all timesteps, both
    # directions and all three gates (bf16 operands, f32 accumulation). ----
    gx = (jnp.dot(x_ref[...], gxw_ref[...], preferred_element_type=jnp.float32)
          + gxb_ref[...])                                  # (T*Bt, 6*Hp) f32

    whh_f = whh_f_ref[...]
    whh_b = whh_b_ref[...]
    bhn_f = bhn_f_ref[...]
    bhn_b = bhn_b_ref[...]

    def cell(h, gx_t, whh, bhn):
        # Single fused recurrent matmul for all three gates; gate slices of gh
        # land on 128-lane boundaries (Hp=128) -> zero-cost views.
        gh = jnp.dot(h.astype(whh.dtype), whh, preferred_element_type=jnp.float32)
        r = jax.nn.sigmoid(gx_t[:, 0 * Hp:1 * Hp] + gh[:, 0 * Hp:1 * Hp])
        z = jax.nn.sigmoid(gx_t[:, 1 * Hp:2 * Hp] + gh[:, 1 * Hp:2 * Hp])
        # b_ih and b_hh (r/z) are folded into gx; the n-gate hidden bias must
        # stay inside the r * (.) term (PyTorch semantics).
        n = jnp.tanh(gx_t[:, 2 * Hp:3 * Hp] + r * (gh[:, 2 * Hp:3 * Hp] + bhn))
        return n + z * (h - n)        # == (1 - z) * n + z * h

    h_f = jnp.zeros((Bt, Hp), jnp.float32)
    h_b = jnp.zeros((Bt, Hp), jnp.float32)
    hs = [None] * (2 * T)

    # Interleaved fwd/bwd recurrence, fully unrolled (T small & static).
    # Per-step row slices are at Bt(=8k)-row boundaries -> sublane-tile aligned.
    for s in range(T):
        tt = T - 1 - s
        gx_s = gx[s * Bt:(s + 1) * Bt]
        gx_tt = gx[tt * Bt:(tt + 1) * Bt]
        h_f = cell(h_f, gx_s[:, :3 * Hp], whh_f, bhn_f)
        h_b = cell(h_b, gx_tt[:, 3 * Hp:], whh_b, bhn_b)
        hs[2 * s] = h_f          # forward hidden for output time s
        hs[2 * tt + 1] = h_b     # backward hidden for output time tt

    # Lane-dense hidden collection + ONE big FC matmul (replaces 2T tiny N=6
    # dots on the recurrence critical path).
    h_cat = jnp.concatenate(hs, axis=1).astype(wfc_ref.dtype)   # (Bt, T*2*Hp)
    out_ref[...] = (jnp.dot(h_cat, wfc_ref[...],
                            preferred_element_type=jnp.float32)
                    + fcb_ref[...])


# ----------------------------------------------------------------------------
# Parameter re-layout (done ONCE, outside the forward)
# ----------------------------------------------------------------------------
def prepare_params(params, seq_len, h_pad=H_PAD, o_pad=O_PAD,
                   matmul_dtype=MATMUL_DTYPE):
    H = params["whh_f"].shape[1]
    T = seq_len
    O = params["fc_w"].shape[0]

    def split3(w):   # (3H, X) -> r, z, n each (H, X)   [PyTorch gate order]
        return w[:H], w[H:2 * H], w[2 * H:]

    def pad_cols(m):   # (rows, H) -> (rows, h_pad), zero padded lanes
        return jnp.pad(m, ((0, 0), (0, h_pad - m.shape[1])))

    def padv(v):       # (H,) -> (h_pad,)
        return jnp.pad(v, (0, h_pad - v.shape[0]))

    # ---- hoisted input-projection weight (E, 6*h_pad):
    # column blocks [r_f | z_f | n_f | r_b | z_b | n_b], each 128-lane aligned.
    wir_f, wiz_f, win_f = split3(params["wih_f"])
    wir_b, wiz_b, win_b = split3(params["wih_b"])
    gxw = jnp.concatenate(
        [pad_cols(w.T) for w in (wir_f, wiz_f, win_f, wir_b, wiz_b, win_b)],
        axis=1).astype(matmul_dtype)

    bir_f, biz_f, bin_f = split3(params["bih_f"])
    bhr_f, bhz_f, bhn_f = split3(params["bhh_f"])
    bir_b, biz_b, bin_b = split3(params["bih_b"])
    bhr_b, bhz_b, bhn_b = split3(params["bhh_b"])
    # Fold b_hh for r/z gates into the hoisted bias; n-gate b_hh stays separate.
    gxb = jnp.concatenate(
        [padv(bir_f + bhr_f), padv(biz_f + bhz_f), padv(bin_f),
         padv(bir_b + bhr_b), padv(biz_b + bhz_b), padv(bin_b)]
    ).reshape(1, 6 * h_pad).astype(jnp.float32)

    # ---- fused recurrent weights: (h_pad, 3*h_pad) per direction, gate blocks
    # [r | z | n], zero padded rows/cols so padded h lanes stay exactly zero.
    def fuse_whh(whh):
        r, z, n = split3(whh)
        blocks = [jnp.pad(g.T, ((0, h_pad - H), (0, h_pad - H))) for g in (r, z, n)]
        return jnp.concatenate(blocks, axis=1).astype(matmul_dtype)

    whh_fused_f = fuse_whh(params["whh_f"])
    whh_fused_b = fuse_whh(params["whh_b"])

    bhn_f_p = padv(bhn_f).reshape(1, h_pad).astype(jnp.float32)
    bhn_b_p = padv(bhn_b).reshape(1, h_pad).astype(jnp.float32)

    # ---- FC weight, lane-dense: fc_w is (O, T*2H); flatten order of the GRU
    # output is (t, [fwd | bwd], unit).  Re-layout to (T*2*h_pad, o_pad) with
    # zero rows for padded h lanes and zero cols for padded logits.
    w4 = params["fc_w"].reshape(O, T, 2, H)
    w4 = jnp.transpose(w4, (1, 2, 3, 0))                       # (T, 2, H, O)
    w4 = jnp.pad(w4, ((0, 0), (0, 0), (0, h_pad - H), (0, o_pad - O)))
    wfc = w4.reshape(T * 2 * h_pad, o_pad).astype(matmul_dtype)

    fcb = jnp.pad(params["fc_b"], (0, o_pad - O)).reshape(1, o_pad).astype(jnp.float32)

    return dict(
        embedding=params["embedding"].astype(matmul_dtype),
        gxw=gxw, gxb=gxb,
        whh_f=whh_fused_f, whh_b=whh_fused_b,
        bhn_f=bhn_f_p, bhn_b=bhn_b_p,
        wfc=wfc, fcb=fcb,
        meta=dict(H=H, h_pad=h_pad, O=O, o_pad=o_pad, T=T),
    )


# ----------------------------------------------------------------------------
# Forward wrapper
# ----------------------------------------------------------------------------
def sentiment_forward(token_ids, prep):
    """token_ids: (B, T) int32 -> logits (B, O)."""
    B, T = token_ids.shape
    meta = prep["meta"]
    O, o_pad = meta["O"], meta["o_pad"]
    E = prep["embedding"].shape[1]

    # Pad batch to a sublane multiple; padded rows (token id 0) are processed
    # independently and sliced off from the output (no cross-row mixing).
    b_pad8 = ((B + 7) // 8) * 8
    b_tile = min(b_pad8, 256)                       # batch grid tile (8-aligned)
    b_padded = ((b_pad8 + b_tile - 1) // b_tile) * b_tile
    nb = b_padded // b_tile

    ids_p = jnp.pad(token_ids, ((0, b_padded - B), (0, 0)))        # (Bp, T)
    # Arrange embeddings so batch-tile b occupies rows [b*T*b_tile, (b+1)*T*b_tile)
    # in time-major order: row index = b*T*b_tile + t*b_tile + j.
    ids_tm = jnp.transpose(ids_p, (1, 0))                          # (T, Bp)
    ids_tiles = jnp.transpose(ids_tm.reshape(T, nb, b_tile), (1, 0, 2)).reshape(-1)
    x2d = jnp.take(prep["embedding"], ids_tiles, axis=0)           # (nb*T*b_tile, E) bf16
    # Dropout == identity (eval mode).

    args = (x2d, prep["gxw"], prep["gxb"],
            prep["whh_f"], prep["whh_b"],
            prep["bhn_f"], prep["bhn_b"],
            prep["wfc"], prep["fcb"])

    def const_spec(a):
        return pl.BlockSpec(a.shape, lambda b: (0,) * a.ndim)

    out_pad = pl.pallas_call(
        sentiment_fused_kernel,
        out_shape=jax.ShapeDtypeStruct((b_padded, o_pad), jnp.float32),
        grid=(nb,),
        in_specs=[
            pl.BlockSpec((T * b_tile, E), lambda b: (b, 0)),       # x, batch-tiled
            const_spec(prep["gxw"]),
            const_spec(prep["gxb"]),
            const_spec(prep["whh_f"]),
            const_spec(prep["whh_b"]),
            const_spec(prep["bhn_f"]),
            const_spec(prep["bhn_b"]),
            const_spec(prep["wfc"]),
            const_spec(prep["fcb"]),
        ],
        out_specs=pl.BlockSpec((b_tile, o_pad), lambda b: (b, 0)),
        compiler_params=pltpu.CompilerParams(
            dimension_semantics=("parallel",),          # megacore-shardable
            vmem_limit_bytes=48 * 1024 * 1024),         # v7x 64 MiB-safe budget
    )(*args)

    return out_pad[:B, :O]


# ----------------------------------------------------------------------------
# Pure-JAX reference (for correctness check)
# ----------------------------------------------------------------------------
def gru_dir_ref(x_bte, wih, whh, bih, bhh, reverse):
    B, T, _E = x_bte.shape
    H = whh.shape[1]

    def cell(h, x_t):
        gx = x_t @ wih.T + bih
        gh = h @ whh.T + bhh
        r = jax.nn.sigmoid(gx[:, :H] + gh[:, :H])
        z = jax.nn.sigmoid(gx[:, H:2 * H] + gh[:, H:2 * H])
        n = jnp.tanh(gx[:, 2 * H:] + r * gh[:, 2 * H:])
        h_new = (1.0 - z) * n + z * h
        return h_new, h_new

    xs = jnp.transpose(x_bte, (1, 0, 2))
    if reverse:
        xs = xs[::-1]
    _, hs = jax.lax.scan(cell, jnp.zeros((B, H), jnp.float32), xs)
    if reverse:
        hs = hs[::-1]
    return jnp.transpose(hs, (1, 0, 2))                            # (B, T, H)


def sentiment_ref(token_ids, params):
    emb = jnp.take(params["embedding"], token_ids, axis=0)
    out_f = gru_dir_ref(emb, params["wih_f"], params["whh_f"],
                        params["bih_f"], params["bhh_f"], reverse=False)
    out_b = gru_dir_ref(emb, params["wih_b"], params["whh_b"],
                        params["bih_b"], params["bhh_b"], reverse=True)
    gru_out = jnp.concatenate([out_f, out_b], axis=-1)
    flat = gru_out.reshape(gru_out.shape[0], -1)
    return flat @ params["fc_w"].T + params["fc_b"]


# ----------------------------------------------------------------------------
# Main
# ----------------------------------------------------------------------------
if __name__ == "__main__":
    VOCAB = 50
    EMBED = 16
    HIDDEN = 32
    SEQ = 8
    BATCH = 2
    FC_IN = SEQ * 2 * HIDDEN   # analogue of 15000 in the original module
    FC_OUT = 6

    key = jax.random.PRNGKey(0)
    ks = jax.random.split(key, 12)
    s = 0.1
    params = {
        "embedding": jax.random.normal(ks[0], (VOCAB, EMBED), jnp.float32) * s,
        # forward direction (torch layout)
        "wih_f": jax.random.normal(ks[1], (3 * HIDDEN, EMBED), jnp.float32) * s,
        "whh_f": jax.random.normal(ks[2], (3 * HIDDEN, HIDDEN), jnp.float32) * s,
        "bih_f": jax.random.normal(ks[3], (3 * HIDDEN,), jnp.float32) * s,
        "bhh_f": jax.random.normal(ks[4], (3 * HIDDEN,), jnp.float32) * s,
        # backward direction
        "wih_b": jax.random.normal(ks[5], (3 * HIDDEN, EMBED), jnp.float32) * s,
        "whh_b": jax.random.normal(ks[6], (3 * HIDDEN, HIDDEN), jnp.float32) * s,
        "bih_b": jax.random.normal(ks[7], (3 * HIDDEN,), jnp.float32) * s,
        "bhh_b": jax.random.normal(ks[8], (3 * HIDDEN,), jnp.float32) * s,
        # final linear
        "fc_w": jax.random.normal(ks[9], (FC_OUT, FC_IN), jnp.float32) * s,
        "fc_b": jax.random.normal(ks[10], (FC_OUT,), jnp.float32) * s,
    }

    token_ids = jax.random.randint(ks[11], (BATCH, SEQ), 0, VOCAB, jnp.int32)

    prep = prepare_params(params, SEQ)   # one-time weight re-layout

    out = jax.block_until_ready(sentiment_forward(token_ids, prep))
    ref = jax.block_until_ready(sentiment_ref(token_ids, params))

    assert out.shape == (BATCH, FC_OUT), out.shape
    # bf16 MXU operands (f32 accumulation) -> looser tolerance than f32-exact.
    assert jnp.allclose(out, ref, atol=5e-2, rtol=5e-2), (out, ref)

    print("KERNEL_OK")
</pallas_src>

<mosaic_0001>
module attributes {stable_mosaic.version = 11 : i64} {
  func.func @sentiment_fused_kernel(%arg0: i32, %arg1: memref<64x16xbf16, #tpu.memory_space<vmem>>, %arg2: memref<16x768xbf16, #tpu.memory_space<vmem>>, %arg3: memref<1x768xf32, #tpu.memory_space<vmem>>, %arg4: memref<128x384xbf16, #tpu.memory_space<vmem>>, %arg5: memref<128x384xbf16, #tpu.memory_space<vmem>>, %arg6: memref<1x128xf32, #tpu.memory_space<vmem>>, %arg7: memref<1x128xf32, #tpu.memory_space<vmem>>, %arg8: memref<2048x128xbf16, #tpu.memory_space<vmem>>, %arg9: memref<1x128xf32, #tpu.memory_space<vmem>>, %arg10: memref<8x128xf32, #tpu.memory_space<vmem>>) attributes {dimension_semantics = [#tpu.dimension_semantics<parallel>], iteration_bounds = array<i64: 1>, scalar_prefetch = 0 : i64, scratch_operands = 0 : i64, tpu.core_type = #tpu.core_type<tc>, window_params = [{transform_indices = @transform_0, window_bounds = array<i64: 64, 16>}, {pipeline_mode = #tpu.pipeline_mode<synchronous>, transform_indices = @transform_1, window_bounds = array<i64: 16, 768>}, {pipeline_mode = #tpu.pipeline_mode<synchronous>, transform_indices = @transform_2, window_bounds = array<i64: 1, 768>}, {pipeline_mode = #tpu.pipeline_mode<synchronous>, transform_indices = @transform_3, window_bounds = array<i64: 128, 384>}, {pipeline_mode = #tpu.pipeline_mode<synchronous>, transform_indices = @transform_4, window_bounds = array<i64: 128, 384>}, {pipeline_mode = #tpu.pipeline_mode<synchronous>, transform_indices = @transform_5, window_bounds = array<i64: 1, 128>}, {pipeline_mode = #tpu.pipeline_mode<synchronous>, transform_indices = @transform_6, window_bounds = array<i64: 1, 128>}, {pipeline_mode = #tpu.pipeline_mode<synchronous>, transform_indices = @transform_7, window_bounds = array<i64: 2048, 128>}, {pipeline_mode = #tpu.pipeline_mode<synchronous>, transform_indices = @transform_8, window_bounds = array<i64: 1, 128>}, {transform_indices = @transform_9, window_bounds = array<i64: 8, 128>}]} {
    %c0 = arith.constant 0 : index
    %c0_0 = arith.constant 0 : index
    %0 = vector.load %arg1[%c0, %c0_0] : memref<64x16xbf16, #tpu.memory_space<vmem>>, vector<64x16xbf16>
    %c0_1 = arith.constant 0 : index
    %c0_2 = arith.constant 0 : index
    %1 = vector.load %arg2[%c0_1, %c0_2] : memref<16x768xbf16, #tpu.memory_space<vmem>>, vector<16x768xbf16>
    %cst = arith.constant dense<0.000000e+00> : vector<64x768xf32>
    %2 = tpu.matmul %0, %1, %cst {dimension_numbers = #tpu.dot_dimension_numbers<[1], [0], [0], [1], [0, 0, 1, 1], [], []>} : vector<64x16xbf16>, vector<16x768xbf16>, vector<64x768xf32> -> vector<64x768xf32>
    %c0_3 = arith.constant 0 : index
    %c0_4 = arith.constant 0 : index
    %3 = vector.load %arg3[%c0_3, %c0_4] : memref<1x768xf32, #tpu.memory_space<vmem>>, vector<1x768xf32>
    %4 = vector.broadcast %3 : vector<1x768xf32> to vector<64x768xf32>
    %5 = arith.addf %2, %4 : vector<64x768xf32>
    %c0_5 = arith.constant 0 : index
    %c0_6 = arith.constant 0 : index
    %6 = vector.load %arg4[%c0_5, %c0_6] : memref<128x384xbf16, #tpu.memory_space<vmem>>, vector<128x384xbf16>
    %c0_7 = arith.constant 0 : index
    %c0_8 = arith.constant 0 : index
    %7 = vector.load %arg5[%c0_7, %c0_8] : memref<128x384xbf16, #tpu.memory_space<vmem>>, vector<128x384xbf16>
    %c0_9 = arith.constant 0 : index
    %c0_10 = arith.constant 0 : index
    %8 = vector.load %arg6[%c0_9, %c0_10] : memref<1x128xf32, #tpu.memory_space<vmem>>, vector<1x128xf32>
    %c0_11 = arith.constant 0 : index
    %c0_12 = arith.constant 0 : index
    %9 = vector.load %arg7[%c0_11, %c0_12] : memref<1x128xf32, #tpu.memory_space<vmem>>, vector<1x128xf32>
    %cst_13 = arith.constant 0.000000e+00 : f32
    %10 = vector.broadcast %cst_13 : f32 to vector<8x128xf32>
    %cst_14 = arith.constant 0.000000e+00 : f32
    %11 = vector.broadcast %cst_14 : f32 to vector<8x128xf32>
    %12 = vector.extract_strided_slice %5 {offsets = [0, 0], sizes = [8, 768], strides = [1, 1]} : vector<64x768xf32> to vector<8x768xf32>
    %13 = vector.extract_strided_slice %5 {offsets = [56, 0], sizes = [8, 768], strides = [1, 1]} : vector<64x768xf32> to vector<8x768xf32>
    %14 = vector.extract_strided_slice %12 {offsets = [0, 0], sizes = [8, 384], strides = [1, 1]} : vector<8x768xf32> to vector<8x384xf32>
    %15 = arith.truncf %10 : vector<8x128xf32> to vector<8x128xbf16>
    %cst_15 = arith.constant dense<0.000000e+00> : vector<8x384xf32>
    %16 = tpu.matmul %15, %6, %cst_15 {dimension_numbers = #tpu.dot_dimension_numbers<[1], [0], [0], [1], [0, 0, 1, 1], [], []>} : vector<8x128xbf16>, vector<128x384xbf16>, vector<8x384xf32> -> vector<8x384xf32>
    %17 = vector.extract_strided_slice %14 {offsets = [0, 0], sizes = [8, 128], strides = [1, 1]} : vector<8x384xf32> to vector<8x128xf32>
    %18 = vector.extract_strided_slice %16 {offsets = [0, 0], sizes = [8, 128], strides = [1, 1]} : vector<8x384xf32> to vector<8x128xf32>
    %19 = arith.addf %17, %18 : vector<8x128xf32>
    %20 = arith.negf %19 : vector<8x128xf32>
    %21 = math.exp %20 : vector<8x128xf32>
    %cst_16 = arith.constant 1.000000e+00 : f32
    %22 = vector.broadcast %cst_16 : f32 to vector<8x128xf32>
    %23 = arith.addf %22, %21 : vector<8x128xf32>
    %24 = arith.divf %22, %23 : vector<8x128xf32>
    %25 = vector.extract_strided_slice %14 {offsets = [0, 128], sizes = [8, 128], strides = [1, 1]} : vector<8x384xf32> to vector<8x128xf32>
    %26 = vector.extract_strided_slice %16 {offsets = [0, 128], sizes = [8, 128], strides = [1, 1]} : vector<8x384xf32> to vector<8x128xf32>
    %27 = arith.addf %25, %26 : vector<8x128xf32>
    %28 = arith.negf %27 : vector<8x128xf32>
    %29 = math.exp %28 : vector<8x128xf32>
    %cst_17 = arith.constant 1.000000e+00 : f32
    %30 = vector.broadcast %cst_17 : f32 to vector<8x128xf32>
    %31 = arith.addf %30, %29 : vector<8x128xf32>
    %32 = arith.divf %30, %31 : vector<8x128xf32>
    %33 = vector.extract_strided_slice %14 {offsets = [0, 256], sizes = [8, 128], strides = [1, 1]} : vector<8x384xf32> to vector<8x128xf32>
    %34 = vector.extract_strided_slice %16 {offsets = [0, 256], sizes = [8, 128], strides = [1, 1]} : vector<8x384xf32> to vector<8x128xf32>
    %35 = vector.broadcast %8 : vector<1x128xf32> to vector<8x128xf32>
    %36 = arith.addf %34, %35 : vector<8x128xf32>
    %37 = arith.mulf %24, %36 : vector<8x128xf32>
    %38 = arith.addf %33, %37 : vector<8x128xf32>
    %39 = math.tanh %38 : vector<8x128xf32>
    %40 = arith.subf %10, %39 : vector<8x128xf32>
    %41 = arith.mulf %32, %40 : vector<8x128xf32>
    %42 = arith.addf %39, %41 : vector<8x128xf32>
    %43 = vector.extract_strided_slice %13 {offsets = [0, 384], sizes = [8, 384], strides = [1, 1]} : vector<8x768xf32> to vector<8x384xf32>
    %44 = arith.truncf %11 : vector<8x128xf32> to vector<8x128xbf16>
    %cst_18 = arith.constant dense<0.000000e+00> : vector<8x384xf32>
    %45 = tpu.matmul %44, %7, %cst_18 {dimension_numbers = #tpu.dot_dimension_numbers<[1], [0], [0], [1], [0, 0, 1, 1], [], []>} : vector<8x128xbf16>, vector<128x384xbf16>, vector<8x384xf32> -> vector<8x384xf32>
    %46 = vector.extract_strided_slice %43 {offsets = [0, 0], sizes = [8, 128], strides = [1, 1]} : vector<8x384xf32> to vector<8x128xf32>
    %47 = vector.extract_strided_slice %45 {offsets = [0, 0], sizes = [8, 128], strides = [1, 1]} : vector<8x384xf32> to vector<8x128xf32>
    %48 = arith.addf %46, %47 : vector<8x128xf32>
    %49 = arith.negf %48 : vector<8x128xf32>
    %50 = math.exp %49 : vector<8x128xf32>
    %cst_19 = arith.constant 1.000000e+00 : f32
    %51 = vector.broadcast %cst_19 : f32 to vector<8x128xf32>
    %52 = arith.addf %51, %50 : vector<8x128xf32>
    %53 = arith.divf %51, %52 : vector<8x128xf32>
    %54 = vector.extract_strided_slice %43 {offsets = [0, 128], sizes = [8, 128], strides = [1, 1]} : vector<8x384xf32> to vector<8x128xf32>
    %55 = vector.extract_strided_slice %45 {offsets = [0, 128], sizes = [8, 128], strides = [1, 1]} : vector<8x384xf32> to vector<8x128xf32>
    %56 = arith.addf %54, %55 : vector<8x128xf32>
    %57 = arith.negf %56 : vector<8x128xf32>
    %58 = math.exp %57 : vector<8x128xf32>
    %cst_20 = arith.constant 1.000000e+00 : f32
    %59 = vector.broadcast %cst_20 : f32 to vector<8x128xf32>
    %60 = arith.addf %59, %58 : vector<8x128xf32>
    %61 = arith.divf %59, %60 : vector<8x128xf32>
    %62 = vector.extract_strided_slice %43 {offsets = [0, 256], sizes = [8, 128], strides = [1, 1]} : vector<8x384xf32> to vector<8x128xf32>
    %63 = vector.extract_strided_slice %45 {offsets = [0, 256], sizes = [8, 128], strides = [1, 1]} : vector<8x384xf32> to vector<8x128xf32>
    %64 = vector.broadcast %9 : vector<1x128xf32> to vector<8x128xf32>
    %65 = arith.addf %63, %64 : vector<8x128xf32>
    %66 = arith.mulf %53, %65 : vector<8x128xf32>
    %67 = arith.addf %62, %66 : vector<8x128xf32>
    %68 = math.tanh %67 : vector<8x128xf32>
    %69 = arith.subf %11, %68 : vector<8x128xf32>
    %70 = arith.mulf %61, %69 : vector<8x128xf32>
    %71 = arith.addf %68, %70 : vector<8x128xf32>
    %72 = vector.extract_strided_slice %5 {offsets = [8, 0], sizes = [8, 768], strides = [1, 1]} : vector<64x768xf32> to vector<8x768xf32>
    %73 = vector.extract_strided_slice %5 {offsets = [48, 0], sizes = [8, 768], strides = [1, 1]} : vector<64x768xf32> to vector<8x768xf32>
    %74 = vector.extract_strided_slice %72 {offsets = [0, 0], sizes = [8, 384], strides = [1, 1]} : vector<8x768xf32> to vector<8x384xf32>
    %75 = arith.truncf %42 : vector<8x128xf32> to vector<8x128xbf16>
    %cst_21 = arith.constant dense<0.000000e+00> : vector<8x384xf32>
    %76 = tpu.matmul %75, %6, %cst_21 {dimension_numbers = #tpu.dot_dimension_numbers<[1], [0], [0], [1], [0, 0, 1, 1], [], []>} : vector<8x128xbf16>, vector<128x384xbf16>, vector<8x384xf32> -> vector<8x384xf32>
    %77 = vector.extract_strided_slice %74 {offsets = [0, 0], sizes = [8, 128], strides = [1, 1]} : vector<8x384xf32> to vector<8x128xf32>
    %78 = vector.extract_strided_slice %76 {offsets = [0, 0], sizes = [8, 128], strides = [1, 1]} : vector<8x384xf32> to vector<8x128xf32>
    %79 = arith.addf %77, %78 : vector<8x128xf32>
    %80 = arith.negf %79 : vector<8x128xf32>
    %81 = math.exp %80 : vector<8x128xf32>
    %cst_22 = arith.constant 1.000000e+00 : f32
    %82 = vector.broadcast %cst_22 : f32 to vector<8x128xf32>
    %83 = arith.addf %82, %81 : vector<8x128xf32>
    %84 = arith.divf %82, %83 : vector<8x128xf32>
    %85 = vector.extract_strided_slice %74 {offsets = [0, 128], sizes = [8, 128], strides = [1, 1]} : vector<8x384xf32> to vector<8x128xf32>
    %86 = vector.extract_strided_slice %76 {offsets = [0, 128], sizes = [8, 128], strides = [1, 1]} : vector<8x384xf32> to vector<8x128xf32>
    %87 = arith.addf %85, %86 : vector<8x128xf32>
    %88 = arith.negf %87 : vector<8x128xf32>
    %89 = math.exp %88 : vector<8x128xf32>
    %cst_23 = arith.constant 1.000000e+00 : f32
    %90 = vector.broadcast %cst_23 : f32 to vector<8x128xf32>
    %91 = arith.addf %90, %89 : vector<8x128xf32>
    %92 = arith.divf %90, %91 : vector<8x128xf32>
    %93 = vector.extract_strided_slice %74 {offsets = [0, 256], sizes = [8, 128], strides = [1, 1]} : vector<8x384xf32> to vector<8x128xf32>
    %94 = vector.extract_strided_slice %76 {offsets = [0, 256], sizes = [8, 128], strides = [1, 1]} : vector<8x384xf32> to vector<8x128xf32>
    %95 = vector.broadcast %8 : vector<1x128xf32> to vector<8x128xf32>
    %96 = arith.addf %94, %95 : vector<8x128xf32>
    %97 = arith.mulf %84, %96 : vector<8x128xf32>
    %98 = arith.addf %93, %97 : vector<8x128xf32>
    %99 = math.tanh %98 : vector<8x128xf32>
    %100 = arith.subf %42, %99 : vector<8x128xf32>
    %101 = arith.mulf %92, %100 : vector<8x128xf32>
    %102 = arith.addf %99, %101 : vector<8x128xf32>
    %103 = vector.extract_strided_slice %73 {offsets = [0, 384], sizes = [8, 384], strides = [1, 1]} : vector<8x768xf32> to vector<8x384xf32>
    %104 = arith.truncf %71 : vector<8x128xf32> to vector<8x128xbf16>
    %cst_24 = arith.constant dense<0.000000e+00> : vector<8x384xf32>
    %105 = tpu.matmul %104, %7, %cst_24 {dimension_numbers = #tpu.dot_dimension_numbers<[1], [0], [0], [1], [0, 0, 1, 1], [], []>} : vector<8x128xbf16>, vector<128x384xbf16>, vector<8x384xf32> -> vector<8x384xf32>
    %106 = vector.extract_strided_slice %103 {offsets = [0, 0], sizes = [8, 128], strides = [1, 1]} : vector<8x384xf32> to vector<8x128xf32>
    %107 = vector.extract_strided_slice %105 {offsets = [0, 0], sizes = [8, 128], strides = [1, 1]} : vector<8x384xf32> to vector<8x128xf32>
    %108 = arith.addf %106, %107 : vector<8x128xf32>
    %109 = arith.negf %108 : vector<8x128xf32>
    %110 = math.exp %109 : vector<8x128xf32>
    %cst_25 = arith.constant 1.000000e+00 : f32
    %111 = vector.broadcast %cst_25 : f32 to vector<8x128xf32>
    %112 = arith.addf %111, %110 : vector<8x128xf32>
    %113 = arith.divf %111, %112 : vector<8x128xf32>
    %114 = vector.extract_strided_slice %103 {offsets = [0, 128], sizes = [8, 128], strides = [1, 1]} : vector<8x384xf32> to vector<8x128xf32>
    %115 = vector.extract_strided_slice %105 {offsets = [0, 128], sizes = [8, 128], strides = [1, 1]} : vector<8x384xf32> to vector<8x128xf32>
    %116 = arith.addf %114, %115 : vector<8x128xf32>
    %117 = arith.negf %116 : vector<8x128xf32>
    %118 = math.exp %117 : vector<8x128xf32>
    %cst_26 = arith.constant 1.000000e+00 : f32
    %119 = vector.broadcast %cst_26 : f32 to vector<8x128xf32>
    %120 = arith.addf %119, %118 : vector<8x128xf32>
    %121 = arith.divf %119, %120 : vector<8x128xf32>
    %122 = vector.extract_strided_slice %103 {offsets = [0, 256], sizes = [8, 128], strides = [1, 1]} : vector<8x384xf32> to vector<8x128xf32>
    %123 = vector.extract_strided_slice %105 {offsets = [0, 256], sizes = [8, 128], strides = [1, 1]} : vector<8x384xf32> to vector<8x128xf32>
    %124 = vector.broadcast %9 : vector<1x128xf32> to vector<8x128xf32>
    %125 = arith.addf %123, %124 : vector<8x128xf32>
    %126 = arith.mulf %113, %125 : vector<8x128xf32>
    %127 = arith.addf %122, %126 : vector<8x128xf32>
    %128 = math.tanh %127 : vector<8x128xf32>
    %129 = arith.subf %71, %128 : vector<8x128xf32>
    %130 = arith.mulf %121, %129 : vector<8x128xf32>
    %131 = arith.addf %128, %130 : vector<8x128xf32>
    %132 = vector.extract_strided_slice %5 {offsets = [16, 0], sizes = [8, 768], strides = [1, 1]} : vector<64x768xf32> to vector<8x768xf32>
    %133 = vector.extract_strided_slice %5 {offsets = [40, 0], sizes = [8, 768], strides = [1, 1]} : vector<64x768xf32> to vector<8x768xf32>
    %134 = vector.extract_strided_slice %132 {offsets = [0, 0], sizes = [8, 384], strides = [1, 1]} : vector<8x768xf32> to vector<8x384xf32>
    %135 = arith.truncf %102 : vector<8x128xf32> to vector<8x128xbf16>
    %cst_27 = arith.constant dense<0.000000e+00> : vector<8x384xf32>
    %136 = tpu.matmul %135, %6, %cst_27 {dimension_numbers = #tpu.dot_dimension_numbers<[1], [0], [0], [1], [0, 0, 1, 1], [], []>} : vector<8x128xbf16>, vector<128x384xbf16>, vector<8x384xf32> -> vector<8x384xf32>
    %137 = vector.extract_strided_slice %134 {offsets = [0, 0], sizes = [8, 128], strides = [1, 1]} : vector<8x384xf32> to vector<8x128xf32>
    %138 = vector.extract_strided_slice %136 {offsets = [0, 0], sizes = [8, 128], strides = [1, 1]} : vector<8x384xf32> to vector<8x128xf32>
    %139 = arith.addf %137, %138 : vector<8x128xf32>
    %140 = arith.negf %139 : vector<8x128xf32>
    %141 = math.exp %140 : vector<8x128xf32>
    %cst_28 = arith.constant 1.000000e+00 : f32
    %142 = vector.broadcast %cst_28 : f32 to vector<8x128xf32>
    %143 = arith.addf %142, %141 : vector<8x128xf32>
    %144 = arith.divf %142, %143 : vector<8x128xf32>
    %145 = vector.extract_strided_slice %134 {offsets = [0, 128], sizes = [8, 128], strides = [1, 1]} : vector<8x384xf32> to vector<8x128xf32>
    %146 = vector.extract_strided_slice %136 {offsets = [0, 128], sizes = [8, 128], strides = [1, 1]} : vector<8x384xf32> to vector<8x128xf32>
    %147 = arith.addf %145, %146 : vector<8x128xf32>
    %148 = arith.negf %147 : vector<8x128xf32>
    %149 = math.exp %148 : vector<8x128xf32>
    %cst_29 = arith.constant 1.000000e+00 : f32
    %150 = vector.broadcast %cst_29 : f32 to vector<8x128xf32>
    %151 = arith.addf %150, %149 : vector<8x128xf32>
    %152 = arith.divf %150, %151 : vector<8x128xf32>
    %153 = vector.extract_strided_slice %134 {offsets = [0, 256], sizes = [8, 128], strides = [1, 1]} : vector<8x384xf32> to vector<8x128xf32>
    %154 = vector.extract_strided_slice %136 {offsets = [0, 256], sizes = [8, 128], strides = [1, 1]} : vector<8x384xf32> to vector<8x128xf32>
    %155 = vector.broadcast %8 : vector<1x128xf32> to vector<8x128xf32>
    %156 = arith.addf %154, %155 : vector<8x128xf32>
    %157 = arith.mulf %144, %156 : vector<8x128xf32>
    %158 = arith.addf %153, %157 : vector<8x128xf32>
    %159 = math.tanh %158 : vector<8x128xf32>
    %160 = arith.subf %102, %159 : vector<8x128xf32>
    %161 = arith.mulf %152, %160 : vector<8x128xf32>
    %162 = arith.addf %159, %161 : vector<8x128xf32>
    %163 = vector.extract_strided_slice %133 {offsets = [0, 384], sizes = [8, 384], strides = [1, 1]} : vector<8x768xf32> to vector<8x384xf32>
    %164 = arith.truncf %131 : vector<8x128xf32> to vector<8x128xbf16>
    %cst_30 = arith.constant dense<0.000000e+00> : vector<8x384xf32>
    %165 = tpu.matmul %164, %7, %cst_30 {dimension_numbers = #tpu.dot_dimension_numbers<[1], [0], [0], [1], [0, 0, 1, 1], [], []>} : vector<8x128xbf16>, vector<128x384xbf16>, vector<8x384xf32> -> vector<8x384xf32>
    %166 = vector.extract_strided_slice %163 {offsets = [0, 0], sizes = [8, 128], strides = [1, 1]} : vector<8x384xf32> to vector<8x128xf32>
    %167 = vector.extract_strided_slice %165 {offsets = [0, 0], sizes = [8, 128], strides = [1, 1]} : vector<8x384xf32> to vector<8x128xf32>
    %168 = arith.addf %166, %167 : vector<8x128xf32>
    %169 = arith.negf %168 : vector<8x128xf32>
    %170 = math.exp %169 : vector<8x128xf32>
    %cst_31 = arith.constant 1.000000e+00 : f32
    %171 = vector.broadcast %cst_31 : f32 to vector<8x128xf32>
    %172 = arith.addf %171, %170 : vector<8x128xf32>
    %173 = arith.divf %171, %172 : vector<8x128xf32>
    %174 = vector.extract_strided_slice %163 {offsets = [0, 128], sizes = [8, 128], strides = [1, 1]} : vector<8x384xf32> to vector<8x128xf32>
    %175 = vector.extract_strided_slice %165 {offsets = [0, 128], sizes = [8, 128], strides = [1, 1]} : vector<8x384xf32> to vector<8x128xf32>
    %176 = arith.addf %174, %175 : vector<8x128xf32>
    %177 = arith.negf %176 : vector<8x128xf32>
    %178 = math.exp %177 : vector<8x128xf32>
    %cst_32 = arith.constant 1.000000e+00 : f32
    %179 = vector.broadcast %cst_32 : f32 to vector<8x128xf32>
    %180 = arith.addf %179, %178 : vector<8x128xf32>
    %181 = arith.divf %179, %180 : vector<8x128xf32>
    %182 = vector.extract_strided_slice %163 {offsets = [0, 256], sizes = [8, 128], strides = [1, 1]} : vector<8x384xf32> to vector<8x128xf32>
    %183 = vector.extract_strided_slice %165 {offsets = [0, 256], sizes = [8, 128], strides = [1, 1]} : vector<8x384xf32> to vector<8x128xf32>
    %184 = vector.broadcast %9 : vector<1x128xf32> to vector<8x128xf32>
    %185 = arith.addf %183, %184 : vector<8x128xf32>
    %186 = arith.mulf %173, %185 : vector<8x128xf32>
    %187 = arith.addf %182, %186 : vector<8x128xf32>
    %188 = math.tanh %187 : vector<8x128xf32>
    %189 = arith.subf %131, %188 : vector<8x128xf32>
    %190 = arith.mulf %181, %189 : vector<8x128xf32>
    %191 = arith.addf %188, %190 : vector<8x128xf32>
    %192 = vector.extract_strided_slice %5 {offsets = [24, 0], sizes = [8, 768], strides = [1, 1]} : vector<64x768xf32> to vector<8x768xf32>
    %193 = vector.extract_strided_slice %5 {offsets = [32, 0], sizes = [8, 768], strides = [1, 1]} : vector<64x768xf32> to vector<8x768xf32>
    %194 = vector.extract_strided_slice %192 {offsets = [0, 0], sizes = [8, 384], strides = [1, 1]} : vector<8x768xf32> to vector<8x384xf32>
    %195 = arith.truncf %162 : vector<8x128xf32> to vector<8x128xbf16>
    %cst_33 = arith.constant dense<0.000000e+00> : vector<8x384xf32>
    %196 = tpu.matmul %195, %6, %cst_33 {dimension_numbers = #tpu.dot_dimension_numbers<[1], [0], [0], [1], [0, 0, 1, 1], [], []>} : vector<8x128xbf16>, vector<128x384xbf16>, vector<8x384xf32> -> vector<8x384xf32>
    %197 = vector.extract_strided_slice %194 {offsets = [0, 0], sizes = [8, 128], strides = [1, 1]} : vector<8x384xf32> to vector<8x128xf32>
    %198 = vector.extract_strided_slice %196 {offsets = [0, 0], sizes = [8, 128], strides = [1, 1]} : vector<8x384xf32> to vector<8x128xf32>
    %199 = arith.addf %197, %198 : vector<8x128xf32>
    %200 = arith.negf %199 : vector<8x128xf32>
    %201 = math.exp %200 : vector<8x128xf32>
    %cst_34 = arith.constant 1.000000e+00 : f32
    %202 = vector.broadcast %cst_34 : f32 to vector<8x128xf32>
    %203 = arith.addf %202, %201 : vector<8x128xf32>
    %204 = arith.divf %202, %203 : vector<8x128xf32>
    %205 = vector.extract_strided_slice %194 {offsets = [0, 128], sizes = [8, 128], strides = [1, 1]} : vector<8x384xf32> to vector<8x128xf32>
    %206 = vector.extract_strided_slice %196 {offsets = [0, 128], sizes = [8, 128], strides = [1, 1]} : vector<8x384xf32> to vector<8x128xf32>
    %207 = arith.addf %205, %206 : vector<8x128xf32>
    %208 = arith.negf %207 : vector<8x128xf32>
    %209 = math.exp %208 : vector<8x128xf32>
    %cst_35 = arith.constant 1.000000e+00 : f32
    %210 = vector.broadcast %cst_35 : f32 to vector<8x128xf32>
    %211 = arith.addf %210, %209 : vector<8x128xf32>
    %212 = arith.divf %210, %211 : vector<8x128xf32>
    %213 = vector.extract_strided_slice %194 {offsets = [0, 256], sizes = [8, 128], strides = [1, 1]} : vector<8x384xf32> to vector<8x128xf32>
    %214 = vector.extract_strided_slice %196 {offsets = [0, 256], sizes = [8, 128], strides = [1, 1]} : vector<8x384xf32> to vector<8x128xf32>
    %215 = vector.broadcast %8 : vector<1x128xf32> to vector<8x128xf32>
    %216 = arith.addf %214, %215 : vector<8x128xf32>
    %217 = arith.mulf %204, %216 : vector<8x128xf32>
    %218 = arith.addf %213, %217 : vector<8x128xf32>
    %219 = math.tanh %218 : vector<8x128xf32>
    %220 = arith.subf %162, %219 : vector<8x128xf32>
    %221 = arith.mulf %212, %220 : vector<8x128xf32>
    %222 = arith.addf %219, %221 : vector<8x128xf32>
    %223 = vector.extract_strided_slice %193 {offsets = [0, 384], sizes = [8, 384], strides = [1, 1]} : vector<8x768xf32> to vector<8x384xf32>
    %224 = arith.truncf %191 : vector<8x128xf32> to vector<8x128xbf16>
    %cst_36 = arith.constant dense<0.000000e+00> : vector<8x384xf32>
    %225 = tpu.matmul %224, %7, %cst_36 {dimension_numbers = #tpu.dot_dimension_numbers<[1], [0], [0], [1], [0, 0, 1, 1], [], []>} : vector<8x128xbf16>, vector<128x384xbf16>, vector<8x384xf32> -> vector<8x384xf32>
    %226 = vector.extract_strided_slice %223 {offsets = [0, 0], sizes = [8, 128], strides = [1, 1]} : vector<8x384xf32> to vector<8x128xf32>
    %227 = vector.extract_strided_slice %225 {offsets = [0, 0], sizes = [8, 128], strides = [1, 1]} : vector<8x384xf32> to vector<8x128xf32>
    %228 = arith.addf %226, %227 : vector<8x128xf32>
    %229 = arith.negf %228 : vector<8x128xf32>
    %230 = math.exp %229 : vector<8x128xf32>
    %cst_37 = arith.constant 1.000000e+00 : f32
    %231 = vector.broadcast %cst_37 : f32 to vector<8x128xf32>
    %232 = arith.addf %231, %230 : vector<8x128xf32>
    %233 = arith.divf %231, %232 : vector<8x128xf32>
    %234 = vector.extract_strided_slice %223 {offsets = [0, 128], sizes = [8, 128], strides = [1, 1]} : vector<8x384xf32> to vector<8x128xf32>
    %235 = vector.extract_strided_slice %225 {offsets = [0, 128], sizes = [8, 128], strides = [1, 1]} : vector<8x384xf32> to vector<8x128xf32>
    %236 = arith.addf %234, %235 : vector<8x128xf32>
    %237 = arith.negf %236 : vector<8x128xf32>
    %238 = math.exp %237 : vector<8x128xf32>
    %cst_38 = arith.constant 1.000000e+00 : f32
    %239 = vector.broadcast %cst_38 : f32 to vector<8x128xf32>
    %240 = arith.addf %239, %238 : vector<8x128xf32>
    %241 = arith.divf %239, %240 : vector<8x128xf32>
    %242 = vector.extract_strided_slice %223 {offsets = [0, 256], sizes = [8, 128], strides = [1, 1]} : vector<8x384xf32> to vector<8x128xf32>
    %243 = vector.extract_strided_slice %225 {offsets = [0, 256], sizes = [8, 128], strides = [1, 1]} : vector<8x384xf32> to vector<8x128xf32>
    %244 = vector.broadcast %9 : vector<1x128xf32> to vector<8x128xf32>
    %245 = arith.addf %243, %244 : vector<8x128xf32>
    %246 = arith.mulf %233, %245 : vector<8x128xf32>
    %247 = arith.addf %242, %246 : vector<8x128xf32>
    %248 = math.tanh %247 : vector<8x128xf32>
    %249 = arith.subf %191, %248 : vector<8x128xf32>
    %250 = arith.mulf %241, %249 : vector<8x128xf32>
    %251 = arith.addf %248, %250 : vector<8x128xf32>
    %252 = vector.extract_strided_slice %5 {offsets = [32, 0], sizes = [8, 768], strides = [1, 1]} : vector<64x768xf32> to vector<8x768xf32>
    %253 = vector.extract_strided_slice %5 {offsets = [24, 0], sizes = [8, 768], strides = [1, 1]} : vector<64x768xf32> to vector<8x768xf32>
    %254 = vector.extract_strided_slice %252 {offsets = [0, 0], sizes = [8, 384], strides = [1, 1]} : vector<8x768xf32> to vector<8x384xf32>
    %255 = arith.truncf %222 : vector<8x128xf32> to vector<8x128xbf16>
    %cst_39 = arith.constant dense<0.000000e+00> : vector<8x384xf32>
    %256 = tpu.matmul %255, %6, %cst_39 {dimension_numbers = #tpu.dot_dimension_numbers<[1], [0], [0], [1], [0, 0, 1, 1], [], []>} : vector<8x128xbf16>, vector<128x384xbf16>, vector<8x384xf32> -> vector<8x384xf32>
    %257 = vector.extract_strided_slice %254 {offsets = [0, 0], sizes = [8, 128], strides = [1, 1]} : vector<8x384xf32> to vector<8x128xf32>
    %258 = vector.extract_strided_slice %256 {offsets = [0, 0], sizes = [8, 128], strides = [1, 1]} : vector<8x384xf32> to vector<8x128xf32>
    %259 = arith.addf %257, %258 : vector<8x128xf32>
    %260 = arith.negf %259 : vector<8x128xf32>
    %261 = math.exp %260 : vector<8x128xf32>
    %cst_40 = arith.constant 1.000000e+00 : f32
    %262 = vector.broadcast %cst_40 : f32 to vector<8x128xf32>
    %263 = arith.addf %262, %261 : vector<8x128xf32>
    %264 = arith.divf %262, %263 : vector<8x128xf32>
    %265 = vector.extract_strided_slice %254 {offsets = [0, 128], sizes = [8, 128], strides = [1, 1]} : vector<8x384xf32> to vector<8x128xf32>
    %266 = vector.extract_strided_slice %256 {offsets = [0, 128], sizes = [8, 128], strides = [1, 1]} : vector<8x384xf32> to vector<8x128xf32>
    %267 = arith.addf %265, %266 : vector<8x128xf32>
    %268 = arith.negf %267 : vector<8x128xf32>
    %269 = math.exp %268 : vector<8x128xf32>
    %cst_41 = arith.constant 1.000000e+00 : f32
    %270 = vector.broadcast %cst_41 : f32 to vector<8x128xf32>
    %271 = arith.addf %270, %269 : vector<8x128xf32>
    %272 = arith.divf %270, %271 : vector<8x128xf32>
    %273 = vector.extract_strided_slice %254 {offsets = [0, 256], sizes = [8, 128], strides = [1, 1]} : vector<8x384xf32> to vector<8x128xf32>
    %274 = vector.extract_strided_slice %256 {offsets = [0, 256], sizes = [8, 128], strides = [1, 1]} : vector<8x384xf32> to vector<8x128xf32>
    %275 = vector.broadcast %8 : vector<1x128xf32> to vector<8x128xf32>
    %276 = arith.addf %274, %275 : vector<8x128xf32>
    %277 = arith.mulf %264, %276 : vector<8x128xf32>
    %278 = arith.addf %273, %277 : vector<8x128xf32>
    %279 = math.tanh %278 : vector<8x128xf32>
    %280 = arith.subf %222, %279 : vector<8x128xf32>
    %281 = arith.mulf %272, %280 : vector<8x128xf32>
    %282 = arith.addf %279, %281 : vector<8x128xf32>
    %283 = vector.extract_strided_slice %253 {offsets = [0, 384], sizes = [8, 384], strides = [1, 1]} : vector<8x768xf32> to vector<8x384xf32>
    %284 = arith.truncf %251 : vector<8x128xf32> to vector<8x128xbf16>
    %cst_42 = arith.constant dense<0.000000e+00> : vector<8x384xf32>
    %285 = tpu.matmul %284, %7, %cst_42 {dimension_numbers = #tpu.dot_dimension_numbers<[1], [0], [0], [1], [0, 0, 1, 1], [], []>} : vector<8x128xbf16>, vector<128x384xbf16>, vector<8x384xf32> -> vector<8x384xf32>
    %286 = vector.extract_strided_slice %283 {offsets = [0, 0], sizes = [8, 128], strides = [1, 1]} : vector<8x384xf32> to vector<8x128xf32>
    %287 = vector.extract_strided_slice %285 {offsets = [0, 0], sizes = [8, 128], strides = [1, 1]} : vector<8x384xf32> to vector<8x128xf32>
    %288 = arith.addf %286, %287 : vector<8x128xf32>
    %289 = arith.negf %288 : vector<8x128xf32>
    %290 = math.exp %289 : vector<8x128xf32>
    %cst_43 = arith.constant 1.000000e+00 : f32
    %291 = vector.broadcast %cst_43 : f32 to vector<8x128xf32>
    %292 = arith.addf %291, %290 : vector<8x128xf32>
    %293 = arith.divf %291, %292 : vector<8x128xf32>
    %294 = vector.extract_strided_slice %283 {offsets = [0, 128], sizes = [8, 128], strides = [1, 1]} : vector<8x384xf32> to vector<8x128xf32>
    %295 = vector.extract_strided_slice %285 {offsets = [0, 128], sizes = [8, 128], strides = [1, 1]} : vector<8x384xf32> to vector<8x128xf32>
    %296 = arith.addf %294, %295 : vector<8x128xf32>
    %297 = arith.negf %296 : vector<8x128xf32>
    %298 = math.exp %297 : vector<8x128xf32>
    %cst_44 = arith.constant 1.000000e+00 : f32
    %299 = vector.broadcast %cst_44 : f32 to vector<8x128xf32>
    %300 = arith.addf %299, %298 : vector<8x128xf32>
    %301 = arith.divf %299, %300 : vector<8x128xf32>
    %302 = vector.extract_strided_slice %283 {offsets = [0, 256], sizes = [8, 128], strides = [1, 1]} : vector<8x384xf32> to vector<8x128xf32>
    %303 = vector.extract_strided_slice %285 {offsets = [0, 256], sizes = [8, 128], strides = [1, 1]} : vector<8x384xf32> to vector<8x128xf32>
    %304 = vector.broadcast %9 : vector<1x128xf32> to vector<8x128xf32>
    %305 = arith.addf %303, %304 : vector<8x128xf32>
    %306 = arith.mulf %293, %305 : vector<8x128xf32>
    %307 = arith.addf %302, %306 : vector<8x128xf32>
    %308 = math.tanh %307 : vector<8x128xf32>
    %309 = arith.subf %251, %308 : vector<8x128xf32>
    %310 = arith.mulf %301, %309 : vector<8x128xf32>
    %311 = arith.addf %308, %310 : vector<8x128xf32>
    %312 = vector.extract_strided_slice %5 {offsets = [40, 0], sizes = [8, 768], strides = [1, 1]} : vector<64x768xf32> to vector<8x768xf32>
    %313 = vector.extract_strided_slice %5 {offsets = [16, 0], sizes = [8, 768], strides = [1, 1]} : vector<64x768xf32> to vector<8x768xf32>
    %314 = vector.extract_strided_slice %312 {offsets = [0, 0], sizes = [8, 384], strides = [1, 1]} : vector<8x768xf32> to vector<8x384xf32>
    %315 = arith.truncf %282 : vector<8x128xf32> to vector<8x128xbf16>
    %cst_45 = arith.constant dense<0.000000e+00> : vector<8x384xf32>
    %316 = tpu.matmul %315, %6, %cst_45 {dimension_numbers = #tpu.dot_dimension_numbers<[1], [0], [0], [1], [0, 0, 1, 1], [], []>} : vector<8x128xbf16>, vector<128x384xbf16>, vector<8x384xf32> -> vector<8x384xf32>
    %317 = vector.extract_strided_slice %314 {offsets = [0, 0], sizes = [8, 128], strides = [1, 1]} : vector<8x384xf32> to vector<8x128xf32>
    %318 = vector.extract_strided_slice %316 {offsets = [0, 0], sizes = [8, 128], strides = [1, 1]} : vector<8x384xf32> to vector<8x128xf32>
    %319 = arith.addf %317, %318 : vector<8x128xf32>
    %320 = arith.negf %319 : vector<8x128xf32>
    %321 = math.exp %320 : vector<8x128xf32>
    %cst_46 = arith.constant 1.000000e+00 : f32
    %322 = vector.broadcast %cst_46 : f32 to vector<8x128xf32>
    %323 = arith.addf %322, %321 : vector<8x128xf32>
    %324 = arith.divf %322, %323 : vector<8x128xf32>
    %325 = vector.extract_strided_slice %314 {offsets = [0, 128], sizes = [8, 128], strides = [1, 1]} : vector<8x384xf32> to vector<8x128xf32>
    %326 = vector.extract_strided_slice %316 {offsets = [0, 128], sizes = [8, 128], strides = [1, 1]} : vector<8x384xf32> to vector<8x128xf32>
    %327 = arith.addf %325, %326 : vector<8x128xf32>
    %328 = arith.negf %327 : vector<8x128xf32>
    %329 = math.exp %328 : vector<8x128xf32>
    %cst_47 = arith.constant 1.000000e+00 : f32
    %330 = vector.broadcast %cst_47 : f32 to vector<8x128xf32>
    %331 = arith.addf %330, %329 : vector<8x128xf32>
    %332 = arith.divf %330, %331 : vector<8x128xf32>
    %333 = vector.extract_strided_slice %314 {offsets = [0, 256], sizes = [8, 128], strides = [1, 1]} : vector<8x384xf32> to vector<8x128xf32>
    %334 = vector.extract_strided_slice %316 {offsets = [0, 256], sizes = [8, 128], strides = [1, 1]} : vector<8x384xf32> to vector<8x128xf32>
    %335 = vector.broadcast %8 : vector<1x128xf32> to vector<8x128xf32>
    %336 = arith.addf %334, %335 : vector<8x128xf32>
    %337 = arith.mulf %324, %336 : vector<8x128xf32>
    %338 = arith.addf %333, %337 : vector<8x128xf32>
    %339 = math.tanh %338 : vector<8x128xf32>
    %340 = arith.subf %282, %339 : vector<8x128xf32>
    %341 = arith.mulf %332, %340 : vector<8x128xf32>
    %342 = arith.addf %339, %341 : vector<8x128xf32>
    %343 = vector.extract_strided_slice %313 {offsets = [0, 384], sizes = [8, 384], strides = [1, 1]} : vector<8x768xf32> to vector<8x384xf32>
    %344 = arith.truncf %311 : vector<8x128xf32> to vector<8x128xbf16>
    %cst_48 = arith.constant dense<0.000000e+00> : vector<8x384xf32>
    %345 = tpu.matmul %344, %7, %cst_48 {dimension_numbers = #tpu.dot_dimension_numbers<[1], [0], [0], [1], [0, 0, 1, 1], [], []>} : vector<8x128xbf16>, vector<128x384xbf16>, vector<8x384xf32> -> vector<8x384xf32>
    %346 = vector.extract_strided_slice %343 {offsets = [0, 0], sizes = [8, 128], strides = [1, 1]} : vector<8x384xf32> to vector<8x128xf32>
    %347 = vector.extract_strided_slice %345 {offsets = [0, 0], sizes = [8, 128], strides = [1, 1]} : vector<8x384xf32> to vector<8x128xf32>
    %348 = arith.addf %346, %347 : vector<8x128xf32>
    %349 = arith.negf %348 : vector<8x128xf32>
    %350 = math.exp %349 : vector<8x128xf32>
    %cst_49 = arith.constant 1.000000e+00 : f32
    %351 = vector.broadcast %cst_49 : f32 to vector<8x128xf32>
    %352 = arith.addf %351, %350 : vector<8x128xf32>
    %353 = arith.divf %351, %352 : vector<8x128xf32>
    %354 = vector.extract_strided_slice %343 {offsets = [0, 128], sizes = [8, 128], strides = [1, 1]} : vector<8x384xf32> to vector<8x128xf32>
    %355 = vector.extract_strided_slice %345 {offsets = [0, 128], sizes = [8, 128], strides = [1, 1]} : vector<8x384xf32> to vector<8x128xf32>
    %356 = arith.addf %354, %355 : vector<8x128xf32>
    %357 = arith.negf %356 : vector<8x128xf32>
    %358 = math.exp %357 : vector<8x128xf32>
    %cst_50 = arith.constant 1.000000e+00 : f32
    %359 = vector.broadcast %cst_50 : f32 to vector<8x128xf32>
    %360 = arith.addf %359, %358 : vector<8x128xf32>
    %361 = arith.divf %359, %360 : vector<8x128xf32>
    %362 = vector.extract_strided_slice %343 {offsets = [0, 256], sizes = [8, 128], strides = [1, 1]} : vector<8x384xf32> to vector<8x128xf32>
    %363 = vector.extract_strided_slice %345 {offsets = [0, 256], sizes = [8, 128], strides = [1, 1]} : vector<8x384xf32> to vector<8x128xf32>
    %364 = vector.broadcast %9 : vector<1x128xf32> to vector<8x128xf32>
    %365 = arith.addf %363, %364 : vector<8x128xf32>
    %366 = arith.mulf %353, %365 : vector<8x128xf32>
    %367 = arith.addf %362, %366 : vector<8x128xf32>
    %368 = math.tanh %367 : vector<8x128xf32>
    %369 = arith.subf %311, %368 : vector<8x128xf32>
    %370 = arith.mulf %361, %369 : vector<8x128xf32>
    %371 = arith.addf %368, %370 : vector<8x128xf32>
    %372 = vector.extract_strided_slice %5 {offsets = [48, 0], sizes = [8, 768], strides = [1, 1]} : vector<64x768xf32> to vector<8x768xf32>
    %373 = vector.extract_strided_slice %5 {offsets = [8, 0], sizes = [8, 768], strides = [1, 1]} : vector<64x768xf32> to vector<8x768xf32>
    %374 = vector.extract_strided_slice %372 {offsets = [0, 0], sizes = [8, 384], strides = [1, 1]} : vector<8x768xf32> to vector<8x384xf32>
    %375 = arith.truncf %342 : vector<8x128xf32> to vector<8x128xbf16>
    %cst_51 = arith.constant dense<0.000000e+00> : vector<8x384xf32>
    %376 = tpu.matmul %375, %6, %cst_51 {dimension_numbers = #tpu.dot_dimension_numbers<[1], [0], [0], [1], [0, 0, 1, 1], [], []>} : vector<8x128xbf16>, vector<128x384xbf16>, vector<8x384xf32> -> vector<8x384xf32>
    %377 = vector.extract_strided_slice %374 {offsets = [0, 0], sizes = [8, 128], strides = [1, 1]} : vector<8x384xf32> to vector<8x128xf32>
    %378 = vector.extract_strided_slice %376 {offsets = [0, 0], sizes = [8, 128], strides = [1, 1]} : vector<8x384xf32> to vector<8x128xf32>
    %379 = arith.addf %377, %378 : vector<8x128xf32>
    %380 = arith.negf %379 : vector<8x128xf32>
    %381 = math.exp %380 : vector<8x128xf32>
    %cst_52 = arith.constant 1.000000e+00 : f32
    %382 = vector.broadcast %cst_52 : f32 to vector<8x128xf32>
    %383 = arith.addf %382, %381 : vector<8x128xf32>
    %384 = arith.divf %382, %383 : vector<8x128xf32>
    %385 = vector.extract_strided_slice %374 {offsets = [0, 128], sizes = [8, 128], strides = [1, 1]} : vector<8x384xf32> to vector<8x128xf32>
    %386 = vector.extract_strided_slice %376 {offsets = [0, 128], sizes = [8, 128], strides = [1, 1]} : vector<8x384xf32> to vector<8x128xf32>
    %387 = arith.addf %385, %386 : vector<8x128xf32>
    %388 = arith.negf %387 : vector<8x128xf32>
    %389 = math.exp %388 : vector<8x128xf32>
    %cst_53 = arith.constant 1.000000e+00 : f32
    %390 = vector.broadcast %cst_53 : f32 to vector<8x128xf32>
    %391 = arith.addf %390, %389 : vector<8x128xf32>
    %392 = arith.divf %390, %391 : vector<8x128xf32>
    %393 = vector.extract_strided_slice %374 {offsets = [0, 256], sizes = [8, 128], strides = [1, 1]} : vector<8x384xf32> to vector<8x128xf32>
    %394 = vector.extract_strided_slice %376 {offsets = [0, 256], sizes = [8, 128], strides = [1, 1]} : vector<8x384xf32> to vector<8x128xf32>
    %395 = vector.broadcast %8 : vector<1x128xf32> to vector<8x128xf32>
    %396 = arith.addf %394, %395 : vector<8x128xf32>
    %397 = arith.mulf %384, %396 : vector<8x128xf32>
    %398 = arith.addf %393, %397 : vector<8x128xf32>
    %399 = math.tanh %398 : vector<8x128xf32>
    %400 = arith.subf %342, %399 : vector<8x128xf32>
    %401 = arith.mulf %392, %400 : vector<8x128xf32>
    %402 = arith.addf %399, %401 : vector<8x128xf32>
    %403 = vector.extract_strided_slice %373 {offsets = [0, 384], sizes = [8, 384], strides = [1, 1]} : vector<8x768xf32> to vector<8x384xf32>
    %404 = arith.truncf %371 : vector<8x128xf32> to vector<8x128xbf16>
    %cst_54 = arith.constant dense<0.000000e+00> : vector<8x384xf32>
    %405 = tpu.matmul %404, %7, %cst_54 {dimension_numbers = #tpu.dot_dimension_numbers<[1], [0], [0], [1], [0, 0, 1, 1], [], []>} : vector<8x128xbf16>, vector<128x384xbf16>, vector<8x384xf32> -> vector<8x384xf32>
    %406 = vector.extract_strided_slice %403 {offsets = [0, 0], sizes = [8, 128], strides = [1, 1]} : vector<8x384xf32> to vector<8x128xf32>
    %407 = vector.extract_strided_slice %405 {offsets = [0, 0], sizes = [8, 128], strides = [1, 1]} : vector<8x384xf32> to vector<8x128xf32>
    %408 = arith.addf %406, %407 : vector<8x128xf32>
    %409 = arith.negf %408 : vector<8x128xf32>
    %410 = math.exp %409 : vector<8x128xf32>
    %cst_55 = arith.constant 1.000000e+00 : f32
    %411 = vector.broadcast %cst_55 : f32 to vector<8x128xf32>
    %412 = arith.addf %411, %410 : vector<8x128xf32>
    %413 = arith.divf %411, %412 : vector<8x128xf32>
    %414 = vector.extract_strided_slice %403 {offsets = [0, 128], sizes = [8, 128], strides = [1, 1]} : vector<8x384xf32> to vector<8x128xf32>
    %415 = vector.extract_strided_slice %405 {offsets = [0, 128], sizes = [8, 128], strides = [1, 1]} : vector<8x384xf32> to vector<8x128xf32>
    %416 = arith.addf %414, %415 : vector<8x128xf32>
    %417 = arith.negf %416 : vector<8x128xf32>
    %418 = math.exp %417 : vector<8x128xf32>
    %cst_56 = arith.constant 1.000000e+00 : f32
    %419 = vector.broadcast %cst_56 : f32 to vector<8x128xf32>
    %420 = arith.addf %419, %418 : vector<8x128xf32>
    %421 = arith.divf %419, %420 : vector<8x128xf32>
    %422 = vector.extract_strided_slice %403 {offsets = [0, 256], sizes = [8, 128], strides = [1, 1]} : vector<8x384xf32> to vector<8x128xf32>
    %423 = vector.extract_strided_slice %405 {offsets = [0, 256], sizes = [8, 128], strides = [1, 1]} : vector<8x384xf32> to vector<8x128xf32>
    %424 = vector.broadcast %9 : vector<1x128xf32> to vector<8x128xf32>
    %425 = arith.addf %423, %424 : vector<8x128xf32>
    %426 = arith.mulf %413, %425 : vector<8x128xf32>
    %427 = arith.addf %422, %426 : vector<8x128xf32>
    %428 = math.tanh %427 : vector<8x128xf32>
    %429 = arith.subf %371, %428 : vector<8x128xf32>
    %430 = arith.mulf %421, %429 : vector<8x128xf32>
    %431 = arith.addf %428, %430 : vector<8x128xf32>
    %432 = vector.extract_strided_slice %5 {offsets = [56, 0], sizes = [8, 768], strides = [1, 1]} : vector<64x768xf32> to vector<8x768xf32>
    %433 = vector.extract_strided_slice %5 {offsets = [0, 0], sizes = [8, 768], strides = [1, 1]} : vector<64x768xf32> to vector<8x768xf32>
    %434 = vector.extract_strided_slice %432 {offsets = [0, 0], sizes = [8, 384], strides = [1, 1]} : vector<8x768xf32> to vector<8x384xf32>
    %435 = arith.truncf %402 : vector<8x128xf32> to vector<8x128xbf16>
    %cst_57 = arith.constant dense<0.000000e+00> : vector<8x384xf32>
    %436 = tpu.matmul %435, %6, %cst_57 {dimension_numbers = #tpu.dot_dimension_numbers<[1], [0], [0], [1], [0, 0, 1, 1], [], []>} : vector<8x128xbf16>, vector<128x384xbf16>, vector<8x384xf32> -> vector<8x384xf32>
    %437 = vector.extract_strided_slice %434 {offsets = [0, 0], sizes = [8, 128], strides = [1, 1]} : vector<8x384xf32> to vector<8x128xf32>
    %438 = vector.extract_strided_slice %436 {offsets = [0, 0], sizes = [8, 128], strides = [1, 1]} : vector<8x384xf32> to vector<8x128xf32>
    %439 = arith.addf %437, %438 : vector<8x128xf32>
    %440 = arith.negf %439 : vector<8x128xf32>
    %441 = math.exp %440 : vector<8x128xf32>
    %cst_58 = arith.constant 1.000000e+00 : f32
    %442 = vector.broadcast %cst_58 : f32 to vector<8x128xf32>
    %443 = arith.addf %442, %441 : vector<8x128xf32>
    %444 = arith.divf %442, %443 : vector<8x128xf32>
    %445 = vector.extract_strided_slice %434 {offsets = [0, 128], sizes = [8, 128], strides = [1, 1]} : vector<8x384xf32> to vector<8x128xf32>
    %446 = vector.extract_strided_slice %436 {offsets = [0, 128], sizes = [8, 128], strides = [1, 1]} : vector<8x384xf32> to vector<8x128xf32>
    %447 = arith.addf %445, %446 : vector<8x128xf32>
    %448 = arith.negf %447 : vector<8x128xf32>
    %449 = math.exp %448 : vector<8x128xf32>
    %cst_59 = arith.constant 1.000000e+00 : f32
    %450 = vector.broadcast %cst_59 : f32 to vector<8x128xf32>
    %451 = arith.addf %450, %449 : vector<8x128xf32>
    %452 = arith.divf %450, %451 : vector<8x128xf32>
    %453 = vector.extract_strided_slice %434 {offsets = [0, 256], sizes = [8, 128], strides = [1, 1]} : vector<8x384xf32> to vector<8x128xf32>
    %454 = vector.extract_strided_slice %436 {offsets = [0, 256], sizes = [8, 128], strides = [1, 1]} : vector<8x384xf32> to vector<8x128xf32>
    %455 = vector.broadcast %8 : vector<1x128xf32> to vector<8x128xf32>
    %456 = arith.addf %454, %455 : vector<8x128xf32>
    %457 = arith.mulf %444, %456 : vector<8x128xf32>
    %458 = arith.addf %453, %457 : vector<8x128xf32>
    %459 = math.tanh %458 : vector<8x128xf32>
    %460 = arith.subf %402, %459 : vector<8x128xf32>
    %461 = arith.mulf %452, %460 : vector<8x128xf32>
    %462 = arith.addf %459, %461 : vector<8x128xf32>
    %463 = vector.extract_strided_slice %433 {offsets = [0, 384], sizes = [8, 384], strides = [1, 1]} : vector<8x768xf32> to vector<8x384xf32>
    %464 = arith.truncf %431 : vector<8x128xf32> to vector<8x128xbf16>
    %cst_60 = arith.constant dense<0.000000e+00> : vector<8x384xf32>
    %465 = tpu.matmul %464, %7, %cst_60 {dimension_numbers = #tpu.dot_dimension_numbers<[1], [0], [0], [1], [0, 0, 1, 1], [], []>} : vector<8x128xbf16>, vector<128x384xbf16>, vector<8x384xf32> -> vector<8x384xf32>
    %466 = vector.extract_strided_slice %463 {offsets = [0, 0], sizes = [8, 128], strides = [1, 1]} : vector<8x384xf32> to vector<8x128xf32>
    %467 = vector.extract_strided_slice %465 {offsets = [0, 0], sizes = [8, 128], strides = [1, 1]} : vector<8x384xf32> to vector<8x128xf32>
    %468 = arith.addf %466, %467 : vector<8x128xf32>
    %469 = arith.negf %468 : vector<8x128xf32>
    %470 = math.exp %469 : vector<8x128xf32>
    %cst_61 = arith.constant 1.000000e+00 : f32
    %471 = vector.broadcast %cst_61 : f32 to vector<8x128xf32>
    %472 = arith.addf %471, %470 : vector<8x128xf32>
    %473 = arith.divf %471, %472 : vector<8x128xf32>
    %474 = vector.extract_strided_slice %463 {offsets = [0, 128], sizes = [8, 128], strides = [1, 1]} : vector<8x384xf32> to vector<8x128xf32>
    %475 = vector.extract_strided_slice %465 {offsets = [0, 128], sizes = [8, 128], strides = [1, 1]} : vector<8x384xf32> to vector<8x128xf32>
    %476 = arith.addf %474, %475 : vector<8x128xf32>
    %477 = arith.negf %476 : vector<8x128xf32>
    %478 = math.exp %477 : vector<8x128xf32>
    %cst_62 = arith.constant 1.000000e+00 : f32
    %479 = vector.broadcast %cst_62 : f32 to vector<8x128xf32>
    %480 = arith.addf %479, %478 : vector<8x128xf32>
    %481 = arith.divf %479, %480 : vector<8x128xf32>
    %482 = vector.extract_strided_slice %463 {offsets = [0, 256], sizes = [8, 128], strides = [1, 1]} : vector<8x384xf32> to vector<8x128xf32>
    %483 = vector.extract_strided_slice %465 {offsets = [0, 256], sizes = [8, 128], strides = [1, 1]} : vector<8x384xf32> to vector<8x128xf32>
    %484 = vector.broadcast %9 : vector<1x128xf32> to vector<8x128xf32>
    %485 = arith.addf %483, %484 : vector<8x128xf32>
    %486 = arith.mulf %473, %485 : vector<8x128xf32>
    %487 = arith.addf %482, %486 : vector<8x128xf32>
    %488 = math.tanh %487 : vector<8x128xf32>
    %489 = arith.subf %431, %488 : vector<8x128xf32>
    %490 = arith.mulf %481, %489 : vector<8x128xf32>
    %491 = arith.addf %488, %490 : vector<8x128xf32>
    %492 = tpu.concatenate %42, %491, %102, %431, %162, %371, %222, %311, %282, %251, %342, %191, %402, %131, %462, %71 in 1 : vector<8x128xf32>, vector<8x128xf32>, vector<8x128xf32>, vector<8x128xf32>, vector<8x128xf32>, vector<8x128xf32>, vector<8x128xf32>, vector<8x128xf32>, vector<8x128xf32>, vector<8x128xf32>, vector<8x128xf32>, vector<8x128xf32>, vector<8x128xf32>, vector<8x128xf32>, vector<8x128xf32>, vector<8x128xf32> -> vector<8x2048xf32>
    %493 = arith.truncf %492 : vector<8x2048xf32> to vector<8x2048xbf16>
    %c0_63 = arith.constant 0 : index
    %c0_64 = arith.constant 0 : index
    %494 = vector.load %arg8[%c0_63, %c0_64] : memref<2048x128xbf16, #tpu.memory_space<vmem>>, vector<2048x128xbf16>
    %cst_65 = arith.constant dense<0.000000e+00> : vector<8x128xf32>
    %495 = tpu.matmul %493, %494, %cst_65 {dimension_numbers = #tpu.dot_dimension_numbers<[1], [0], [0], [1], [0, 0, 1, 1], [], []>} : vector<8x2048xbf16>, vector<2048x128xbf16>, vector<8x128xf32> -> vector<8x128xf32>
    %c0_66 = arith.constant 0 : index
    %c0_67 = arith.constant 0 : index
    %496 = vector.load %arg9[%c0_66, %c0_67] : memref<1x128xf32, #tpu.memory_space<vmem>>, vector<1x128xf32>
    %497 = vector.broadcast %496 : vector<1x128xf32> to vector<8x128xf32>
    %498 = arith.addf %495, %497 : vector<8x128xf32>
    %c0_68 = arith.constant 0 : index
    %c0_69 = arith.constant 0 : index
    %499 = vector.load %arg10[%c0_68, %c0_69] : memref<8x128xf32, #tpu.memory_space<vmem>>, vector<8x128xf32>
    tpu.vector_store %arg10[%c0_68, %c0_69], %498 {strides = array<i32>} : memref<8x128xf32, #tpu.memory_space<vmem>>, vector<8x128xf32>,
    return
  }
  func.func @transform_0(%arg0: i32) -> (i32, i32) {
    %c0_i32 = arith.constant 0 : i32
    %c0_i32_0 = arith.constant 0 : i32
    return %arg0, %c0_i32 : i32, i32
  }
  func.func @transform_1(%arg0: i32) -> (i32, i32) {
    %c0_i32 = arith.constant 0 : i32
    %c0_i32_0 = arith.constant 0 : i32
    %c0_i32_1 = arith.constant 0 : i32
    return %c0_i32, %c0_i32_0 : i32, i32
  }
  func.func @transform_2(%arg0: i32) -> (i32, i32) {
    %c0_i32 = arith.constant 0 : i32
    %c0_i32_0 = arith.constant 0 : i32
    %c0_i32_1 = arith.constant 0 : i32
    return %c0_i32, %c0_i32_0 : i32, i32
  }
  func.func @transform_3(%arg0: i32) -> (i32, i32) {
    %c0_i32 = arith.constant 0 : i32
    %c0_i32_0 = arith.constant 0 : i32
    %c0_i32_1 = arith.constant 0 : i32
    return %c0_i32, %c0_i32_0 : i32, i32
  }
  func.func @transform_4(%arg0: i32) -> (i32, i32) {
    %c0_i32 = arith.constant 0 : i32
    %c0_i32_0 = arith.constant 0 : i32
    %c0_i32_1 = arith.constant 0 : i32
    return %c0_i32, %c0_i32_0 : i32, i32
  }
  func.func @transform_5(%arg0: i32) -> (i32, i32) {
    %c0_i32 = arith.constant 0 : i32
    %c0_i32_0 = arith.constant 0 : i32
    %c0_i32_1 = arith.constant 0 : i32
    return %c0_i32, %c0_i32_0 : i32, i32
  }
  func.func @transform_6(%arg0: i32) -> (i32, i32) {
    %c0_i32 = arith.constant 0 : i32
    %c0_i32_0 = arith.constant 0 : i32
    %c0_i32_1 = arith.constant 0 : i32
    return %c0_i32, %c0_i32_0 : i32, i32
  }
  func.func @transform_7(%arg0: i32) -> (i32, i32) {
    %c0_i32 = arith.constant 0 : i32
    %c0_i32_0 = arith.constant 0 : i32
    %c0_i32_1 = arith.constant 0 : i32
    return %c0_i32, %c0_i32_0 : i32, i32
  }
  func.func @transform_8(%arg0: i32) -> (i32, i32) {
    %c0_i32 = arith.constant 0 : i32
    %c0_i32_0 = arith.constant 0 : i32
    %c0_i32_1 = arith.constant 0 : i32
    return %c0_i32, %c0_i32_0 : i32, i32
  }
  func.func @transform_9(%arg0: i32) -> (i32, i32) {
    %c0_i32 = arith.constant 0 : i32
    %c0_i32_0 = arith.constant 0 : i32
    return %arg0, %c0_i32 : i32, i32
  }
}

</mosaic_0001>

<llo_original>
// kernel: tpu_custom_call.1
$region0: #{tpu_custom_call.1}
  #allocation0 [shape = 'u32[]', space=smem, size = 0x4, offset = 0x4, fixed_abs, tag = 'smem constant byte address 0x4 - core index']
  #allocation1 [shape = 'u32[144,128]{1,0:T(1,128)}', space=vmem, size = 0x12000, scoped, tag = 'internal scratch']
  %s0 = inlined_call_operand.vmem [shape: bf16[64,16], index: 0, kind: input, shape index: {}]
  %s1 = inlined_call_operand.hbm [shape: bf16[16,768], index: 1, kind: input, shape index: {}]
  %s2 = inlined_call_operand.vmem [shape: f32[1,768], index: 2, kind: input, shape index: {}]
  %s3 = inlined_call_operand.hbm [shape: bf16[128,384], index: 3, kind: input, shape index: {}]
  %s4 = inlined_call_operand.hbm [shape: bf16[128,384], index: 4, kind: input, shape index: {}]
  %s5 = inlined_call_operand.vmem [shape: f32[1,128], index: 5, kind: input, shape index: {}]
  %s6 = inlined_call_operand.vmem [shape: f32[1,128], index: 6, kind: input, shape index: {}]
  %s7 = inlined_call_operand.hbm [shape: bf16[2048,128], index: 7, kind: input, shape index: {}]
  %s8 = inlined_call_operand.vmem [shape: f32[1,128], index: 8, kind: input, shape index: {}]
  %s9 = inlined_call_operand.hbm [shape: f32[8,128], index: 9, kind: output, shape index: {}]
  %s10 = sld [smem:[#allocation0]]
  $region62: #{tpu_custom_call.1} parent=0
    _
  %s12 = ssub.s32 1, %s10
  %s13 = scalar_select 0, %s12, %s10
  $region1: #{tpu_custom_call.1} parent=0
    #allocation2 [shape = 'u8[24576]{0}', space=vmem, size = 0x6000, scoped, tag = 'input window, operand 1, single buffered']
    #allocation3 [shape = 's32[1]{0}', space=sflag, size = 0x4, scoped, tag = 'scoped memory for tpu_custom_call.1']
    #allocation4 [shape = 's32[1]{0}', space=sflag, size = 0x4, scoped, tag = 'scoped memory for tpu_custom_call.1']
    #allocation5 [shape = 'u8[98304]{0}', space=vmem, size = 0x18000, scoped, tag = 'input window, operand 3, single buffered']
    #allocation6 [shape = 's32[1]{0}', space=sflag, size = 0x4, scoped, tag = 'scoped memory for tpu_custom_call.1']
    #allocation7 [shape = 'u8[98304]{0}', space=vmem, size = 0x18000, scoped, tag = 'input window, operand 4, single buffered']
    #allocation8 [shape = 'u8[524288]{0}', space=vmem, size = 0x80000, scoped, tag = 'input window, operand 7, single buffered']
    #allocation9 [shape = 's32[1]{0}', space=sflag, size = 0x4, scoped, tag = 'scoped memory for tpu_custom_call.1']
    #allocation10 [shape = 'u8[4096]{0}', space=vmem, size = 0x1000, scoped, tag = 'output window, operand 0, single buffered']
    %14 = vsyncpa [#allocation3], 0
    %15 = vsyncpa [#allocation6], 0
    %16 = vsyncpa [#allocation9], 0
    %17 = vsyncpa [#allocation4], 0
    // Predicated region
    $region2: #{tpu_custom_call.1} parent=1 // pred_check
      _
    $region3: #{tpu_custom_call.1} parent=1 // pred_check_branch
      %19 = sbr.rel (0) target = $region5
    $region4: #{tpu_custom_call.1} parent=1 // pred_region
      _
    $region5: #{tpu_custom_call.1} parent=1 // pred_fallthru
      _
    // Predicated region
    $region6: #{tpu_custom_call.1} parent=1 // pred_check
      _
    $region7: #{tpu_custom_call.1} parent=1 // pred_check_branch
      %21 = sbr.rel (0) target = $region9
    $region8: #{tpu_custom_call.1} parent=1 // pred_region
      %s23 = ssub.s32 768, 768
      %24 = vsyncadd [#allocation3], %s23
      %s25 = sshll.u32 [#allocation2], 4
      %s26 = int_to_ptr.vmem [resolvable:$true] %s25
      %31 = dma.hbm_to_vmem [thread:$0]  %s1, 768, %s26, [#allocation3], 384, 384, 24
    $region9: #{tpu_custom_call.1} parent=1 // pred_fallthru
      _
    // Predicated region
    $region10: #{tpu_custom_call.1} parent=1 // pred_check
      _
    $region11: #{tpu_custom_call.1} parent=1 // pred_check_branch
      %33 = sbr.rel (0) target = $region13
    $region12: #{tpu_custom_call.1} parent=1 // pred_region
      _
    $region13: #{tpu_custom_call.1} parent=1 // pred_fallthru
      _
    // Predicated region
    $region14: #{tpu_custom_call.1} parent=1 // pred_check
      _
    $region15: #{tpu_custom_call.1} parent=1 // pred_check_branch
      %35 = sbr.rel (0) target = $region17
    $region16: #{tpu_custom_call.1} parent=1 // pred_region
      %s37 = ssub.s32 3072, 3072
      %38 = vsyncadd [#allocation6], %s37
      %s39 = sshll.u32 [#allocation5], 4
      %s40 = int_to_ptr.vmem [resolvable:$true] %s39
      %45 = dma.hbm_to_vmem [thread:$0]  %s3, 3072, %s40, [#allocation6], 192, 192, 12
    $region17: #{tpu_custom_call.1} parent=1 // pred_fallthru
      _
    // Predicated region
    $region18: #{tpu_custom_call.1} parent=1 // pred_check
      _
    $region19: #{tpu_custom_call.1} parent=1 // pred_check_branch
      %47 = sbr.rel (0) target = $region21
    $region20: #{tpu_custom_call.1} parent=1 // pred_region
      %s49 = ssub.s32 3072, 3072
      %50 = vsyncadd [#allocation6], %s49
      %s51 = sshll.u32 [#allocation7], 4
      %s52 = int_to_ptr.vmem [resolvable:$true] %s51
      %57 = dma.hbm_to_vmem [thread:$0]  %s4, 3072, %s52, [#allocation6], 192, 192, 12
    $region21: #{tpu_custom_call.1} parent=1 // pred_fallthru
      _
    // Predicated region
    $region22: #{tpu_custom_call.1} parent=1 // pred_check
      _
    $region23: #{tpu_custom_call.1} parent=1 // pred_check_branch
      %59 = sbr.rel (0) target = $region25
    $region24: #{tpu_custom_call.1} parent=1 // pred_region
      _
    $region25: #{tpu_custom_call.1} parent=1 // pred_fallthru
      _
    // Predicated region
    $region26: #{tpu_custom_call.1} parent=1 // pred_check
      _
    $region27: #{tpu_custom_call.1} parent=1 // pred_check_branch
      %61 = sbr.rel (0) target = $region29
    $region28: #{tpu_custom_call.1} parent=1 // pred_region
      _
    $region29: #{tpu_custom_call.1} parent=1 // pred_fallthru
      _
    // Predicated region
    $region30: #{tpu_custom_call.1} parent=1 // pred_check
      _
    $region31: #{tpu_custom_call.1} parent=1 // pred_check_branch
      %63 = sbr.rel (0) target = $region33
    $region32: #{tpu_custom_call.1} parent=1 // pred_region
      %s65 = ssub.s32 16384, 16384
      %66 = vsyncadd [#allocation9], %s65
      %s67 = sshll.u32 [#allocation8], 4
      %s68 = int_to_ptr.vmem [resolvable:$true] %s67
      %73 = dma.hbm_to_vmem [thread:$0]  %s7, 16384, %s68, [#allocation9], 64, 64, 4
    $region33: #{tpu_custom_call.1} parent=1 // pred_fallthru
      _
    // Predicated region
    $region34: #{tpu_custom_call.1} parent=1 // pred_check
      _
    $region35: #{tpu_custom_call.1} parent=1 // pred_check_branch
      %75 = sbr.rel (0) target = $region37
    $region36: #{tpu_custom_call.1} parent=1 // pred_region
      _
    $region37: #{tpu_custom_call.1} parent=1 // pred_fallthru
      _
    // Predicated region
    $region38: #{tpu_custom_call.1} parent=1 // pred_check
      _
    $region39: #{tpu_custom_call.1} parent=1 // pred_check_branch
      %77 = sbr.rel (0) target = $region41
    $region40: #{tpu_custom_call.1} parent=1 // pred_region
      %78 = dma.done [#allocation3], 768
    $region41: #{tpu_custom_call.1} parent=1 // pred_fallthru
      _
    // Predicated region
    $region42: #{tpu_custom_call.1} parent=1 // pred_check
      _
    $region43: #{tpu_custom_call.1} parent=1 // pred_check_branch
      %80 = sbr.rel (0) target = $region45
    $region44: #{tpu_custom_call.1} parent=1 // pred_region
      %81 = dma.done [#allocation6], 3072
    $region45: #{tpu_custom_call.1} parent=1 // pred_fallthru
      _
    // Predicated region
    $region46: #{tpu_custom_call.1} parent=1 // pred_check
      _
    $region47: #{tpu_custom_call.1} parent=1 // pred_check_branch
      %83 = sbr.rel (0) target = $region49
    $region48: #{tpu_custom_call.1} parent=1 // pred_region
      %84 = dma.done [#allocation6], 3072
    $region49: #{tpu_custom_call.1} parent=1 // pred_fallthru
      _
    // Predicated region
    $region50: #{tpu_custom_call.1} parent=1 // pred_check
      _
    $region51: #{tpu_custom_call.1} parent=1 // pred_check_branch
      %86 = sbr.rel (0) target = $region53
    $region52: #{tpu_custom_call.1} parent=1 // pred_region
      %87 = dma.done [#allocation9], 16384
    $region53: #{tpu_custom_call.1} parent=1 // pred_fallthru
      _
    %v89 = vld [vmem:[%s0] sm:$0xf]
    %v90 = vld [vmem:[%s0 + $0x4] sm:$0xf]
    %v91 = vld [vmem:[%s0 + $0x8] sm:$0xf]
    %v92 = vld [vmem:[%s0 + $0xc] sm:$0xf]
    %v93 = vld [vmem:[%s0 + $0x10] sm:$0xf]
    %v94 = vld [vmem:[%s0 + $0x14] sm:$0xf]
    %v95 = vld [vmem:[%s0 + $0x18] sm:$0xf]
    %v96 = vld [vmem:[%s0 + $0x1c] sm:$0xf]
    %v97 = vld [vmem:[#allocation2] sm:$0xff]
    %v98 = vld [vmem:[#allocation2 + $0x8] sm:$0xff]
    %v99 = vld [vmem:[#allocation2 + $0x10] sm:$0xff]
    %v100 = vld [vmem:[#allocation2 + $0x18] sm:$0xff]
    %v101 = vld [vmem:[#allocation2 + $0x20] sm:$0xff]
    %v102 = vld [vmem:[#allocation2 + $0x28] sm:$0xff]
    %v103 = vld [vmem:[%s2] sm:$0x3f]
    %v105 = vlaneseq
    %v106 = vshrl.u32 %v105, 7
    %v107 = vsub.s32 0, %v106
    %v108 = vrot.slane %v103, %v107
    %v109 = vlaneseq
    %v110 = vshrl.u32 %v109, 7
    %v111 = vsub.s32 1, %v110
    %v112 = vrot.slane %v103, %v111
    %v113 = vlaneseq
    %v114 = vshrl.u32 %v113, 7
    %v115 = vsub.s32 2, %v114
    %v116 = vrot.slane %v103, %v115
    %v117 = vlaneseq
    %v118 = vshrl.u32 %v117, 7
    %v119 = vsub.s32 3, %v118
    %v120 = vrot.slane %v103, %v119
    %v121 = vlaneseq
    %v122 = vshrl.u32 %v121, 7
    %v123 = vsub.s32 4, %v122
    %v124 = vrot.slane %v103, %v123
    %v125 = vlaneseq
    %v126 = vshrl.u32 %v125, 7
    %v127 = vsub.s32 5, %v126
    %v128 = vrot.slane %v103, %v127
    %v143 = vunpack.c.l.b16 %v89
    %v144 = vunpack.c.l.b16 %v90
    %v145 = vunpack.c.l.b16 %v91
    %v146 = vunpack.c.l.b16 %v92
    %v147 = vunpack.c.l.b16 %v93
    %v148 = vunpack.c.l.b16 %v94
    %v149 = vunpack.c.l.b16 %v95
    %v150 = vunpack.c.l.b16 %v96
    %v151 = vpack.c.b16 %v144, %v143
    %v152 = vpack.c.b16 %v146, %v145
    %v153 = vpack.c.b16 %v148, %v147
    %v154 = vpack.c.b16 %v150, %v149
    %v161 = vunpack.c.l.b16 %v97
    %v162 = vunpack.c.h.b16 %v97
    %v163 = vunpack.c.l.b16 %v98
    %v164 = vunpack.c.h.b16 %v98
    %v165 = vunpack.c.l.b16 %v99
    %v166 = vunpack.c.h.b16 %v99
    %v167 = vunpack.c.l.b16 %v100
    %v168 = vunpack.c.h.b16 %v100
    %v169 = vunpack.c.l.b16 %v101
    %v170 = vunpack.c.h.b16 %v101
    %v171 = vunpack.c.l.b16 %v102
    %v172 = vunpack.c.h.b16 %v102
    %v173 = vpack.c.b16 %v167, %v161
    %v174 = vpack.c.b16 %v168, %v162
    %v175 = vpack.c.b16 %v169, %v163
    %v176 = vpack.c.b16 %v170, %v164
    %v177 = vpack.c.b16 %v171, %v165
    %v178 = vpack.c.b16 %v172, %v166
    %vm185 = vcmask 130048
    %v187 = vsel %vm185, %v151, 0
    %v190 = vsel %vm185, %v152, 0
    %v193 = vsel %vm185, %v153, 0
    %v196 = vsel %vm185, %v154, 0
    %198 = vmatprep.subr.bf16.mxu0 %v174
    %199 = vmatpush1.bf16.msra.mxu0 %v173
    %200 = vmatprep.subr.bf16.mxu0 0
    %201 = vmatpush1.bf16.msra.mxu0 0
    %202 = vmatprep.subr.bf16.mxu0 0
    %203 = vmatpush1.bf16.msra.mxu0 0
    %204 = vmatprep.subr.bf16.mxu0 0
    %205 = vmatpush1.bf16.msra.mxu0 0
    %206 = vmatprep.subr.bf16.mxu0 0
    %207 = vmatpush1.bf16.msra.mxu0 0
    %208 = vmatprep.subr.bf16.mxu0 0
    %209 = vmatpush1.bf16.msra.mxu0 0
    %210 = vmatprep.subr.bf16.mxu0 0
    %211 = vmatpush1.bf16.msra.mxu0 0
    %212 = vmatprep.subr.bf16.mxu0 0
    %213 = vmatpush1.bf16.msra.mxu0 0
    %214 = vmatprep.subr.bf16.mxu0 0
    %215 = vmatpush1.bf16.msra.mxu0 0
    %216 = vmatprep.subr.bf16.mxu0 0
    %217 = vmatpush1.bf16.msra.mxu0 0
    %218 = vmatprep.subr.bf16.mxu0 0
    %219 = vmatpush1.bf16.msra.mxu0 0
    %220 = vmatprep.subr.bf16.mxu0 0
    %221 = vmatpush1.bf16.msra.mxu0 0
    %222 = vmatprep.subr.bf16.mxu0 0
    %223 = vmatpush1.bf16.msra.mxu0 0
    %224 = vmatprep.subr.bf16.mxu0 0
    %225 = vmatpush1.bf16.msra.mxu0 0
    %226 = vmatprep.subr.bf16.mxu0 0
    %227 = vmatpush1.bf16.msra.mxu0 0
    %228 = vmatprep.subr.bf16.mxu0 0
    %229 = vmatpush1.bf16.msra.mxu0 0
    %230 = vmatprep.mubr.bf16.mxu0 0
    %231 = vmatmul.mubr.bf16.gmra.mrb[0].mxu0 %v187
    %v232 = vpop.f32.mrb[0].mxu0
    %v233 = vadd.f32 %v108, %v232
    %v234 = vpop.f32.mrb[0].mxu0
    %v235 = vadd.f32 %v112, %v234
    %v236 = vpop.f32.mrb[0].mxu0
    %v237 = vadd.f32 %v108, %v236
    %v238 = vpop.f32.mrb[0].mxu0
    %v239 = vadd.f32 %v112, %v238
    %240 = vmatprep.mubr.bf16.mxu0 0
    %241 = vmatmul.mubr.bf16.gmra.mrb[0].mxu0 %v190
    %v242 = vpop.f32.mrb[0].mxu0
    %v243 = vadd.f32 %v108, %v242
    %v244 = vpop.f32.mrb[0].mxu0
    %v245 = vadd.f32 %v112, %v244
    %v246 = vpop.f32.mrb[0].mxu0
    %v247 = vadd.f32 %v108, %v246
    %v248 = vpop.f32.mrb[0].mxu0
    %v249 = vadd.f32 %v112, %v248
    %250 = vmatprep.mubr.bf16.mxu0 0
    %251 = vmatmul.mubr.bf16.gmra.mrb[0].mxu0 %v193
    %v252 = vpop.f32.mrb[0].mxu0
    %v253 = vadd.f32 %v108, %v252
    %v254 = vpop.f32.mrb[0].mxu0
    %v255 = vadd.f32 %v112, %v254
    %v256 = vpop.f32.mrb[0].mxu0
    %v257 = vadd.f32 %v108, %v256
    %v258 = vpop.f32.mrb[0].mxu0
    %v259 = vadd.f32 %v112, %v258
    %260 = vmatprep.mubr.bf16.mxu0 0
    %261 = vmatmul.mubr.bf16.gmra.mrb[0].mxu0 %v196
    %v262 = vpop.f32.mrb[0].mxu0
    %v263 = vadd.f32 %v108, %v262
    %v264 = vpop.f32.mrb[0].mxu0
    %v265 = vadd.f32 %v112, %v264
    %v266 = vpop.f32.mrb[0].mxu0
    %v267 = vadd.f32 %v108, %v266
    %v268 = vpop.f32.mrb[0].mxu0
    %v269 = vadd.f32 %v112, %v268
    %270 = vdwg.mxu0
    %271 = vmatprep.subr.bf16.mxu0 %v176
    %272 = vmatpush1.bf16.msra.mxu0 %v175
    %273 = vmatprep.subr.bf16.mxu0 0
    %274 = vmatpush1.bf16.msra.mxu0 0
    %275 = vmatprep.subr.bf16.mxu0 0
    %276 = vmatpush1.bf16.msra.mxu0 0
    %277 = vmatprep.subr.bf16.mxu0 0
    %278 = vmatpush1.bf16.msra.mxu0 0
    %279 = vmatprep.subr.bf16.mxu0 0
    %280 = vmatpush1.bf16.msra.mxu0 0
    %281 = vmatprep.subr.bf16.mxu0 0
    %282 = vmatpush1.bf16.msra.mxu0 0
    %283 = vmatprep.subr.bf16.mxu0 0
    %284 = vmatpush1.bf16.msra.mxu0 0
    %285 = vmatprep.subr.bf16.mxu0 0
    %286 = vmatpush1.bf16.msra.mxu0 0
    %287 = vmatprep.subr.bf16.mxu0 0
    %288 = vmatpush1.bf16.msra.mxu0 0
    %289 = vmatprep.subr.bf16.mxu0 0
    %290 = vmatpush1.bf16.msra.mxu0 0
    %291 = vmatprep.subr.bf16.mxu0 0
    %292 = vmatpush1.bf16.msra.mxu0 0
    %293 = vmatprep.subr.bf16.mxu0 0
    %294 = vmatpush1.bf16.msra.mxu0 0
    %295 = vmatprep.subr.bf16.mxu0 0
    %296 = vmatpush1.bf16.msra.mxu0 0
    %297 = vmatprep.subr.bf16.mxu0 0
    %298 = vmatpush1.bf16.msra.mxu0 0
    %299 = vmatprep.subr.bf16.mxu0 0
    %300 = vmatpush1.bf16.msra.mxu0 0
    %301 = vmatprep.subr.bf16.mxu0 0
    %302 = vmatpush1.bf16.msra.mxu0 0
    %303 = vmatprep.mubr.bf16.mxu0 0
    %304 = vmatmul.mubr.bf16.gmra.mrb[0].mxu0 %v187
    %v305 = vpop.f32.mrb[0].mxu0
    %v306 = vadd.f32 %v116, %v305
    %v307 = vpop.f32.mrb[0].mxu0
    %v308 = vadd.f32 %v120, %v307
    %v309 = vpop.f32.mrb[0].mxu0
    %v310 = vadd.f32 %v116, %v309
    %v311 = vpop.f32.mrb[0].mxu0
    %v312 = vadd.f32 %v120, %v311
    %313 = vmatprep.mubr.bf16.mxu0 0
    %314 = vmatmul.mubr.bf16.gmra.mrb[0].mxu0 %v190
    %v315 = vpop.f32.mrb[0].mxu0
    %v316 = vadd.f32 %v116, %v315
    %v317 = vpop.f32.mrb[0].mxu0
    %v318 = vadd.f32 %v120, %v317
    %v319 = vpop.f32.mrb[0].mxu0
    %v320 = vadd.f32 %v116, %v319
    %v321 = vpop.f32.mrb[0].mxu0
    %v322 = vadd.f32 %v120, %v321
    %323 = vmatprep.mubr.bf16.mxu0 0
    %324 = vmatmul.mubr.bf16.gmra.mrb[0].mxu0 %v193
    %v325 = vpop.f32.mrb[0].mxu0
    %v326 = vadd.f32 %v116, %v325
    %v327 = vpop.f32.mrb[0].mxu0
    %v328 = vadd.f32 %v120, %v327
    %v329 = vpop.f32.mrb[0].mxu0
    %v330 = vadd.f32 %v116, %v329
    %v331 = vpop.f32.mrb[0].mxu0
    %v332 = vadd.f32 %v120, %v331
    %333 = vmatprep.mubr.bf16.mxu0 0
    %334 = vmatmul.mubr.bf16.gmra.mrb[0].mxu0 %v196
    %v335 = vpop.f32.mrb[0].mxu0
    %v336 = vadd.f32 %v116, %v335
    %v337 = vpop.f32.mrb[0].mxu0
    %v338 = vadd.f32 %v120, %v337
    %v339 = vpop.f32.mrb[0].mxu0
    %v340 = vadd.f32 %v116, %v339
    %v341 = vpop.f32.mrb[0].mxu0
    %v342 = vadd.f32 %v120, %v341
    %343 = vdwg.mxu0
    %344 = vmatprep.subr.bf16.mxu0 %v178
    %345 = vmatpush1.bf16.msra.mxu0 %v177
    %346 = vmatprep.subr.bf16.mxu0 0
    %347 = vmatpush1.bf16.msra.mxu0 0
    %348 = vmatprep.subr.bf16.mxu0 0
    %349 = vmatpush1.bf16.msra.mxu0 0
    %350 = vmatprep.subr.bf16.mxu0 0
    %351 = vmatpush1.bf16.msra.mxu0 0
    %352 = vmatprep.subr.bf16.mxu0 0
    %353 = vmatpush1.bf16.msra.mxu0 0
    %354 = vmatprep.subr.bf16.mxu0 0
    %355 = vmatpush1.bf16.msra.mxu0 0
    %356 = vmatprep.subr.bf16.mxu0 0
    %357 = vmatpush1.bf16.msra.mxu0 0
    %358 = vmatprep.subr.bf16.mxu0 0
    %359 = vmatpush1.bf16.msra.mxu0 0
    %360 = vmatprep.subr.bf16.mxu0 0
    %361 = vmatpush1.bf16.msra.mxu0 0
    %362 = vmatprep.subr.bf16.mxu0 0
    %363 = vmatpush1.bf16.msra.mxu0 0
    %364 = vmatprep.subr.bf16.mxu0 0
    %365 = vmatpush1.bf16.msra.mxu0 0
    %366 = vmatprep.subr.bf16.mxu0 0
    %367 = vmatpush1.bf16.msra.mxu0 0
    %368 = vmatprep.subr.bf16.mxu0 0
    %369 = vmatpush1.bf16.msra.mxu0 0
    %370 = vmatprep.subr.bf16.mxu0 0
    %371 = vmatpush1.bf16.msra.mxu0 0
    %372 = vmatprep.subr.bf16.mxu0 0
    %373 = vmatpush1.bf16.msra.mxu0 0
    %374 = vmatprep.subr.bf16.mxu0 0
    %375 = vmatpush1.bf16.msra.mxu0 0
    %376 = vmatprep.mubr.bf16.mxu0 0
    %377 = vmatmul.mubr.bf16.gmra.mrb[0].mxu0 %v187
    %v378 = vpop.f32.mrb[0].mxu0
    %v379 = vadd.f32 %v124, %v378
    %v380 = vpop.f32.mrb[0].mxu0
    %v381 = vadd.f32 %v128, %v380
    %v382 = vpop.f32.mrb[0].mxu0
    %v383 = vadd.f32 %v124, %v382
    %v384 = vpop.f32.mrb[0].mxu0
    %v385 = vadd.f32 %v128, %v384
    %386 = vmatprep.mubr.bf16.mxu0 0
    %387 = vmatmul.mubr.bf16.gmra.mrb[0].mxu0 %v190
    %v388 = vpop.f32.mrb[0].mxu0
    %v389 = vadd.f32 %v124, %v388
    %v390 = vpop.f32.mrb[0].mxu0
    %v391 = vadd.f32 %v128, %v390
    %v392 = vpop.f32.mrb[0].mxu0
    %v393 = vadd.f32 %v124, %v392
    %v394 = vpop.f32.mrb[0].mxu0
    %v395 = vadd.f32 %v128, %v394
    %396 = vmatprep.mubr.bf16.mxu0 0
    %397 = vmatmul.mubr.bf16.gmra.mrb[0].mxu0 %v193
    %v398 = vpop.f32.mrb[0].mxu0
    %v399 = vadd.f32 %v124, %v398
    %v400 = vpop.f32.mrb[0].mxu0
    %v401 = vadd.f32 %v128, %v400
    %v402 = vpop.f32.mrb[0].mxu0
    %v403 = vadd.f32 %v124, %v402
    %v404 = vpop.f32.mrb[0].mxu0
    %v405 = vadd.f32 %v128, %v404
    %406 = vmatprep.mubr.bf16.mxu0 0
    %407 = vmatmul.mubr.bf16.gmra.mrb[0].mxu0 %v196
    %v408 = vpop.f32.mrb[0].mxu0
    %v409 = vadd.f32 %v124, %v408
    %v410 = vpop.f32.mrb[0].mxu0
    %v411 = vadd.f32 %v128, %v410
    %v412 = vpop.f32.mrb[0].mxu0
    %v413 = vadd.f32 %v124, %v412
    %v414 = vpop.f32.mrb[0].mxu0
    %v415 = vadd.f32 %v128, %v414
    %416 = vdwg.mxu0
    %v417 = vld [vmem:[#allocation5] sm:$0xff]
    %v418 = vld [vmem:[#allocation5 + $0x8] sm:$0xf]
    %v419 = vld [vmem:[#allocation5 + $0xc] sm:$0xff]
    %v420 = vld [vmem:[#allocation5 + $0x14] sm:$0xf]
    %v421 = vld [vmem:[#allocation5 + $0x18] sm:$0xff]
    %v422 = vld [vmem:[#allocation5 + $0x20] sm:$0xf]
    %v423 = vld [vmem:[#allocation5 + $0x24] sm:$0xff]
    %v424 = vld [vmem:[#allocation5 + $0x2c] sm:$0xf]
    %v425 = vld [vmem:[#allocation5 + $0x30] sm:$0xff]
    %v426 = vld [vmem:[#allocation5 + $0x38] sm:$0xf]
    %v427 = vld [vmem:[#allocation5 + $0x3c] sm:$0xff]
    %v428 = vld [vmem:[#allocation5 + $0x44] sm:$0xf]
    %v429 = vld [vmem:[#allocation5 + $0x48] sm:$0xff]
    %v430 = vld [vmem:[#allocation5 + $0x50] sm:$0xf]
    %v431 = vld [vmem:[#allocation5 + $0x54] sm:$0xff]
    %v432 = vld [vmem:[#allocation5 + $0x5c] sm:$0xf]
    %v433 = vld [vmem:[#allocation5 + $0x60] sm:$0xff]
    %v434 = vld [vmem:[#allocation5 + $0x68] sm:$0xf]
    %v435 = vld [vmem:[#allocation5 + $0x6c] sm:$0xff]
    %v436 = vld [vmem:[#allocation5 + $0x74] sm:$0xf]
    %v437 = vld [vmem:[#allocation5 + $0x78] sm:$0xff]
    %v438 = vld [vmem:[#allocation5 + $0x80] sm:$0xf]
    %v439 = vld [vmem:[#allocation5 + $0x84] sm:$0xff]
    %v440 = vld [vmem:[#allocation5 + $0x8c] sm:$0xf]
    %v441 = vld [vmem:[#allocation5 + $0x90] sm:$0xff]
    %v442 = vld [vmem:[#allocation5 + $0x98] sm:$0xf]
    %v443 = vld [vmem:[#allocation5 + $0x9c] sm:$0xff]
    %v444 = vld [vmem:[#allocation5 + $0xa4] sm:$0xf]
    %v445 = vld [vmem:[#allocation5 + $0xa8] sm:$0xff]
    %v446 = vld [vmem:[#allocation5 + $0xb0] sm:$0xf]
    %v447 = vld [vmem:[#allocation5 + $0xb4] sm:$0xff]
    %v448 = vld [vmem:[#allocation5 + $0xbc] sm:$0xf]
    %v449 = vld [vmem:[#allocation7] sm:$0xff]
    %v450 = vld [vmem:[#allocation7 + $0x8] sm:$0xf]
    %v451 = vld [vmem:[#allocation7 + $0xc] sm:$0xff]
    %v452 = vld [vmem:[#allocation7 + $0x14] sm:$0xf]
    %v453 = vld [vmem:[#allocation7 + $0x18] sm:$0xff]
    %v454 = vld [vmem:[#allocation7 + $0x20] sm:$0xf]
    %v455 = vld [vmem:[#allocation7 + $0x24] sm:$0xff]
    %v456 = vld [vmem:[#allocation7 + $0x2c] sm:$0xf]
    %v457 = vld [vmem:[#allocation7 + $0x30] sm:$0xff]
    %v458 = vld [vmem:[#allocation7 + $0x38] sm:$0xf]
    %v459 = vld [vmem:[#allocation7 + $0x3c] sm:$0xff]
    %v460 = vld [vmem:[#allocation7 + $0x44] sm:$0xf]
    %v461 = vld [vmem:[#allocation7 + $0x48] sm:$0xff]
    %v462 = vld [vmem:[#allocation7 + $0x50] sm:$0xf]
    %v463 = vld [vmem:[#allocation7 + $0x54] sm:$0xff]
    %v464 = vld [vmem:[#allocation7 + $0x5c] sm:$0xf]
    %v465 = vld [vmem:[#allocation7 + $0x60] sm:$0xff]
    %v466 = vld [vmem:[#allocation7 + $0x68] sm:$0xf]
    %v467 = vld [vmem:[#allocation7 + $0x6c] sm:$0xff]
    %v468 = vld [vmem:[#allocation7 + $0x74] sm:$0xf]
    %v469 = vld [vmem:[#allocation7 + $0x78] sm:$0xff]
    %v470 = vld [vmem:[#allocation7 + $0x80] sm:$0xf]
    %v471 = vld [vmem:[#allocation7 + $0x84] sm:$0xff]
    %v472 = vld [vmem:[#allocation7 + $0x8c] sm:$0xf]
    %v473 = vld [vmem:[#allocation7 + $0x90] sm:$0xff]
    %v474 = vld [vmem:[#allocation7 + $0x98] sm:$0xf]
    %v475 = vld [vmem:[#allocation7 + $0x9c] sm:$0xff]
    %v476 = vld [vmem:[#allocation7 + $0xa4] sm:$0xf]
    %v477 = vld [vmem:[#allocation7 + $0xa8] sm:$0xff]
    %v478 = vld [vmem:[#allocation7 + $0xb0] sm:$0xf]
    %v479 = vld [vmem:[#allocation7 + $0xb4] sm:$0xff]
    %v480 = vld [vmem:[#allocation7 + $0xbc] sm:$0xf]
    %v481 = vld [vmem:[%s5] sm:$0x1]
    %v482 = vld [vmem:[%s6] sm:$0x1]
    %v515 = vunpack.c.l.b16 %v417
    %v516 = vunpack.c.h.b16 %v417
    %v517 = vunpack.c.l.b16 %v418
    %v518 = vunpack.c.l.b16 %v419
    %v519 = vunpack.c.h.b16 %v419
    %v520 = vunpack.c.l.b16 %v420
    %v521 = vunpack.c.l.b16 %v421
    %v522 = vunpack.c.h.b16 %v421
    %v523 = vunpack.c.l.b16 %v422
    %v524 = vunpack.c.l.b16 %v423
    %v525 = vunpack.c.h.b16 %v423
    %v526 = vunpack.c.l.b16 %v424
    %v527 = vunpack.c.l.b16 %v425
    %v528 = vunpack.c.h.b16 %v425
    %v529 = vunpack.c.l.b16 %v426
    %v530 = vunpack.c.l.b16 %v427
    %v531 = vunpack.c.h.b16 %v427
    %v532 = vunpack.c.l.b16 %v428
    %v533 = vunpack.c.l.b16 %v429
    %v534 = vunpack.c.h.b16 %v429
    %v535 = vunpack.c.l.b16 %v430
    %v536 = vunpack.c.l.b16 %v431
    %v537 = vunpack.c.h.b16 %v431
    %v538 = vunpack.c.l.b16 %v432
    %v539 = vunpack.c.l.b16 %v433
    %v540 = vunpack.c.h.b16 %v433
    %v541 = vunpack.c.l.b16 %v434
    %v542 = vunpack.c.l.b16 %v435
    %v543 = vunpack.c.h.b16 %v435
    %v544 = vunpack.c.l.b16 %v436
    %v545 = vunpack.c.l.b16 %v437
    %v546 = vunpack.c.h.b16 %v437
    %v547 = vunpack.c.l.b16 %v438
    %v548 = vunpack.c.l.b16 %v439
    %v549 = vunpack.c.h.b16 %v439
    %v550 = vunpack.c.l.b16 %v440
    %v551 = vunpack.c.l.b16 %v441
    %v552 = vunpack.c.h.b16 %v441
    %v553 = vunpack.c.l.b16 %v442
    %v554 = vunpack.c.l.b16 %v443
    %v555 = vunpack.c.h.b16 %v443
    %v556 = vunpack.c.l.b16 %v444
    %v557 = vunpack.c.l.b16 %v445
    %v558 = vunpack.c.h.b16 %v445
    %v559 = vunpack.c.l.b16 %v446
    %v560 = vunpack.c.l.b16 %v447
    %v561 = vunpack.c.h.b16 %v447
    %v562 = vunpack.c.l.b16 %v448
    %v563 = vpack.c.b16 %v518, %v515
    %v564 = vpack.c.b16 %v519, %v516
    %v565 = vpack.c.b16 %v520, %v517
    %v566 = vpack.c.b16 %v524, %v521
    %v567 = vpack.c.b16 %v525, %v522
    %v568 = vpack.c.b16 %v526, %v523
    %v569 = vpack.c.b16 %v530, %v527
    %v570 = vpack.c.b16 %v531, %v528
    %v571 = vpack.c.b16 %v532, %v529
    %v572 = vpack.c.b16 %v536, %v533
    %v573 = vpack.c.b16 %v537, %v534
    %v574 = vpack.c.b16 %v538, %v535
    %v575 = vpack.c.b16 %v542, %v539
    %v576 = vpack.c.b16 %v543, %v540
    %v577 = vpack.c.b16 %v544, %v541
    %v578 = vpack.c.b16 %v548, %v545
    %v579 = vpack.c.b16 %v549, %v546
    %v580 = vpack.c.b16 %v550, %v547
    %v581 = vpack.c.b16 %v554, %v551
    %v582 = vpack.c.b16 %v555, %v552
    %v583 = vpack.c.b16 %v556, %v553
    %v584 = vpack.c.b16 %v560, %v557
    %v585 = vpack.c.b16 %v561, %v558
    %v586 = vpack.c.b16 %v562, %v559
    %611 = vmatprep.subr.bf16.mxu0 %v564
    %612 = vmatpush1.bf16.msra.mxu0 %v563
    %613 = vmatprep.subr.bf16.mxu0 %v567
    %614 = vmatpush1.bf16.msra.mxu0 %v566
    %615 = vmatprep.subr.bf16.mxu0 %v570
    %616 = vmatpush1.bf16.msra.mxu0 %v569
    %617 = vmatprep.subr.bf16.mxu0 %v573
    %618 = vmatpush1.bf16.msra.mxu0 %v572
    %619 = vmatprep.subr.bf16.mxu0 %v576
    %620 = vmatpush1.bf16.msra.mxu0 %v575
    %621 = vmatprep.subr.bf16.mxu0 %v579
    %622 = vmatpush1.bf16.msra.mxu0 %v578
    %623 = vmatprep.subr.bf16.mxu0 %v582
    %624 = vmatpush1.bf16.msra.mxu0 %v581
    %625 = vmatprep.subr.bf16.mxu0 %v585
    %626 = vmatpush1.bf16.msra.mxu0 %v584
    %627 = vmatprep.subr.bf16.mxu0 0
    %628 = vmatpush1.bf16.msra.mxu0 0
    %629 = vmatprep.subr.bf16.mxu0 0
    %630 = vmatpush1.bf16.msra.mxu0 0
    %631 = vmatprep.subr.bf16.mxu0 0
    %632 = vmatpush1.bf16.msra.mxu0 0
    %633 = vmatprep.subr.bf16.mxu0 0
    %634 = vmatpush1.bf16.msra.mxu0 0
    %635 = vmatprep.subr.bf16.mxu0 0
    %636 = vmatpush1.bf16.msra.mxu0 0
    %637 = vmatprep.subr.bf16.mxu0 0
    %638 = vmatpush1.bf16.msra.mxu0 0
    %639 = vmatprep.subr.bf16.mxu0 0
    %640 = vmatpush1.bf16.msra.mxu0 0
    %641 = vmatprep.subr.bf16.mxu0 0
    %642 = vmatpush1.bf16.msra.mxu0 0
    %643 = vmatprep.mubr.bf16.mxu0 0
    %644 = vmatmul.mubr.bf16.gmra.mrb[0].mxu0 0
    %v645 = vpop.f32.mrb[0].mxu0
    %v646 = vadd.f32 0.0, %v645
    %v647 = vpop.f32.mrb[0].mxu0
    %v648 = vadd.f32 0.0, %v647
    %v649 = vpop.f32.mrb[0].mxu0
    %v650 = vpop.f32.mrb[0].mxu0
    %651 = vdwg.mxu0
    %652 = vmatprep.subr.bf16.mxu0 0
    %653 = vmatpush1.bf16.msra.mxu0 %v565
    %654 = vmatprep.subr.bf16.mxu0 0
    %655 = vmatpush1.bf16.msra.mxu0 %v568
    %656 = vmatprep.subr.bf16.mxu0 0
    %657 = vmatpush1.bf16.msra.mxu0 %v571
    %658 = vmatprep.subr.bf16.mxu0 0
    %659 = vmatpush1.bf16.msra.mxu0 %v574
    %660 = vmatprep.subr.bf16.mxu0 0
    %661 = vmatpush1.bf16.msra.mxu0 %v577
    %662 = vmatprep.subr.bf16.mxu0 0
    %663 = vmatpush1.bf16.msra.mxu0 %v580
    %664 = vmatprep.subr.bf16.mxu0 0
    %665 = vmatpush1.bf16.msra.mxu0 %v583
    %666 = vmatprep.subr.bf16.mxu0 0
    %667 = vmatpush1.bf16.msra.mxu0 %v586
    %668 = vmatprep.subr.bf16.mxu0 0
    %669 = vmatpush1.bf16.msra.mxu0 0
    %670 = vmatprep.subr.bf16.mxu0 0
    %671 = vmatpush1.bf16.msra.mxu0 0
    %672 = vmatprep.subr.bf16.mxu0 0
    %673 = vmatpush1.bf16.msra.mxu0 0
    %674 = vmatprep.subr.bf16.mxu0 0
    %675 = vmatpush1.bf16.msra.mxu0 0
    %676 = vmatprep.subr.bf16.mxu0 0
    %677 = vmatpush1.bf16.msra.mxu0 0
    %678 = vmatprep.subr.bf16.mxu0 0
    %679 = vmatpush1.bf16.msra.mxu0 0
    %680 = vmatprep.subr.bf16.mxu0 0
    %681 = vmatpush1.bf16.msra.mxu0 0
    %682 = vmatprep.subr.bf16.mxu0 0
    %683 = vmatpush1.bf16.msra.mxu0 0
    %684 = vmatprep.mubr.bf16.mxu0 0
    %685 = vmatmul.mubr.bf16.gmra.mrb[0].mxu0 0
    %v686 = vpop.f32.mrb[0].mxu0
    %v687 = vadd.f32 0.0, %v686
    %v688 = vpop.f32.mrb[0].mxu0
    %v689 = vpop.f32.mrb[0].mxu0
    %v690 = vpop.f32.mrb[0].mxu0
    %691 = vdwg.mxu0
    %v692 = vadd.f32 %v233, %v646
    %v693 = vxor.u32 %v692, 2147483648
    %v694 = vmul.f32 %v693, 1.442695
    %v695 = vpow.pop %v694
    %v696 = vadd.f32 %v695, 1.0
    %v697 = vrcp.pop %v696
    %v698 = vmul.f32 1.0, %v697
    %v699 = vadd.f32 %v235, %v648
    %v700 = vxor.u32 %v699, 2147483648
    %v701 = vmul.f32 %v700, 1.442695
    %v702 = vpow.pop %v701
    %v703 = vadd.f32 %v702, 1.0
    %v704 = vrcp.pop %v703
    %v705 = vmul.f32 1.0, %v704
    %v707 = vlaneseq
    %v708 = vshrl.u32 %v707, 7
    %v709 = vsub.s32 0, %v708
    %v710 = vrot.slane %v481, %v709
    %v712 = vadd.f32 %v687, %v710
    %v713 = vmul.f32 %v698, %v712
    %v714 = vadd.f32 %v306, %v713
    %v715 = vtanh.pop %v714
    %v716 = vsub.f32 0.0, %v715
    %v717 = vmul.f32 %v705, %v716
    %v718 = vadd.f32 %v715, %v717
    %v751 = vunpack.c.l.b16 %v449
    %v752 = vunpack.c.h.b16 %v449
    %v753 = vunpack.c.l.b16 %v450
    %v754 = vunpack.c.l.b16 %v451
    %v755 = vunpack.c.h.b16 %v451
    %v756 = vunpack.c.l.b16 %v452
    %v757 = vunpack.c.l.b16 %v453
    %v758 = vunpack.c.h.b16 %v453
    %v759 = vunpack.c.l.b16 %v454
    %v760 = vunpack.c.l.b16 %v455
    %v761 = vunpack.c.h.b16 %v455
    %v762 = vunpack.c.l.b16 %v456
    %v763 = vunpack.c.l.b16 %v457
    %v764 = vunpack.c.h.b16 %v457
    %v765 = vunpack.c.l.b16 %v458
    %v766 = vunpack.c.l.b16 %v459
    %v767 = vunpack.c.h.b16 %v459
    %v768 = vunpack.c.l.b16 %v460
    %v769 = vunpack.c.l.b16 %v461
    %v770 = vunpack.c.h.b16 %v461
    %v771 = vunpack.c.l.b16 %v462
    %v772 = vunpack.c.l.b16 %v463
    %v773 = vunpack.c.h.b16 %v463
    %v774 = vunpack.c.l.b16 %v464
    %v775 = vunpack.c.l.b16 %v465
    %v776 = vunpack.c.h.b16 %v465
    %v777 = vunpack.c.l.b16 %v466
    %v778 = vunpack.c.l.b16 %v467
    %v779 = vunpack.c.h.b16 %v467
    %v780 = vunpack.c.l.b16 %v468
    %v781 = vunpack.c.l.b16 %v469
    %v782 = vunpack.c.h.b16 %v469
    %v783 = vunpack.c.l.b16 %v470
    %v784 = vunpack.c.l.b16 %v471
    %v785 = vunpack.c.h.b16 %v471
    %v786 = vunpack.c.l.b16 %v472
    %v787 = vunpack.c.l.b16 %v473
    %v788 = vunpack.c.h.b16 %v473
    %v789 = vunpack.c.l.b16 %v474
    %v790 = vunpack.c.l.b16 %v475
    %v791 = vunpack.c.h.b16 %v475
    %v792 = vunpack.c.l.b16 %v476
    %v793 = vunpack.c.l.b16 %v477
    %v794 = vunpack.c.h.b16 %v477
    %v795 = vunpack.c.l.b16 %v478
    %v796 = vunpack.c.l.b16 %v479
    %v797 = vunpack.c.h.b16 %v479
    %v798 = vunpack.c.l.b16 %v480
    %v799 = vpack.c.b16 %v754, %v751
    %v800 = vpack.c.b16 %v755, %v752
    %v801 = vpack.c.b16 %v756, %v753
    %v802 = vpack.c.b16 %v760, %v757
    %v803 = vpack.c.b16 %v761, %v758
    %v804 = vpack.c.b16 %v762, %v759
    %v805 = vpack.c.b16 %v766, %v763
    %v806 = vpack.c.b16 %v767, %v764
    %v807 = vpack.c.b16 %v768, %v765
    %v808 = vpack.c.b16 %v772, %v769
    %v809 = vpack.c.b16 %v773, %v770
    %v810 = vpack.c.b16 %v774, %v771
    %v811 = vpack.c.b16 %v778, %v775
    %v812 = vpack.c.b16 %v779, %v776
    %v813 = vpack.c.b16 %v780, %v777
    %v814 = vpack.c.b16 %v784, %v781
    %v815 = vpack.c.b16 %v785, %v782
    %v816 = vpack.c.b16 %v786, %v783
    %v817 = vpack.c.b16 %v790, %v787
    %v818 = vpack.c.b16 %v791, %v788
    %v819 = vpack.c.b16 %v792, %v789
    %v820 = vpack.c.b16 %v796, %v793
    %v821 = vpack.c.b16 %v797, %v794
    %v822 = vpack.c.b16 %v798, %v795
    %847 = vmatprep.subr.bf16.mxu0 %v800
    %848 = vmatpush1.bf16.msra.mxu0 %v799
    %849 = vmatprep.subr.bf16.mxu0 %v803
    %850 = vmatpush1.bf16.msra.mxu0 %v802
    %851 = vmatprep.subr.bf16.mxu0 %v806
    %852 = vmatpush1.bf16.msra.mxu0 %v805
    %853 = vmatprep.subr.bf16.mxu0 %v809
    %854 = vmatpush1.bf16.msra.mxu0 %v808
    %855 = vmatprep.subr.bf16.mxu0 %v812
    %856 = vmatpush1.bf16.msra.mxu0 %v811
    %857 = vmatprep.subr.bf16.mxu0 %v815
    %858 = vmatpush1.bf16.msra.mxu0 %v814
    %859 = vmatprep.subr.bf16.mxu0 %v818
    %860 = vmatpush1.bf16.msra.mxu0 %v817
    %861 = vmatprep.subr.bf16.mxu0 %v821
    %862 = vmatpush1.bf16.msra.mxu0 %v820
    %863 = vmatprep.subr.bf16.mxu0 0
    %864 = vmatpush1.bf16.msra.mxu0 0
    %865 = vmatprep.subr.bf16.mxu0 0
    %866 = vmatpush1.bf16.msra.mxu0 0
    %867 = vmatprep.subr.bf16.mxu0 0
    %868 = vmatpush1.bf16.msra.mxu0 0
    %869 = vmatprep.subr.bf16.mxu0 0
    %870 = vmatpush1.bf16.msra.mxu0 0
    %871 = vmatprep.subr.bf16.mxu0 0
    %872 = vmatpush1.bf16.msra.mxu0 0
    %873 = vmatprep.subr.bf16.mxu0 0
    %874 = vmatpush1.bf16.msra.mxu0 0
    %875 = vmatprep.subr.bf16.mxu0 0
    %876 = vmatpush1.bf16.msra.mxu0 0
    %877 = vmatprep.subr.bf16.mxu0 0
    %878 = vmatpush1.bf16.msra.mxu0 0
    %879 = vmatprep.mubr.bf16.mxu0 0
    %880 = vmatmul.mubr.bf16.gmra.mrb[0].mxu0 0
    %v881 = vpop.f32.mrb[0].mxu0
    %v882 = vadd.f32 0.0, %v881
    %v883 = vpop.f32.mrb[0].mxu0
    %v884 = vadd.f32 0.0, %v883
    %v885 = vpop.f32.mrb[0].mxu0
    %v886 = vpop.f32.mrb[0].mxu0
    %887 = vdwg.mxu0
    %888 = vmatprep.subr.bf16.mxu0 0
    %889 = vmatpush1.bf16.msra.mxu0 %v801
    %890 = vmatprep.subr.bf16.mxu0 0
    %891 = vmatpush1.bf16.msra.mxu0 %v804
    %892 = vmatprep.subr.bf16.mxu0 0
    %893 = vmatpush1.bf16.msra.mxu0 %v807
    %894 = vmatprep.subr.bf16.mxu0 0
    %895 = vmatpush1.bf16.msra.mxu0 %v810
    %896 = vmatprep.subr.bf16.mxu0 0
    %897 = vmatpush1.bf16.msra.mxu0 %v813
    %898 = vmatprep.subr.bf16.mxu0 0
    %899 = vmatpush1.bf16.msra.mxu0 %v816
    %900 = vmatprep.subr.bf16.mxu0 0
    %901 = vmatpush1.bf16.msra.mxu0 %v819
    %902 = vmatprep.subr.bf16.mxu0 0
    %903 = vmatpush1.bf16.msra.mxu0 %v822
    %904 = vmatprep.subr.bf16.mxu0 0
    %905 = vmatpush1.bf16.msra.mxu0 0
    %906 = vmatprep.subr.bf16.mxu0 0
    %907 = vmatpush1.bf16.msra.mxu0 0
    %908 = vmatprep.subr.bf16.mxu0 0
    %909 = vmatpush1.bf16.msra.mxu0 0
    %910 = vmatprep.subr.bf16.mxu0 0
    %911 = vmatpush1.bf16.msra.mxu0 0
    %912 = vmatprep.subr.bf16.mxu0 0
    %913 = vmatpush1.bf16.msra.mxu0 0
    %914 = vmatprep.subr.bf16.mxu0 0
    %915 = vmatpush1.bf16.msra.mxu0 0
    %916 = vmatprep.subr.bf16.mxu0 0
    %917 = vmatpush1.bf16.msra.mxu0 0
    %918 = vmatprep.subr.bf16.mxu0 0
    %919 = vmatpush1.bf16.msra.mxu0 0
    %920 = vmatprep.mubr.bf16.mxu0 0
    %921 = vmatmul.mubr.bf16.gmra.mrb[0].mxu0 0
    %v922 = vpop.f32.mrb[0].mxu0
    %v923 = vadd.f32 0.0, %v922
    %v924 = vpop.f32.mrb[0].mxu0
    %v925 = vpop.f32.mrb[0].mxu0
    %v926 = vpop.f32.mrb[0].mxu0
    %927 = vdwg.mxu0
    %v928 = vadd.f32 %v342, %v882
    %v929 = vxor.u32 %v928, 2147483648
    %v930 = vmul.f32 %v929, 1.442695
    %v931 = vpow.pop %v930
    %v932 = vadd.f32 %v931, 1.0
    %v933 = vrcp.pop %v932
    %v934 = vmul.f32 1.0, %v933
    %v935 = vadd.f32 %v413, %v884
    %v936 = vxor.u32 %v935, 2147483648
    %v937 = vmul.f32 %v936, 1.442695
    %v938 = vpow.pop %v937
    %v939 = vadd.f32 %v938, 1.0
    %v940 = vrcp.pop %v939
    %v941 = vmul.f32 1.0, %v940
    %v943 = vlaneseq
    %v944 = vshrl.u32 %v943, 7
    %v945 = vsub.s32 0, %v944
    %v946 = vrot.slane %v482, %v945
    %v948 = vadd.f32 %v923, %v946
    %v949 = vmul.f32 %v934, %v948
    %v950 = vadd.f32 %v415, %v949
    %v951 = vtanh.pop %v950
    %v952 = vsub.f32 0.0, %v951
    %v953 = vmul.f32 %v941, %v952
    %v954 = vadd.f32 %v951, %v953
    %v955 = vpack.c.bf16 %v718, %v718
    %956 = vmatprep.subr.bf16.mxu0 %v564
    %957 = vmatpush1.bf16.msra.mxu0 %v563
    %958 = vmatprep.subr.bf16.mxu0 %v567
    %959 = vmatpush1.bf16.msra.mxu0 %v566
    %960 = vmatprep.subr.bf16.mxu0 %v570
    %961 = vmatpush1.bf16.msra.mxu0 %v569
    %962 = vmatprep.subr.bf16.mxu0 %v573
    %963 = vmatpush1.bf16.msra.mxu0 %v572
    %964 = vmatprep.subr.bf16.mxu0 %v576
    %965 = vmatpush1.bf16.msra.mxu0 %v575
    %966 = vmatprep.subr.bf16.mxu0 %v579
    %967 = vmatpush1.bf16.msra.mxu0 %v578
    %968 = vmatprep.subr.bf16.mxu0 %v582
    %969 = vmatpush1.bf16.msra.mxu0 %v581
    %970 = vmatprep.subr.bf16.mxu0 %v585
    %971 = vmatpush1.bf16.msra.mxu0 %v584
    %972 = vmatprep.subr.bf16.mxu0 0
    %973 = vmatpush1.bf16.msra.mxu0 0
    %974 = vmatprep.subr.bf16.mxu0 0
    %975 = vmatpush1.bf16.msra.mxu0 0
    %976 = vmatprep.subr.bf16.mxu0 0
    %977 = vmatpush1.bf16.msra.mxu0 0
    %978 = vmatprep.subr.bf16.mxu0 0
    %979 = vmatpush1.bf16.msra.mxu0 0
    %980 = vmatprep.subr.bf16.mxu0 0
    %981 = vmatpush1.bf16.msra.mxu0 0
    %982 = vmatprep.subr.bf16.mxu0 0
    %983 = vmatpush1.bf16.msra.mxu0 0
    %984 = vmatprep.subr.bf16.mxu0 0
    %985 = vmatpush1.bf16.msra.mxu0 0
    %986 = vmatprep.subr.bf16.mxu0 0
    %987 = vmatpush1.bf16.msra.mxu0 0
    %988 = vmatprep.mubr.bf16.mxu0 0
    %989 = vmatmul.mubr.bf16.gmra.mrb[0].mxu0 %v955
    %v990 = vpop.f32.mrb[0].mxu0
    %v991 = vadd.f32 0.0, %v990
    %v992 = vpop.f32.mrb[0].mxu0
    %v993 = vadd.f32 0.0, %v992
    %v994 = vpop.f32.mrb[0].mxu0
    %v995 = vpop.f32.mrb[0].mxu0
    %996 = vdwg.mxu0
    %997 = vmatprep.subr.bf16.mxu0 0
    %998 = vmatpush1.bf16.msra.mxu0 %v565
    %999 = vmatprep.subr.bf16.mxu0 0
    %1000 = vmatpush1.bf16.msra.mxu0 %v568
    %1001 = vmatprep.subr.bf16.mxu0 0
    %1002 = vmatpush1.bf16.msra.mxu0 %v571
    %1003 = vmatprep.subr.bf16.mxu0 0
    %1004 = vmatpush1.bf16.msra.mxu0 %v574
    %1005 = vmatprep.subr.bf16.mxu0 0
    %1006 = vmatpush1.bf16.msra.mxu0 %v577
    %1007 = vmatprep.subr.bf16.mxu0 0
    %1008 = vmatpush1.bf16.msra.mxu0 %v580
    %1009 = vmatprep.subr.bf16.mxu0 0
    %1010 = vmatpush1.bf16.msra.mxu0 %v583
    %1011 = vmatprep.subr.bf16.mxu0 0
    %1012 = vmatpush1.bf16.msra.mxu0 %v586
    %1013 = vmatprep.subr.bf16.mxu0 0
    %1014 = vmatpush1.bf16.msra.mxu0 0
    %1015 = vmatprep.subr.bf16.mxu0 0
    %1016 = vmatpush1.bf16.msra.mxu0 0
    %1017 = vmatprep.subr.bf16.mxu0 0
    %1018 = vmatpush1.bf16.msra.mxu0 0
    %1019 = vmatprep.subr.bf16.mxu0 0
    %1020 = vmatpush1.bf16.msra.mxu0 0
    %1021 = vmatprep.subr.bf16.mxu0 0
    %1022 = vmatpush1.bf16.msra.mxu0 0
    %1023 = vmatprep.subr.bf16.mxu0 0
    %1024 = vmatpush1.bf16.msra.mxu0 0
    %1025 = vmatprep.subr.bf16.mxu0 0
    %1026 = vmatpush1.bf16.msra.mxu0 0
    %1027 = vmatprep.subr.bf16.mxu0 0
    %1028 = vmatpush1.bf16.msra.mxu0 0
    %1029 = vmatprep.mubr.bf16.mxu0 0
    %1030 = vmatmul.mubr.bf16.gmra.mrb[0].mxu0 %v955
    %v1031 = vpop.f32.mrb[0].mxu0
    %v1032 = vadd.f32 0.0, %v1031
    %v1033 = vpop.f32.mrb[0].mxu0
    %v1034 = vpop.f32.mrb[0].mxu0
    %v1035 = vpop.f32.mrb[0].mxu0
    %1036 = vdwg.mxu0
    %v1037 = vadd.f32 %v237, %v991
    %v1038 = vxor.u32 %v1037, 2147483648
    %v1039 = vmul.f32 %v1038, 1.442695
    %v1040 = vpow.pop %v1039
    %v1041 = vadd.f32 %v1040, 1.0
    %v1042 = vrcp.pop %v1041
    %v1043 = vmul.f32 1.0, %v1042
    %v1044 = vadd.f32 %v239, %v993
    %v1045 = vxor.u32 %v1044, 2147483648
    %v1046 = vmul.f32 %v1045, 1.442695
    %v1047 = vpow.pop %v1046
    %v1048 = vadd.f32 %v1047, 1.0
    %v1049 = vrcp.pop %v1048
    %v1050 = vmul.f32 1.0, %v1049
    %v1051 = vadd.f32 %v1032, %v710
    %v1052 = vmul.f32 %v1043, %v1051
    %v1053 = vadd.f32 %v310, %v1052
    %v1054 = vtanh.pop %v1053
    %v1055 = vsub.f32 %v718, %v1054
    %v1056 = vmul.f32 %v1050, %v1055
    %v1057 = vadd.f32 %v1054, %v1056
    %v1058 = vpack.c.bf16 %v954, %v954
    %1059 = vmatprep.subr.bf16.mxu0 %v800
    %1060 = vmatpush1.bf16.msra.mxu0 %v799
    %1061 = vmatprep.subr.bf16.mxu0 %v803
    %1062 = vmatpush1.bf16.msra.mxu0 %v802
    %1063 = vmatprep.subr.bf16.mxu0 %v806
    %1064 = vmatpush1.bf16.msra.mxu0 %v805
    %1065 = vmatprep.subr.bf16.mxu0 %v809
    %1066 = vmatpush1.bf16.msra.mxu0 %v808
    %1067 = vmatprep.subr.bf16.mxu0 %v812
    %1068 = vmatpush1.bf16.msra.mxu0 %v811
    %1069 = vmatprep.subr.bf16.mxu0 %v815
    %1070 = vmatpush1.bf16.msra.mxu0 %v814
    %1071 = vmatprep.subr.bf16.mxu0 %v818
    %1072 = vmatpush1.bf16.msra.mxu0 %v817
    %1073 = vmatprep.subr.bf16.mxu0 %v821
    %1074 = vmatpush1.bf16.msra.mxu0 %v820
    %1075 = vmatprep.subr.bf16.mxu0 0
    %1076 = vmatpush1.bf16.msra.mxu0 0
    %1077 = vmatprep.subr.bf16.mxu0 0
    %1078 = vmatpush1.bf16.msra.mxu0 0
    %1079 = vmatprep.subr.bf16.mxu0 0
    %1080 = vmatpush1.bf16.msra.mxu0 0
    %1081 = vmatprep.subr.bf16.mxu0 0
    %1082 = vmatpush1.bf16.msra.mxu0 0
    %1083 = vmatprep.subr.bf16.mxu0 0
    %1084 = vmatpush1.bf16.msra.mxu0 0
    %1085 = vmatprep.subr.bf16.mxu0 0
    %1086 = vmatpush1.bf16.msra.mxu0 0
    %1087 = vmatprep.subr.bf16.mxu0 0
    %1088 = vmatpush1.bf16.msra.mxu0 0
    %1089 = vmatprep.subr.bf16.mxu0 0
    %1090 = vmatpush1.bf16.msra.mxu0 0
    %1091 = vmatprep.mubr.bf16.mxu0 0
    %1092 = vmatmul.mubr.bf16.gmra.mrb[0].mxu0 %v1058
    %v1093 = vpop.f32.mrb[0].mxu0
    %v1094 = vadd.f32 0.0, %v1093
    %v1095 = vpop.f32.mrb[0].mxu0
    %v1096 = vadd.f32 0.0, %v1095
    %v1097 = vpop.f32.mrb[0].mxu0
    %v1098 = vpop.f32.mrb[0].mxu0
    %1099 = vdwg.mxu0
    %1100 = vmatprep.subr.bf16.mxu0 0
    %1101 = vmatpush1.bf16.msra.mxu0 %v801
    %1102 = vmatprep.subr.bf16.mxu0 0
    %1103 = vmatpush1.bf16.msra.mxu0 %v804
    %1104 = vmatprep.subr.bf16.mxu0 0
    %1105 = vmatpush1.bf16.msra.mxu0 %v807
    %1106 = vmatprep.subr.bf16.mxu0 0
    %1107 = vmatpush1.bf16.msra.mxu0 %v810
    %1108 = vmatprep.subr.bf16.mxu0 0
    %1109 = vmatpush1.bf16.msra.mxu0 %v813
    %1110 = vmatprep.subr.bf16.mxu0 0
    %1111 = vmatpush1.bf16.msra.mxu0 %v816
    %1112 = vmatprep.subr.bf16.mxu0 0
    %1113 = vmatpush1.bf16.msra.mxu0 %v819
    %1114 = vmatprep.subr.bf16.mxu0 0
    %1115 = vmatpush1.bf16.msra.mxu0 %v822
    %1116 = vmatprep.subr.bf16.mxu0 0
    %1117 = vmatpush1.bf16.msra.mxu0 0
    %1118 = vmatprep.subr.bf16.mxu0 0
    %1119 = vmatpush1.bf16.msra.mxu0 0
    %1120 = vmatprep.subr.bf16.mxu0 0
    %1121 = vmatpush1.bf16.msra.mxu0 0
    %1122 = vmatprep.subr.bf16.mxu0 0
    %1123 = vmatpush1.bf16.msra.mxu0 0
    %1124 = vmatprep.subr.bf16.mxu0 0
    %1125 = vmatpush1.bf16.msra.mxu0 0
    %1126 = vmatprep.subr.bf16.mxu0 0
    %1127 = vmatpush1.bf16.msra.mxu0 0
    %1128 = vmatprep.subr.bf16.mxu0 0
    %1129 = vmatpush1.bf16.msra.mxu0 0
    %1130 = vmatprep.subr.bf16.mxu0 0
    %1131 = vmatpush1.bf16.msra.mxu0 0
    %1132 = vmatprep.mubr.bf16.mxu0 0
    %1133 = vmatmul.mubr.bf16.gmra.mrb[0].mxu0 %v1058
    %v1134 = vpop.f32.mrb[0].mxu0
    %v1135 = vadd.f32 0.0, %v1134
    %v1136 = vpop.f32.mrb[0].mxu0
    %v1137 = vpop.f32.mrb[0].mxu0
    %v1138 = vpop.f32.mrb[0].mxu0
    %1139 = vdwg.mxu0
    %v1140 = vadd.f32 %v338, %v1094
    %v1141 = vxor.u32 %v1140, 2147483648
    %v1142 = vmul.f32 %v1141, 1.442695
    %v1143 = vpow.pop %v1142
    %v1144 = vadd.f32 %v1143, 1.0
    %v1145 = vrcp.pop %v1144
    %v1146 = vmul.f32 1.0, %v1145
    %v1147 = vadd.f32 %v409, %v1096
    %v1148 = vxor.u32 %v1147, 2147483648
    %v1149 = vmul.f32 %v1148, 1.442695
    %v1150 = vpow.pop %v1149
    %v1151 = vadd.f32 %v1150, 1.0
    %v1152 = vrcp.pop %v1151
    %v1153 = vmul.f32 1.0, %v1152
    %v1154 = vadd.f32 %v1135, %v946
    %v1155 = vmul.f32 %v1146, %v1154
    %v1156 = vadd.f32 %v411, %v1155
    %v1157 = vtanh.pop %v1156
    %v1158 = vsub.f32 %v954, %v1157
    %v1159 = vmul.f32 %v1153, %v1158
    %v1160 = vadd.f32 %v1157, %v1159
    %v1161 = vpack.c.bf16 %v1057, %v1057
    %1162 = vmatprep.subr.bf16.mxu0 %v564
    %1163 = vmatpush1.bf16.msra.mxu0 %v563
    %1164 = vmatprep.subr.bf16.mxu0 %v567
    %1165 = vmatpush1.bf16.msra.mxu0 %v566
    %1166 = vmatprep.subr.bf16.mxu0 %v570
    %1167 = vmatpush1.bf16.msra.mxu0 %v569
    %1168 = vmatprep.subr.bf16.mxu0 %v573
    %1169 = vmatpush1.bf16.msra.mxu0 %v572
    %1170 = vmatprep.subr.bf16.mxu0 %v576
    %1171 = vmatpush1.bf16.msra.mxu0 %v575
    %1172 = vmatprep.subr.bf16.mxu0 %v579
    %1173 = vmatpush1.bf16.msra.mxu0 %v578
    %1174 = vmatprep.subr.bf16.mxu0 %v582
    %1175 = vmatpush1.bf16.msra.mxu0 %v581
    %1176 = vmatprep.subr.bf16.mxu0 %v585
    %1177 = vmatpush1.bf16.msra.mxu0 %v584
    %1178 = vmatprep.subr.bf16.mxu0 0
    %1179 = vmatpush1.bf16.msra.mxu0 0
    %1180 = vmatprep.subr.bf16.mxu0 0
    %1181 = vmatpush1.bf16.msra.mxu0 0
    %1182 = vmatprep.subr.bf16.mxu0 0
    %1183 = vmatpush1.bf16.msra.mxu0 0
    %1184 = vmatprep.subr.bf16.mxu0 0
    %1185 = vmatpush1.bf16.msra.mxu0 0
    %1186 = vmatprep.subr.bf16.mxu0 0
    %1187 = vmatpush1.bf16.msra.mxu0 0
    %1188 = vmatprep.subr.bf16.mxu0 0
    %1189 = vmatpush1.bf16.msra.mxu0 0
    %1190 = vmatprep.subr.bf16.mxu0 0
    %1191 = vmatpush1.bf16.msra.mxu0 0
    %1192 = vmatprep.subr.bf16.mxu0 0
    %1193 = vmatpush1.bf16.msra.mxu0 0
    %1194 = vmatprep.mubr.bf16.mxu0 0
    %1195 = vmatmul.mubr.bf16.gmra.mrb[0].mxu0 %v1161
    %v1196 = vpop.f32.mrb[0].mxu0
    %v1197 = vadd.f32 0.0, %v1196
    %v1198 = vpop.f32.mrb[0].mxu0
    %v1199 = vadd.f32 0.0, %v1198
    %v1200 = vpop.f32.mrb[0].mxu0
    %v1201 = vpop.f32.mrb[0].mxu0
    %1202 = vdwg.mxu0
    %1203 = vmatprep.subr.bf16.mxu0 0
    %1204 = vmatpush1.bf16.msra.mxu0 %v565
    %1205 = vmatprep.subr.bf16.mxu0 0
    %1206 = vmatpush1.bf16.msra.mxu0 %v568
    %1207 = vmatprep.subr.bf16.mxu0 0
    %1208 = vmatpush1.bf16.msra.mxu0 %v571
    %1209 = vmatprep.subr.bf16.mxu0 0
    %1210 = vmatpush1.bf16.msra.mxu0 %v574
    %1211 = vmatprep.subr.bf16.mxu0 0
    %1212 = vmatpush1.bf16.msra.mxu0 %v577
    %1213 = vmatprep.subr.bf16.mxu0 0
    %1214 = vmatpush1.bf16.msra.mxu0 %v580
    %1215 = vmatprep.subr.bf16.mxu0 0
    %1216 = vmatpush1.bf16.msra.mxu0 %v583
    %1217 = vmatprep.subr.bf16.mxu0 0
    %1218 = vmatpush1.bf16.msra.mxu0 %v586
    %1219 = vmatprep.subr.bf16.mxu0 0
    %1220 = vmatpush1.bf16.msra.mxu0 0
    %1221 = vmatprep.subr.bf16.mxu0 0
    %1222 = vmatpush1.bf16.msra.mxu0 0
    %1223 = vmatprep.subr.bf16.mxu0 0
    %1224 = vmatpush1.bf16.msra.mxu0 0
    %1225 = vmatprep.subr.bf16.mxu0 0
    %1226 = vmatpush1.bf16.msra.mxu0 0
    %1227 = vmatprep.subr.bf16.mxu0 0
    %1228 = vmatpush1.bf16.msra.mxu0 0
    %1229 = vmatprep.subr.bf16.mxu0 0
    %1230 = vmatpush1.bf16.msra.mxu0 0
    %1231 = vmatprep.subr.bf16.mxu0 0
    %1232 = vmatpush1.bf16.msra.mxu0 0
    %1233 = vmatprep.subr.bf16.mxu0 0
    %1234 = vmatpush1.bf16.msra.mxu0 0
    %1235 = vmatprep.mubr.bf16.mxu0 0
    %1236 = vmatmul.mubr.bf16.gmra.mrb[0].mxu0 %v1161
    %v1237 = vpop.f32.mrb[0].mxu0
    %v1238 = vadd.f32 0.0, %v1237
    %v1239 = vpop.f32.mrb[0].mxu0
    %v1240 = vpop.f32.mrb[0].mxu0
    %v1241 = vpop.f32.mrb[0].mxu0
    %1242 = vdwg.mxu0
    %v1243 = vadd.f32 %v243, %v1197
    %v1244 = vxor.u32 %v1243, 2147483648
    %v1245 = vmul.f32 %v1244, 1.442695
    %v1246 = vpow.pop %v1245
    %v1247 = vadd.f32 %v1246, 1.0
    %v1248 = vrcp.pop %v1247
    %v1249 = vmul.f32 1.0, %v1248
    %v1250 = vadd.f32 %v245, %v1199
    %v1251 = vxor.u32 %v1250, 2147483648
    %v1252 = vmul.f32 %v1251, 1.442695
    %v1253 = vpow.pop %v1252
    %v1254 = vadd.f32 %v1253, 1.0
    %v1255 = vrcp.pop %v1254
    %v1256 = vmul.f32 1.0, %v1255
    %v1257 = vadd.f32 %v1238, %v710
    %v1258 = vmul.f32 %v1249, %v1257
    %v1259 = vadd.f32 %v316, %v1258
    %v1260 = vtanh.pop %v1259
    %v1261 = vsub.f32 %v1057, %v1260
    %v1262 = vmul.f32 %v1256, %v1261
    %v1263 = vadd.f32 %v1260, %v1262
    %v1264 = vpack.c.bf16 %v1160, %v1160
    %1265 = vmatprep.subr.bf16.mxu0 %v800
    %1266 = vmatpush1.bf16.msra.mxu0 %v799
    %1267 = vmatprep.subr.bf16.mxu0 %v803
    %1268 = vmatpush1.bf16.msra.mxu0 %v802
    %1269 = vmatprep.subr.bf16.mxu0 %v806
    %1270 = vmatpush1.bf16.msra.mxu0 %v805
    %1271 = vmatprep.subr.bf16.mxu0 %v809
    %1272 = vmatpush1.bf16.msra.mxu0 %v808
    %1273 = vmatprep.subr.bf16.mxu0 %v812
    %1274 = vmatpush1.bf16.msra.mxu0 %v811
    %1275 = vmatprep.subr.bf16.mxu0 %v815
    %1276 = vmatpush1.bf16.msra.mxu0 %v814
    %1277 = vmatprep.subr.bf16.mxu0 %v818
    %1278 = vmatpush1.bf16.msra.mxu0 %v817
    %1279 = vmatprep.subr.bf16.mxu0 %v821
    %1280 = vmatpush1.bf16.msra.mxu0 %v820
    %1281 = vmatprep.subr.bf16.mxu0 0
    %1282 = vmatpush1.bf16.msra.mxu0 0
    %1283 = vmatprep.subr.bf16.mxu0 0
    %1284 = vmatpush1.bf16.msra.mxu0 0
    %1285 = vmatprep.subr.bf16.mxu0 0
    %1286 = vmatpush1.bf16.msra.mxu0 0
    %1287 = vmatprep.subr.bf16.mxu0 0
    %1288 = vmatpush1.bf16.msra.mxu0 0
    %1289 = vmatprep.subr.bf16.mxu0 0
    %1290 = vmatpush1.bf16.msra.mxu0 0
    %1291 = vmatprep.subr.bf16.mxu0 0
    %1292 = vmatpush1.bf16.msra.mxu0 0
    %1293 = vmatprep.subr.bf16.mxu0 0
    %1294 = vmatpush1.bf16.msra.mxu0 0
    %1295 = vmatprep.subr.bf16.mxu0 0
    %1296 = vmatpush1.bf16.msra.mxu0 0
    %1297 = vmatprep.mubr.bf16.mxu0 0
    %1298 = vmatmul.mubr.bf16.gmra.mrb[0].mxu0 %v1264
    %v1299 = vpop.f32.mrb[0].mxu0
    %v1300 = vadd.f32 0.0, %v1299
    %v1301 = vpop.f32.mrb[0].mxu0
    %v1302 = vadd.f32 0.0, %v1301
    %v1303 = vpop.f32.mrb[0].mxu0
    %v1304 = vpop.f32.mrb[0].mxu0
    %1305 = vdwg.mxu0
    %1306 = vmatprep.subr.bf16.mxu0 0
    %1307 = vmatpush1.bf16.msra.mxu0 %v801
    %1308 = vmatprep.subr.bf16.mxu0 0
    %1309 = vmatpush1.bf16.msra.mxu0 %v804
    %1310 = vmatprep.subr.bf16.mxu0 0
    %1311 = vmatpush1.bf16.msra.mxu0 %v807
    %1312 = vmatprep.subr.bf16.mxu0 0
    %1313 = vmatpush1.bf16.msra.mxu0 %v810
    %1314 = vmatprep.subr.bf16.mxu0 0
    %1315 = vmatpush1.bf16.msra.mxu0 %v813
    %1316 = vmatprep.subr.bf16.mxu0 0
    %1317 = vmatpush1.bf16.msra.mxu0 %v816
    %1318 = vmatprep.subr.bf16.mxu0 0
    %1319 = vmatpush1.bf16.msra.mxu0 %v819
    %1320 = vmatprep.subr.bf16.mxu0 0
    %1321 = vmatpush1.bf16.msra.mxu0 %v822
    %1322 = vmatprep.subr.bf16.mxu0 0
    %1323 = vmatpush1.bf16.msra.mxu0 0
    %1324 = vmatprep.subr.bf16.mxu0 0
    %1325 = vmatpush1.bf16.msra.mxu0 0
    %1326 = vmatprep.subr.bf16.mxu0 0
    %1327 = vmatpush1.bf16.msra.mxu0 0
    %1328 = vmatprep.subr.bf16.mxu0 0
    %1329 = vmatpush1.bf16.msra.mxu0 0
    %1330 = vmatprep.subr.bf16.mxu0 0
    %1331 = vmatpush1.bf16.msra.mxu0 0
    %1332 = vmatprep.subr.bf16.mxu0 0
    %1333 = vmatpush1.bf16.msra.mxu0 0
    %1334 = vmatprep.subr.bf16.mxu0 0
    %1335 = vmatpush1.bf16.msra.mxu0 0
    %1336 = vmatprep.subr.bf16.mxu0 0
    %1337 = vmatpush1.bf16.msra.mxu0 0
    %1338 = vmatprep.mubr.bf16.mxu0 0
    %1339 = vmatmul.mubr.bf16.gmra.mrb[0].mxu0 %v1264
    %v1340 = vpop.f32.mrb[0].mxu0
    %v1341 = vadd.f32 0.0, %v1340
    %v1342 = vpop.f32.mrb[0].mxu0
    %v1343 = vpop.f32.mrb[0].mxu0
    %v1344 = vpop.f32.mrb[0].mxu0
    %1345 = vdwg.mxu0
    %v1346 = vadd.f32 %v332, %v1300
    %v1347 = vxor.u32 %v1346, 2147483648
    %v1348 = vmul.f32 %v1347, 1.442695
    %v1349 = vpow.pop %v1348
    %v1350 = vadd.f32 %v1349, 1.0
    %v1351 = vrcp.pop %v1350
    %v1352 = vmul.f32 1.0, %v1351
    %v1353 = vadd.f32 %v403, %v1302
    %v1354 = vxor.u32 %v1353, 2147483648
    %v1355 = vmul.f32 %v1354, 1.442695
    %v1356 = vpow.pop %v1355
    %v1357 = vadd.f32 %v1356, 1.0
    %v1358 = vrcp.pop %v1357
    %v1359 = vmul.f32 1.0, %v1358
    %v1360 = vadd.f32 %v1341, %v946
    %v1361 = vmul.f32 %v1352, %v1360
    %v1362 = vadd.f32 %v405, %v1361
    %v1363 = vtanh.pop %v1362
    %v1364 = vsub.f32 %v1160, %v1363
    %v1365 = vmul.f32 %v1359, %v1364
    %v1366 = vadd.f32 %v1363, %v1365
    %v1367 = vpack.c.bf16 %v1263, %v1263
    %1368 = vmatprep.subr.bf16.mxu0 %v564
    %1369 = vmatpush1.bf16.msra.mxu0 %v563
    %1370 = vmatprep.subr.bf16.mxu0 %v567
    %1371 = vmatpush1.bf16.msra.mxu0 %v566
    %1372 = vmatprep.subr.bf16.mxu0 %v570
    %1373 = vmatpush1.bf16.msra.mxu0 %v569
    %1374 = vmatprep.subr.bf16.mxu0 %v573
    %1375 = vmatpush1.bf16.msra.mxu0 %v572
    %1376 = vmatprep.subr.bf16.mxu0 %v576
    %1377 = vmatpush1.bf16.msra.mxu0 %v575
    %1378 = vmatprep.subr.bf16.mxu0 %v579
    %1379 = vmatpush1.bf16.msra.mxu0 %v578
    %1380 = vmatprep.subr.bf16.mxu0 %v582
    %1381 = vmatpush1.bf16.msra.mxu0 %v581
    %1382 = vmatprep.subr.bf16.mxu0 %v585
    %1383 = vmatpush1.bf16.msra.mxu0 %v584
    %1384 = vmatprep.subr.bf16.mxu0 0
    %1385 = vmatpush1.bf16.msra.mxu0 0
    %1386 = vmatprep.subr.bf16.mxu0 0
    %1387 = vmatpush1.bf16.msra.mxu0 0
    %1388 = vmatprep.subr.bf16.mxu0 0
    %1389 = vmatpush1.bf16.msra.mxu0 0
    %1390 = vmatprep.subr.bf16.mxu0 0
    %1391 = vmatpush1.bf16.msra.mxu0 0
    %1392 = vmatprep.subr.bf16.mxu0 0
    %1393 = vmatpush1.bf16.msra.mxu0 0
    %1394 = vmatprep.subr.bf16.mxu0 0
    %1395 = vmatpush1.bf16.msra.mxu0 0
    %1396 = vmatprep.subr.bf16.mxu0 0
    %1397 = vmatpush1.bf16.msra.mxu0 0
    %1398 = vmatprep.subr.bf16.mxu0 0
    %1399 = vmatpush1.bf16.msra.mxu0 0
    %1400 = vmatprep.mubr.bf16.mxu0 0
    %1401 = vmatmul.mubr.bf16.gmra.mrb[0].mxu0 %v1367
    %v1402 = vpop.f32.mrb[0].mxu0
    %v1403 = vadd.f32 0.0, %v1402
    %v1404 = vpop.f32.mrb[0].mxu0
    %v1405 = vadd.f32 0.0, %v1404
    %v1406 = vpop.f32.mrb[0].mxu0
    %v1407 = vpop.f32.mrb[0].mxu0
    %1408 = vdwg.mxu0
    %1409 = vmatprep.subr.bf16.mxu0 0
    %1410 = vmatpush1.bf16.msra.mxu0 %v565
    %1411 = vmatprep.subr.bf16.mxu0 0
    %1412 = vmatpush1.bf16.msra.mxu0 %v568
    %1413 = vmatprep.subr.bf16.mxu0 0
    %1414 = vmatpush1.bf16.msra.mxu0 %v571
    %1415 = vmatprep.subr.bf16.mxu0 0
    %1416 = vmatpush1.bf16.msra.mxu0 %v574
    %1417 = vmatprep.subr.bf16.mxu0 0
    %1418 = vmatpush1.bf16.msra.mxu0 %v577
    %1419 = vmatprep.subr.bf16.mxu0 0
    %1420 = vmatpush1.bf16.msra.mxu0 %v580
    %1421 = vmatprep.subr.bf16.mxu0 0
    %1422 = vmatpush1.bf16.msra.mxu0 %v583
    %1423 = vmatprep.subr.bf16.mxu0 0
    %1424 = vmatpush1.bf16.msra.mxu0 %v586
    %1425 = vmatprep.subr.bf16.mxu0 0
    %1426 = vmatpush1.bf16.msra.mxu0 0
    %1427 = vmatprep.subr.bf16.mxu0 0
    %1428 = vmatpush1.bf16.msra.mxu0 0
    %1429 = vmatprep.subr.bf16.mxu0 0
    %1430 = vmatpush1.bf16.msra.mxu0 0
    %1431 = vmatprep.subr.bf16.mxu0 0
    %1432 = vmatpush1.bf16.msra.mxu0 0
    %1433 = vmatprep.subr.bf16.mxu0 0
    %1434 = vmatpush1.bf16.msra.mxu0 0
    %1435 = vmatprep.subr.bf16.mxu0 0
    %1436 = vmatpush1.bf16.msra.mxu0 0
    %1437 = vmatprep.subr.bf16.mxu0 0
    %1438 = vmatpush1.bf16.msra.mxu0 0
    %1439 = vmatprep.subr.bf16.mxu0 0
    %1440 = vmatpush1.bf16.msra.mxu0 0
    %1441 = vmatprep.mubr.bf16.mxu0 0
    %1442 = vmatmul.mubr.bf16.gmra.mrb[0].mxu0 %v1367
    %v1443 = vpop.f32.mrb[0].mxu0
    %v1444 = vadd.f32 0.0, %v1443
    %v1445 = vpop.f32.mrb[0].mxu0
    %v1446 = vpop.f32.mrb[0].mxu0
    %v1447 = vpop.f32.mrb[0].mxu0
    %1448 = vdwg.mxu0
    %v1449 = vadd.f32 %v247, %v1403
    %v1450 = vxor.u32 %v1449, 2147483648
    %v1451 = vmul.f32 %v1450, 1.442695
    %v1452 = vpow.pop %v1451
    %v1453 = vadd.f32 %v1452, 1.0
    %v1454 = vrcp.pop %v1453
    %v1455 = vmul.f32 1.0, %v1454
    %v1456 = vadd.f32 %v249, %v1405
    %v1457 = vxor.u32 %v1456, 2147483648
    %v1458 = vmul.f32 %v1457, 1.442695
    %v1459 = vpow.pop %v1458
    %v1460 = vadd.f32 %v1459, 1.0
    %v1461 = vrcp.pop %v1460
    %v1462 = vmul.f32 1.0, %v1461
    %v1463 = vadd.f32 %v1444, %v710
    %v1464 = vmul.f32 %v1455, %v1463
    %v1465 = vadd.f32 %v320, %v1464
    %v1466 = vtanh.pop %v1465
    %v1467 = vsub.f32 %v1263, %v1466
    %v1468 = vmul.f32 %v1462, %v1467
    %v1469 = vadd.f32 %v1466, %v1468
    %v1470 = vpack.c.bf16 %v1366, %v1366
    %1471 = vmatprep.subr.bf16.mxu0 %v800
    %1472 = vmatpush1.bf16.msra.mxu0 %v799
    %1473 = vmatprep.subr.bf16.mxu0 %v803
    %1474 = vmatpush1.bf16.msra.mxu0 %v802
    %1475 = vmatprep.subr.bf16.mxu0 %v806
    %1476 = vmatpush1.bf16.msra.mxu0 %v805
    %1477 = vmatprep.subr.bf16.mxu0 %v809
    %1478 = vmatpush1.bf16.msra.mxu0 %v808
    %1479 = vmatprep.subr.bf16.mxu0 %v812
    %1480 = vmatpush1.bf16.msra.mxu0 %v811
    %1481 = vmatprep.subr.bf16.mxu0 %v815
    %1482 = vmatpush1.bf16.msra.mxu0 %v814
    %1483 = vmatprep.subr.bf16.mxu0 %v818
    %1484 = vmatpush1.bf16.msra.mxu0 %v817
    %1485 = vmatprep.subr.bf16.mxu0 %v821
    %1486 = vmatpush1.bf16.msra.mxu0 %v820
    %1487 = vmatprep.subr.bf16.mxu0 0
    %1488 = vmatpush1.bf16.msra.mxu0 0
    %1489 = vmatprep.subr.bf16.mxu0 0
    %1490 = vmatpush1.bf16.msra.mxu0 0
    %1491 = vmatprep.subr.bf16.mxu0 0
    %1492 = vmatpush1.bf16.msra.mxu0 0
    %1493 = vmatprep.subr.bf16.mxu0 0
    %1494 = vmatpush1.bf16.msra.mxu0 0
    %1495 = vmatprep.subr.bf16.mxu0 0
    %1496 = vmatpush1.bf16.msra.mxu0 0
    %1497 = vmatprep.subr.bf16.mxu0 0
    %1498 = vmatpush1.bf16.msra.mxu0 0
    %1499 = vmatprep.subr.bf16.mxu0 0
    %1500 = vmatpush1.bf16.msra.mxu0 0
    %1501 = vmatprep.subr.bf16.mxu0 0
    %1502 = vmatpush1.bf16.msra.mxu0 0
    %1503 = vmatprep.mubr.bf16.mxu0 0
    %1504 = vmatmul.mubr.bf16.gmra.mrb[0].mxu0 %v1470
    %v1505 = vpop.f32.mrb[0].mxu0
    %v1506 = vadd.f32 0.0, %v1505
    %v1507 = vpop.f32.mrb[0].mxu0
    %v1508 = vadd.f32 0.0, %v1507
    %v1509 = vpop.f32.mrb[0].mxu0
    %v1510 = vpop.f32.mrb[0].mxu0
    %1511 = vdwg.mxu0
    %1512 = vmatprep.subr.bf16.mxu0 0
    %1513 = vmatpush1.bf16.msra.mxu0 %v801
    %1514 = vmatprep.subr.bf16.mxu0 0
    %1515 = vmatpush1.bf16.msra.mxu0 %v804
    %1516 = vmatprep.subr.bf16.mxu0 0
    %1517 = vmatpush1.bf16.msra.mxu0 %v807
    %1518 = vmatprep.subr.bf16.mxu0 0
    %1519 = vmatpush1.bf16.msra.mxu0 %v810
    %1520 = vmatprep.subr.bf16.mxu0 0
    %1521 = vmatpush1.bf16.msra.mxu0 %v813
    %1522 = vmatprep.subr.bf16.mxu0 0
    %1523 = vmatpush1.bf16.msra.mxu0 %v816
    %1524 = vmatprep.subr.bf16.mxu0 0
    %1525 = vmatpush1.bf16.msra.mxu0 %v819
    %1526 = vmatprep.subr.bf16.mxu0 0
    %1527 = vmatpush1.bf16.msra.mxu0 %v822
    %1528 = vmatprep.subr.bf16.mxu0 0
    %1529 = vmatpush1.bf16.msra.mxu0 0
    %1530 = vmatprep.subr.bf16.mxu0 0
    %1531 = vmatpush1.bf16.msra.mxu0 0
    %1532 = vmatprep.subr.bf16.mxu0 0
    %1533 = vmatpush1.bf16.msra.mxu0 0
    %1534 = vmatprep.subr.bf16.mxu0 0
    %1535 = vmatpush1.bf16.msra.mxu0 0
    %1536 = vmatprep.subr.bf16.mxu0 0
    %1537 = vmatpush1.bf16.msra.mxu0 0
    %1538 = vmatprep.subr.bf16.mxu0 0
    %1539 = vmatpush1.bf16.msra.mxu0 0
    %1540 = vmatprep.subr.bf16.mxu0 0
    %1541 = vmatpush1.bf16.msra.mxu0 0
    %1542 = vmatprep.subr.bf16.mxu0 0
    %1543 = vmatpush1.bf16.msra.mxu0 0
    %1544 = vmatprep.mubr.bf16.mxu0 0
    %1545 = vmatmul.mubr.bf16.gmra.mrb[0].mxu0 %v1470
    %v1546 = vpop.f32.mrb[0].mxu0
    %v1547 = vadd.f32 0.0, %v1546
    %v1548 = vpop.f32.mrb[0].mxu0
    %v1549 = vpop.f32.mrb[0].mxu0
    %v1550 = vpop.f32.mrb[0].mxu0
    %1551 = vdwg.mxu0
    %v1552 = vadd.f32 %v328, %v1506
    %v1553 = vxor.u32 %v1552, 2147483648
    %v1554 = vmul.f32 %v1553, 1.442695
    %v1555 = vpow.pop %v1554
    %v1556 = vadd.f32 %v1555, 1.0
    %v1557 = vrcp.pop %v1556
    %v1558 = vmul.f32 1.0, %v1557
    %v1559 = vadd.f32 %v399, %v1508
    %v1560 = vxor.u32 %v1559, 2147483648
    %v1561 = vmul.f32 %v1560, 1.442695
    %v1562 = vpow.pop %v1561
    %v1563 = vadd.f32 %v1562, 1.0
    %v1564 = vrcp.pop %v1563
    %v1565 = vmul.f32 1.0, %v1564
    %v1566 = vadd.f32 %v1547, %v946
    %v1567 = vmul.f32 %v1558, %v1566
    %v1568 = vadd.f32 %v401, %v1567
    %v1569 = vtanh.pop %v1568
    %v1570 = vsub.f32 %v1366, %v1569
    %v1571 = vmul.f32 %v1565, %v1570
    %v1572 = vadd.f32 %v1569, %v1571
    %v1573 = vpack.c.bf16 %v1469, %v1469
    %1574 = vmatprep.subr.bf16.mxu0 %v564
    %1575 = vmatpush1.bf16.msra.mxu0 %v563
    %1576 = vmatprep.subr.bf16.mxu0 %v567
    %1577 = vmatpush1.bf16.msra.mxu0 %v566
    %1578 = vmatprep.subr.bf16.mxu0 %v570
    %1579 = vmatpush1.bf16.msra.mxu0 %v569
    %1580 = vmatprep.subr.bf16.mxu0 %v573
    %1581 = vmatpush1.bf16.msra.mxu0 %v572
    %1582 = vmatprep.subr.bf16.mxu0 %v576
    %1583 = vmatpush1.bf16.msra.mxu0 %v575
    %1584 = vmatprep.subr.bf16.mxu0 %v579
    %1585 = vmatpush1.bf16.msra.mxu0 %v578
    %1586 = vmatprep.subr.bf16.mxu0 %v582
    %1587 = vmatpush1.bf16.msra.mxu0 %v581
    %1588 = vmatprep.subr.bf16.mxu0 %v585
    %1589 = vmatpush1.bf16.msra.mxu0 %v584
    %1590 = vmatprep.subr.bf16.mxu0 0
    %1591 = vmatpush1.bf16.msra.mxu0 0
    %1592 = vmatprep.subr.bf16.mxu0 0
    %1593 = vmatpush1.bf16.msra.mxu0 0
    %1594 = vmatprep.subr.bf16.mxu0 0
    %1595 = vmatpush1.bf16.msra.mxu0 0
    %1596 = vmatprep.subr.bf16.mxu0 0
    %1597 = vmatpush1.bf16.msra.mxu0 0
    %1598 = vmatprep.subr.bf16.mxu0 0
    %1599 = vmatpush1.bf16.msra.mxu0 0
    %1600 = vmatprep.subr.bf16.mxu0 0
    %1601 = vmatpush1.bf16.msra.mxu0 0
    %1602 = vmatprep.subr.bf16.mxu0 0
    %1603 = vmatpush1.bf16.msra.mxu0 0
    %1604 = vmatprep.subr.bf16.mxu0 0
    %1605 = vmatpush1.bf16.msra.mxu0 0
    %1606 = vmatprep.mubr.bf16.mxu0 0
    %1607 = vmatmul.mubr.bf16.gmra.mrb[0].mxu0 %v1573
    %v1608 = vpop.f32.mrb[0].mxu0
    %v1609 = vadd.f32 0.0, %v1608
    %v1610 = vpop.f32.mrb[0].mxu0
    %v1611 = vadd.f32 0.0, %v1610
    %v1612 = vpop.f32.mrb[0].mxu0
    %v1613 = vpop.f32.mrb[0].mxu0
    %1614 = vdwg.mxu0
    %1615 = vmatprep.subr.bf16.mxu0 0
    %1616 = vmatpush1.bf16.msra.mxu0 %v565
    %1617 = vmatprep.subr.bf16.mxu0 0
    %1618 = vmatpush1.bf16.msra.mxu0 %v568
    %1619 = vmatprep.subr.bf16.mxu0 0
    %1620 = vmatpush1.bf16.msra.mxu0 %v571
    %1621 = vmatprep.subr.bf16.mxu0 0
    %1622 = vmatpush1.bf16.msra.mxu0 %v574
    %1623 = vmatprep.subr.bf16.mxu0 0
    %1624 = vmatpush1.bf16.msra.mxu0 %v577
    %1625 = vmatprep.subr.bf16.mxu0 0
    %1626 = vmatpush1.bf16.msra.mxu0 %v580
    %1627 = vmatprep.subr.bf16.mxu0 0
    %1628 = vmatpush1.bf16.msra.mxu0 %v583
    %1629 = vmatprep.subr.bf16.mxu0 0
    %1630 = vmatpush1.bf16.msra.mxu0 %v586
    %1631 = vmatprep.subr.bf16.mxu0 0
    %1632 = vmatpush1.bf16.msra.mxu0 0
    %1633 = vmatprep.subr.bf16.mxu0 0
    %1634 = vmatpush1.bf16.msra.mxu0 0
    %1635 = vmatprep.subr.bf16.mxu0 0
    %1636 = vmatpush1.bf16.msra.mxu0 0
    %1637 = vmatprep.subr.bf16.mxu0 0
    %1638 = vmatpush1.bf16.msra.mxu0 0
    %1639 = vmatprep.subr.bf16.mxu0 0
    %1640 = vmatpush1.bf16.msra.mxu0 0
    %1641 = vmatprep.subr.bf16.mxu0 0
    %1642 = vmatpush1.bf16.msra.mxu0 0
    %1643 = vmatprep.subr.bf16.mxu0 0
    %1644 = vmatpush1.bf16.msra.mxu0 0
    %1645 = vmatprep.subr.bf16.mxu0 0
    %1646 = vmatpush1.bf16.msra.mxu0 0
    %1647 = vmatprep.mubr.bf16.mxu0 0
    %1648 = vmatmul.mubr.bf16.gmra.mrb[0].mxu0 %v1573
    %v1649 = vpop.f32.mrb[0].mxu0
    %v1650 = vadd.f32 0.0, %v1649
    %v1651 = vpop.f32.mrb[0].mxu0
    %v1652 = vpop.f32.mrb[0].mxu0
    %v1653 = vpop.f32.mrb[0].mxu0
    %1654 = vdwg.mxu0
    %v1655 = vadd.f32 %v253, %v1609
    %v1656 = vxor.u32 %v1655, 2147483648
    %v1657 = vmul.f32 %v1656, 1.442695
    %v1658 = vpow.pop %v1657
    %v1659 = vadd.f32 %v1658, 1.0
    %v1660 = vrcp.pop %v1659
    %v1661 = vmul.f32 1.0, %v1660
    %v1662 = vadd.f32 %v255, %v1611
    %v1663 = vxor.u32 %v1662, 2147483648
    %v1664 = vmul.f32 %v1663, 1.442695
    %v1665 = vpow.pop %v1664
    %v1666 = vadd.f32 %v1665, 1.0
    %v1667 = vrcp.pop %v1666
    %v1668 = vmul.f32 1.0, %v1667
    %v1669 = vadd.f32 %v1650, %v710
    %v1670 = vmul.f32 %v1661, %v1669
    %v1671 = vadd.f32 %v326, %v1670
    %v1672 = vtanh.pop %v1671
    %v1673 = vsub.f32 %v1469, %v1672
    %v1674 = vmul.f32 %v1668, %v1673
    %v1675 = vadd.f32 %v1672, %v1674
    %v1676 = vpack.c.bf16 %v1572, %v1572
    %1677 = vmatprep.subr.bf16.mxu0 %v800
    %1678 = vmatpush1.bf16.msra.mxu0 %v799
    %1679 = vmatprep.subr.bf16.mxu0 %v803
    %1680 = vmatpush1.bf16.msra.mxu0 %v802
    %1681 = vmatprep.subr.bf16.mxu0 %v806
    %1682 = vmatpush1.bf16.msra.mxu0 %v805
    %1683 = vmatprep.subr.bf16.mxu0 %v809
    %1684 = vmatpush1.bf16.msra.mxu0 %v808
    %1685 = vmatprep.subr.bf16.mxu0 %v812
    %1686 = vmatpush1.bf16.msra.mxu0 %v811
    %1687 = vmatprep.subr.bf16.mxu0 %v815
    %1688 = vmatpush1.bf16.msra.mxu0 %v814
    %1689 = vmatprep.subr.bf16.mxu0 %v818
    %1690 = vmatpush1.bf16.msra.mxu0 %v817
    %1691 = vmatprep.subr.bf16.mxu0 %v821
    %1692 = vmatpush1.bf16.msra.mxu0 %v820
    %1693 = vmatprep.subr.bf16.mxu0 0
    %1694 = vmatpush1.bf16.msra.mxu0 0
    %1695 = vmatprep.subr.bf16.mxu0 0
    %1696 = vmatpush1.bf16.msra.mxu0 0
    %1697 = vmatprep.subr.bf16.mxu0 0
    %1698 = vmatpush1.bf16.msra.mxu0 0
    %1699 = vmatprep.subr.bf16.mxu0 0
    %1700 = vmatpush1.bf16.msra.mxu0 0
    %1701 = vmatprep.subr.bf16.mxu0 0
    %1702 = vmatpush1.bf16.msra.mxu0 0
    %1703 = vmatprep.subr.bf16.mxu0 0
    %1704 = vmatpush1.bf16.msra.mxu0 0
    %1705 = vmatprep.subr.bf16.mxu0 0
    %1706 = vmatpush1.bf16.msra.mxu0 0
    %1707 = vmatprep.subr.bf16.mxu0 0
    %1708 = vmatpush1.bf16.msra.mxu0 0
    %1709 = vmatprep.mubr.bf16.mxu0 0
    %1710 = vmatmul.mubr.bf16.gmra.mrb[0].mxu0 %v1676
    %v1711 = vpop.f32.mrb[0].mxu0
    %v1712 = vadd.f32 0.0, %v1711
    %v1713 = vpop.f32.mrb[0].mxu0
    %v1714 = vadd.f32 0.0, %v1713
    %v1715 = vpop.f32.mrb[0].mxu0
    %v1716 = vpop.f32.mrb[0].mxu0
    %1717 = vdwg.mxu0
    %1718 = vmatprep.subr.bf16.mxu0 0
    %1719 = vmatpush1.bf16.msra.mxu0 %v801
    %1720 = vmatprep.subr.bf16.mxu0 0
    %1721 = vmatpush1.bf16.msra.mxu0 %v804
    %1722 = vmatprep.subr.bf16.mxu0 0
    %1723 = vmatpush1.bf16.msra.mxu0 %v807
    %1724 = vmatprep.subr.bf16.mxu0 0
    %1725 = vmatpush1.bf16.msra.mxu0 %v810
    %1726 = vmatprep.subr.bf16.mxu0 0
    %1727 = vmatpush1.bf16.msra.mxu0 %v813
    %1728 = vmatprep.subr.bf16.mxu0 0
    %1729 = vmatpush1.bf16.msra.mxu0 %v816
    %1730 = vmatprep.subr.bf16.mxu0 0
    %1731 = vmatpush1.bf16.msra.mxu0 %v819
    %1732 = vmatprep.subr.bf16.mxu0 0
    %1733 = vmatpush1.bf16.msra.mxu0 %v822
    %1734 = vmatprep.subr.bf16.mxu0 0
    %1735 = vmatpush1.bf16.msra.mxu0 0
    %1736 = vmatprep.subr.bf16.mxu0 0
    %1737 = vmatpush1.bf16.msra.mxu0 0
    %1738 = vmatprep.subr.bf16.mxu0 0
    %1739 = vmatpush1.bf16.msra.mxu0 0
    %1740 = vmatprep.subr.bf16.mxu0 0
    %1741 = vmatpush1.bf16.msra.mxu0 0
    %1742 = vmatprep.subr.bf16.mxu0 0
    %1743 = vmatpush1.bf16.msra.mxu0 0
    %1744 = vmatprep.subr.bf16.mxu0 0
    %1745 = vmatpush1.bf16.msra.mxu0 0
    %1746 = vmatprep.subr.bf16.mxu0 0
    %1747 = vmatpush1.bf16.msra.mxu0 0
    %1748 = vmatprep.subr.bf16.mxu0 0
    %1749 = vmatpush1.bf16.msra.mxu0 0
    %1750 = vmatprep.mubr.bf16.mxu0 0
    %1751 = vmatmul.mubr.bf16.gmra.mrb[0].mxu0 %v1676
    %v1752 = vpop.f32.mrb[0].mxu0
    %v1753 = vadd.f32 0.0, %v1752
    %v1754 = vpop.f32.mrb[0].mxu0
    %v1755 = vpop.f32.mrb[0].mxu0
    %v1756 = vpop.f32.mrb[0].mxu0
    %1757 = vdwg.mxu0
    %v1758 = vadd.f32 %v322, %v1712
    %v1759 = vxor.u32 %v1758, 2147483648
    %v1760 = vmul.f32 %v1759, 1.442695
    %v1761 = vpow.pop %v1760
    %v1762 = vadd.f32 %v1761, 1.0
    %v1763 = vrcp.pop %v1762
    %v1764 = vmul.f32 1.0, %v1763
    %v1765 = vadd.f32 %v393, %v1714
    %v1766 = vxor.u32 %v1765, 2147483648
    %v1767 = vmul.f32 %v1766, 1.442695
    %v1768 = vpow.pop %v1767
    %v1769 = vadd.f32 %v1768, 1.0
    %v1770 = vrcp.pop %v1769
    %v1771 = vmul.f32 1.0, %v1770
    %v1772 = vadd.f32 %v1753, %v946
    %v1773 = vmul.f32 %v1764, %v1772
    %v1774 = vadd.f32 %v395, %v1773
    %v1775 = vtanh.pop %v1774
    %v1776 = vsub.f32 %v1572, %v1775
    %v1777 = vmul.f32 %v1771, %v1776
    %v1778 = vadd.f32 %v1775, %v1777
    %v1779 = vpack.c.bf16 %v1675, %v1675
    %1780 = vmatprep.subr.bf16.mxu0 %v564
    %1781 = vmatpush1.bf16.msra.mxu0 %v563
    %1782 = vmatprep.subr.bf16.mxu0 %v567
    %1783 = vmatpush1.bf16.msra.mxu0 %v566
    %1784 = vmatprep.subr.bf16.mxu0 %v570
    %1785 = vmatpush1.bf16.msra.mxu0 %v569
    %1786 = vmatprep.subr.bf16.mxu0 %v573
    %1787 = vmatpush1.bf16.msra.mxu0 %v572
    %1788 = vmatprep.subr.bf16.mxu0 %v576
    %1789 = vmatpush1.bf16.msra.mxu0 %v575
    %1790 = vmatprep.subr.bf16.mxu0 %v579
    %1791 = vmatpush1.bf16.msra.mxu0 %v578
    %1792 = vmatprep.subr.bf16.mxu0 %v582
    %1793 = vmatpush1.bf16.msra.mxu0 %v581
    %1794 = vmatprep.subr.bf16.mxu0 %v585
    %1795 = vmatpush1.bf16.msra.mxu0 %v584
    %1796 = vmatprep.subr.bf16.mxu0 0
    %1797 = vmatpush1.bf16.msra.mxu0 0
    %1798 = vmatprep.subr.bf16.mxu0 0
    %1799 = vmatpush1.bf16.msra.mxu0 0
    %1800 = vmatprep.subr.bf16.mxu0 0
    %1801 = vmatpush1.bf16.msra.mxu0 0
    %1802 = vmatprep.subr.bf16.mxu0 0
    %1803 = vmatpush1.bf16.msra.mxu0 0
    %1804 = vmatprep.subr.bf16.mxu0 0
    %1805 = vmatpush1.bf16.msra.mxu0 0
    %1806 = vmatprep.subr.bf16.mxu0 0
    %1807 = vmatpush1.bf16.msra.mxu0 0
    %1808 = vmatprep.subr.bf16.mxu0 0
    %1809 = vmatpush1.bf16.msra.mxu0 0
    %1810 = vmatprep.subr.bf16.mxu0 0
    %1811 = vmatpush1.bf16.msra.mxu0 0
    %1812 = vmatprep.mubr.bf16.mxu0 0
    %1813 = vmatmul.mubr.bf16.gmra.mrb[0].mxu0 %v1779
    %v1814 = vpop.f32.mrb[0].mxu0
    %v1815 = vadd.f32 0.0, %v1814
    %v1816 = vpop.f32.mrb[0].mxu0
    %v1817 = vadd.f32 0.0, %v1816
    %v1818 = vpop.f32.mrb[0].mxu0
    %v1819 = vpop.f32.mrb[0].mxu0
    %1820 = vdwg.mxu0
    %1821 = vmatprep.subr.bf16.mxu0 0
    %1822 = vmatpush1.bf16.msra.mxu0 %v565
    %1823 = vmatprep.subr.bf16.mxu0 0
    %1824 = vmatpush1.bf16.msra.mxu0 %v568
    %1825 = vmatprep.subr.bf16.mxu0 0
    %1826 = vmatpush1.bf16.msra.mxu0 %v571
    %1827 = vmatprep.subr.bf16.mxu0 0
    %1828 = vmatpush1.bf16.msra.mxu0 %v574
    %1829 = vmatprep.subr.bf16.mxu0 0
    %1830 = vmatpush1.bf16.msra.mxu0 %v577
    %1831 = vmatprep.subr.bf16.mxu0 0
    %1832 = vmatpush1.bf16.msra.mxu0 %v580
    %1833 = vmatprep.subr.bf16.mxu0 0
    %1834 = vmatpush1.bf16.msra.mxu0 %v583
    %1835 = vmatprep.subr.bf16.mxu0 0
    %1836 = vmatpush1.bf16.msra.mxu0 %v586
    %1837 = vmatprep.subr.bf16.mxu0 0
    %1838 = vmatpush1.bf16.msra.mxu0 0
    %1839 = vmatprep.subr.bf16.mxu0 0
    %1840 = vmatpush1.bf16.msra.mxu0 0
    %1841 = vmatprep.subr.bf16.mxu0 0
    %1842 = vmatpush1.bf16.msra.mxu0 0
    %1843 = vmatprep.subr.bf16.mxu0 0
    %1844 = vmatpush1.bf16.msra.mxu0 0
    %1845 = vmatprep.subr.bf16.mxu0 0
    %1846 = vmatpush1.bf16.msra.mxu0 0
    %1847 = vmatprep.subr.bf16.mxu0 0
    %1848 = vmatpush1.bf16.msra.mxu0 0
    %1849 = vmatprep.subr.bf16.mxu0 0
    %1850 = vmatpush1.bf16.msra.mxu0 0
    %1851 = vmatprep.subr.bf16.mxu0 0
    %1852 = vmatpush1.bf16.msra.mxu0 0
    %1853 = vmatprep.mubr.bf16.mxu0 0
    %1854 = vmatmul.mubr.bf16.gmra.mrb[0].mxu0 %v1779
    %v1855 = vpop.f32.mrb[0].mxu0
    %v1856 = vadd.f32 0.0, %v1855
    %v1857 = vpop.f32.mrb[0].mxu0
    %v1858 = vpop.f32.mrb[0].mxu0
    %v1859 = vpop.f32.mrb[0].mxu0
    %1860 = vdwg.mxu0
    %v1861 = vadd.f32 %v257, %v1815
    %v1862 = vxor.u32 %v1861, 2147483648
    %v1863 = vmul.f32 %v1862, 1.442695
    %v1864 = vpow.pop %v1863
    %v1865 = vadd.f32 %v1864, 1.0
    %v1866 = vrcp.pop %v1865
    %v1867 = vmul.f32 1.0, %v1866
    %v1868 = vadd.f32 %v259, %v1817
    %v1869 = vxor.u32 %v1868, 2147483648
    %v1870 = vmul.f32 %v1869, 1.442695
    %v1871 = vpow.pop %v1870
    %v1872 = vadd.f32 %v1871, 1.0
    %v1873 = vrcp.pop %v1872
    %v1874 = vmul.f32 1.0, %v1873
    %v1875 = vadd.f32 %v1856, %v710
    %v1876 = vmul.f32 %v1867, %v1875
    %v1877 = vadd.f32 %v330, %v1876
    %v1878 = vtanh.pop %v1877
    %v1879 = vsub.f32 %v1675, %v1878
    %v1880 = vmul.f32 %v1874, %v1879
    %v1881 = vadd.f32 %v1878, %v1880
    %v1882 = vpack.c.bf16 %v1778, %v1778
    %1883 = vmatprep.subr.bf16.mxu0 %v800
    %1884 = vmatpush1.bf16.msra.mxu0 %v799
    %1885 = vmatprep.subr.bf16.mxu0 %v803
    %1886 = vmatpush1.bf16.msra.mxu0 %v802
    %1887 = vmatprep.subr.bf16.mxu0 %v806
    %1888 = vmatpush1.bf16.msra.mxu0 %v805
    %1889 = vmatprep.subr.bf16.mxu0 %v809
    %1890 = vmatpush1.bf16.msra.mxu0 %v808
    %1891 = vmatprep.subr.bf16.mxu0 %v812
    %1892 = vmatpush1.bf16.msra.mxu0 %v811
    %1893 = vmatprep.subr.bf16.mxu0 %v815
    %1894 = vmatpush1.bf16.msra.mxu0 %v814
    %1895 = vmatprep.subr.bf16.mxu0 %v818
    %1896 = vmatpush1.bf16.msra.mxu0 %v817
    %1897 = vmatprep.subr.bf16.mxu0 %v821
    %1898 = vmatpush1.bf16.msra.mxu0 %v820
    %1899 = vmatprep.subr.bf16.mxu0 0
    %1900 = vmatpush1.bf16.msra.mxu0 0
    %1901 = vmatprep.subr.bf16.mxu0 0
    %1902 = vmatpush1.bf16.msra.mxu0 0
    %1903 = vmatprep.subr.bf16.mxu0 0
    %1904 = vmatpush1.bf16.msra.mxu0 0
    %1905 = vmatprep.subr.bf16.mxu0 0
    %1906 = vmatpush1.bf16.msra.mxu0 0
    %1907 = vmatprep.subr.bf16.mxu0 0
    %1908 = vmatpush1.bf16.msra.mxu0 0
    %1909 = vmatprep.subr.bf16.mxu0 0
    %1910 = vmatpush1.bf16.msra.mxu0 0
    %1911 = vmatprep.subr.bf16.mxu0 0
    %1912 = vmatpush1.bf16.msra.mxu0 0
    %1913 = vmatprep.subr.bf16.mxu0 0
    %1914 = vmatpush1.bf16.msra.mxu0 0
    %1915 = vmatprep.mubr.bf16.mxu0 0
    %1916 = vmatmul.mubr.bf16.gmra.mrb[0].mxu0 %v1882
    %v1917 = vpop.f32.mrb[0].mxu0
    %v1918 = vadd.f32 0.0, %v1917
    %v1919 = vpop.f32.mrb[0].mxu0
    %v1920 = vadd.f32 0.0, %v1919
    %v1921 = vpop.f32.mrb[0].mxu0
    %v1922 = vpop.f32.mrb[0].mxu0
    %1923 = vdwg.mxu0
    %1924 = vmatprep.subr.bf16.mxu0 0
    %1925 = vmatpush1.bf16.msra.mxu0 %v801
    %1926 = vmatprep.subr.bf16.mxu0 0
    %1927 = vmatpush1.bf16.msra.mxu0 %v804
    %1928 = vmatprep.subr.bf16.mxu0 0
    %1929 = vmatpush1.bf16.msra.mxu0 %v807
    %1930 = vmatprep.subr.bf16.mxu0 0
    %1931 = vmatpush1.bf16.msra.mxu0 %v810
    %1932 = vmatprep.subr.bf16.mxu0 0
    %1933 = vmatpush1.bf16.msra.mxu0 %v813
    %1934 = vmatprep.subr.bf16.mxu0 0
    %1935 = vmatpush1.bf16.msra.mxu0 %v816
    %1936 = vmatprep.subr.bf16.mxu0 0
    %1937 = vmatpush1.bf16.msra.mxu0 %v819
    %1938 = vmatprep.subr.bf16.mxu0 0
    %1939 = vmatpush1.bf16.msra.mxu0 %v822
    %1940 = vmatprep.subr.bf16.mxu0 0
    %1941 = vmatpush1.bf16.msra.mxu0 0
    %1942 = vmatprep.subr.bf16.mxu0 0
    %1943 = vmatpush1.bf16.msra.mxu0 0
    %1944 = vmatprep.subr.bf16.mxu0 0
    %1945 = vmatpush1.bf16.msra.mxu0 0
    %1946 = vmatprep.subr.bf16.mxu0 0
    %1947 = vmatpush1.bf16.msra.mxu0 0
    %1948 = vmatprep.subr.bf16.mxu0 0
    %1949 = vmatpush1.bf16.msra.mxu0 0
    %1950 = vmatprep.subr.bf16.mxu0 0
    %1951 = vmatpush1.bf16.msra.mxu0 0
    %1952 = vmatprep.subr.bf16.mxu0 0
    %1953 = vmatpush1.bf16.msra.mxu0 0
    %1954 = vmatprep.subr.bf16.mxu0 0
    %1955 = vmatpush1.bf16.msra.mxu0 0
    %1956 = vmatprep.mubr.bf16.mxu0 0
    %1957 = vmatmul.mubr.bf16.gmra.mrb[0].mxu0 %v1882
    %v1958 = vpop.f32.mrb[0].mxu0
    %v1959 = vadd.f32 0.0, %v1958
    %v1960 = vpop.f32.mrb[0].mxu0
    %v1961 = vpop.f32.mrb[0].mxu0
    %v1962 = vpop.f32.mrb[0].mxu0
    %1963 = vdwg.mxu0
    %v1964 = vadd.f32 %v318, %v1918
    %v1965 = vxor.u32 %v1964, 2147483648
    %v1966 = vmul.f32 %v1965, 1.442695
    %v1967 = vpow.pop %v1966
    %v1968 = vadd.f32 %v1967, 1.0
    %v1969 = vrcp.pop %v1968
    %v1970 = vmul.f32 1.0, %v1969
    %v1971 = vadd.f32 %v389, %v1920
    %v1972 = vxor.u32 %v1971, 2147483648
    %v1973 = vmul.f32 %v1972, 1.442695
    %v1974 = vpow.pop %v1973
    %v1975 = vadd.f32 %v1974, 1.0
    %v1976 = vrcp.pop %v1975
    %v1977 = vmul.f32 1.0, %v1976
    %v1978 = vadd.f32 %v1959, %v946
    %v1979 = vmul.f32 %v1970, %v1978
    %v1980 = vadd.f32 %v391, %v1979
    %v1981 = vtanh.pop %v1980
    %v1982 = vsub.f32 %v1778, %v1981
    %v1983 = vmul.f32 %v1977, %v1982
    %v1984 = vadd.f32 %v1981, %v1983
    %v1985 = vpack.c.bf16 %v1881, %v1881
    %1986 = vmatprep.subr.bf16.mxu0 %v564
    %1987 = vmatpush1.bf16.msra.mxu0 %v563
    %1988 = vmatprep.subr.bf16.mxu0 %v567
    %1989 = vmatpush1.bf16.msra.mxu0 %v566
    %1990 = vmatprep.subr.bf16.mxu0 %v570
    %1991 = vmatpush1.bf16.msra.mxu0 %v569
    %1992 = vmatprep.subr.bf16.mxu0 %v573
    %1993 = vmatpush1.bf16.msra.mxu0 %v572
    %1994 = vmatprep.subr.bf16.mxu0 %v576
    %1995 = vmatpush1.bf16.msra.mxu0 %v575
    %1996 = vmatprep.subr.bf16.mxu0 %v579
    %1997 = vmatpush1.bf16.msra.mxu0 %v578
    %1998 = vmatprep.subr.bf16.mxu0 %v582
    %1999 = vmatpush1.bf16.msra.mxu0 %v581
    %2000 = vmatprep.subr.bf16.mxu0 %v585
    %2001 = vmatpush1.bf16.msra.mxu0 %v584
    %2002 = vmatprep.subr.bf16.mxu0 0
    %2003 = vmatpush1.bf16.msra.mxu0 0
    %2004 = vmatprep.subr.bf16.mxu0 0
    %2005 = vmatpush1.bf16.msra.mxu0 0
    %2006 = vmatprep.subr.bf16.mxu0 0
    %2007 = vmatpush1.bf16.msra.mxu0 0
    %2008 = vmatprep.subr.bf16.mxu0 0
    %2009 = vmatpush1.bf16.msra.mxu0 0
    %2010 = vmatprep.subr.bf16.mxu0 0
    %2011 = vmatpush1.bf16.msra.mxu0 0
    %2012 = vmatprep.subr.bf16.mxu0 0
    %2013 = vmatpush1.bf16.msra.mxu0 0
    %2014 = vmatprep.subr.bf16.mxu0 0
    %2015 = vmatpush1.bf16.msra.mxu0 0
    %2016 = vmatprep.subr.bf16.mxu0 0
    %2017 = vmatpush1.bf16.msra.mxu0 0
    %2018 = vmatprep.mubr.bf16.mxu0 0
    %2019 = vmatmul.mubr.bf16.gmra.mrb[0].mxu0 %v1985
    %v2020 = vpop.f32.mrb[0].mxu0
    %v2021 = vadd.f32 0.0, %v2020
    %v2022 = vpop.f32.mrb[0].mxu0
    %v2023 = vadd.f32 0.0, %v2022
    %v2024 = vpop.f32.mrb[0].mxu0
    %v2025 = vpop.f32.mrb[0].mxu0
    %2026 = vdwg.mxu0
    %2027 = vmatprep.subr.bf16.mxu0 0
    %2028 = vmatpush1.bf16.msra.mxu0 %v565
    %2029 = vmatprep.subr.bf16.mxu0 0
    %2030 = vmatpush1.bf16.msra.mxu0 %v568
    %2031 = vmatprep.subr.bf16.mxu0 0
    %2032 = vmatpush1.bf16.msra.mxu0 %v571
    %2033 = vmatprep.subr.bf16.mxu0 0
    %2034 = vmatpush1.bf16.msra.mxu0 %v574
    %2035 = vmatprep.subr.bf16.mxu0 0
    %2036 = vmatpush1.bf16.msra.mxu0 %v577
    %2037 = vmatprep.subr.bf16.mxu0 0
    %2038 = vmatpush1.bf16.msra.mxu0 %v580
    %2039 = vmatprep.subr.bf16.mxu0 0
    %2040 = vmatpush1.bf16.msra.mxu0 %v583
    %2041 = vmatprep.subr.bf16.mxu0 0
    %2042 = vmatpush1.bf16.msra.mxu0 %v586
    %2043 = vmatprep.subr.bf16.mxu0 0
    %2044 = vmatpush1.bf16.msra.mxu0 0
    %2045 = vmatprep.subr.bf16.mxu0 0
    %2046 = vmatpush1.bf16.msra.mxu0 0
    %2047 = vmatprep.subr.bf16.mxu0 0
    %2048 = vmatpush1.bf16.msra.mxu0 0
    %2049 = vmatprep.subr.bf16.mxu0 0
    %2050 = vmatpush1.bf16.msra.mxu0 0
    %2051 = vmatprep.subr.bf16.mxu0 0
    %2052 = vmatpush1.bf16.msra.mxu0 0
    %2053 = vmatprep.subr.bf16.mxu0 0
    %2054 = vmatpush1.bf16.msra.mxu0 0
    %2055 = vmatprep.subr.bf16.mxu0 0
    %2056 = vmatpush1.bf16.msra.mxu0 0
    %2057 = vmatprep.subr.bf16.mxu0 0
    %2058 = vmatpush1.bf16.msra.mxu0 0
    %2059 = vmatprep.mubr.bf16.mxu0 0
    %2060 = vmatmul.mubr.bf16.gmra.mrb[0].mxu0 %v1985
    %v2061 = vpop.f32.mrb[0].mxu0
    %v2062 = vadd.f32 0.0, %v2061
    %v2063 = vpop.f32.mrb[0].mxu0
    %v2064 = vpop.f32.mrb[0].mxu0
    %v2065 = vpop.f32.mrb[0].mxu0
    %2066 = vdwg.mxu0
    %v2067 = vadd.f32 %v263, %v2021
    %v2068 = vxor.u32 %v2067, 2147483648
    %v2069 = vmul.f32 %v2068, 1.442695
    %v2070 = vpow.pop %v2069
    %v2071 = vadd.f32 %v2070, 1.0
    %v2072 = vrcp.pop %v2071
    %v2073 = vmul.f32 1.0, %v2072
    %v2074 = vadd.f32 %v265, %v2023
    %v2075 = vxor.u32 %v2074, 2147483648
    %v2076 = vmul.f32 %v2075, 1.442695
    %v2077 = vpow.pop %v2076
    %v2078 = vadd.f32 %v2077, 1.0
    %v2079 = vrcp.pop %v2078
    %v2080 = vmul.f32 1.0, %v2079
    %v2081 = vadd.f32 %v2062, %v710
    %v2082 = vmul.f32 %v2073, %v2081
    %v2083 = vadd.f32 %v336, %v2082
    %v2084 = vtanh.pop %v2083
    %v2085 = vsub.f32 %v1881, %v2084
    %v2086 = vmul.f32 %v2080, %v2085
    %v2087 = vadd.f32 %v2084, %v2086
    %v2088 = vpack.c.bf16 %v1984, %v1984
    %2089 = vmatprep.subr.bf16.mxu0 %v800
    %2090 = vmatpush1.bf16.msra.mxu0 %v799
    %2091 = vmatprep.subr.bf16.mxu0 %v803
    %2092 = vmatpush1.bf16.msra.mxu0 %v802
    %2093 = vmatprep.subr.bf16.mxu0 %v806
    %2094 = vmatpush1.bf16.msra.mxu0 %v805
    %2095 = vmatprep.subr.bf16.mxu0 %v809
    %2096 = vmatpush1.bf16.msra.mxu0 %v808
    %2097 = vmatprep.subr.bf16.mxu0 %v812
    %2098 = vmatpush1.bf16.msra.mxu0 %v811
    %2099 = vmatprep.subr.bf16.mxu0 %v815
    %2100 = vmatpush1.bf16.msra.mxu0 %v814
    %2101 = vmatprep.subr.bf16.mxu0 %v818
    %2102 = vmatpush1.bf16.msra.mxu0 %v817
    %2103 = vmatprep.subr.bf16.mxu0 %v821
    %2104 = vmatpush1.bf16.msra.mxu0 %v820
    %2105 = vmatprep.subr.bf16.mxu0 0
    %2106 = vmatpush1.bf16.msra.mxu0 0
    %2107 = vmatprep.subr.bf16.mxu0 0
    %2108 = vmatpush1.bf16.msra.mxu0 0
    %2109 = vmatprep.subr.bf16.mxu0 0
    %2110 = vmatpush1.bf16.msra.mxu0 0
    %2111 = vmatprep.subr.bf16.mxu0 0
    %2112 = vmatpush1.bf16.msra.mxu0 0
    %2113 = vmatprep.subr.bf16.mxu0 0
    %2114 = vmatpush1.bf16.msra.mxu0 0
    %2115 = vmatprep.subr.bf16.mxu0 0
    %2116 = vmatpush1.bf16.msra.mxu0 0
    %2117 = vmatprep.subr.bf16.mxu0 0
    %2118 = vmatpush1.bf16.msra.mxu0 0
    %2119 = vmatprep.subr.bf16.mxu0 0
    %2120 = vmatpush1.bf16.msra.mxu0 0
    %2121 = vmatprep.mubr.bf16.mxu0 0
    %2122 = vmatmul.mubr.bf16.gmra.mrb[0].mxu0 %v2088
    %v2123 = vpop.f32.mrb[0].mxu0
    %v2124 = vadd.f32 0.0, %v2123
    %v2125 = vpop.f32.mrb[0].mxu0
    %v2126 = vadd.f32 0.0, %v2125
    %v2127 = vpop.f32.mrb[0].mxu0
    %v2128 = vpop.f32.mrb[0].mxu0
    %2129 = vdwg.mxu0
    %2130 = vmatprep.subr.bf16.mxu0 0
    %2131 = vmatpush1.bf16.msra.mxu0 %v801
    %2132 = vmatprep.subr.bf16.mxu0 0
    %2133 = vmatpush1.bf16.msra.mxu0 %v804
    %2134 = vmatprep.subr.bf16.mxu0 0
    %2135 = vmatpush1.bf16.msra.mxu0 %v807
    %2136 = vmatprep.subr.bf16.mxu0 0
    %2137 = vmatpush1.bf16.msra.mxu0 %v810
    %2138 = vmatprep.subr.bf16.mxu0 0
    %2139 = vmatpush1.bf16.msra.mxu0 %v813
    %2140 = vmatprep.subr.bf16.mxu0 0
    %2141 = vmatpush1.bf16.msra.mxu0 %v816
    %2142 = vmatprep.subr.bf16.mxu0 0
    %2143 = vmatpush1.bf16.msra.mxu0 %v819
    %2144 = vmatprep.subr.bf16.mxu0 0
    %2145 = vmatpush1.bf16.msra.mxu0 %v822
    %2146 = vmatprep.subr.bf16.mxu0 0
    %2147 = vmatpush1.bf16.msra.mxu0 0
    %2148 = vmatprep.subr.bf16.mxu0 0
    %2149 = vmatpush1.bf16.msra.mxu0 0
    %2150 = vmatprep.subr.bf16.mxu0 0
    %2151 = vmatpush1.bf16.msra.mxu0 0
    %2152 = vmatprep.subr.bf16.mxu0 0
    %2153 = vmatpush1.bf16.msra.mxu0 0
    %2154 = vmatprep.subr.bf16.mxu0 0
    %2155 = vmatpush1.bf16.msra.mxu0 0
    %2156 = vmatprep.subr.bf16.mxu0 0
    %2157 = vmatpush1.bf16.msra.mxu0 0
    %2158 = vmatprep.subr.bf16.mxu0 0
    %2159 = vmatpush1.bf16.msra.mxu0 0
    %2160 = vmatprep.subr.bf16.mxu0 0
    %2161 = vmatpush1.bf16.msra.mxu0 0
    %2162 = vmatprep.mubr.bf16.mxu0 0
    %2163 = vmatmul.mubr.bf16.gmra.mrb[0].mxu0 %v2088
    %v2164 = vpop.f32.mrb[0].mxu0
    %v2165 = vadd.f32 0.0, %v2164
    %v2166 = vpop.f32.mrb[0].mxu0
    %v2167 = vpop.f32.mrb[0].mxu0
    %v2168 = vpop.f32.mrb[0].mxu0
    %2169 = vdwg.mxu0
    %v2170 = vadd.f32 %v312, %v2124
    %v2171 = vxor.u32 %v2170, 2147483648
    %v2172 = vmul.f32 %v2171, 1.442695
    %v2173 = vpow.pop %v2172
    %v2174 = vadd.f32 %v2173, 1.0
    %v2175 = vrcp.pop %v2174
    %v2176 = vmul.f32 1.0, %v2175
    %v2177 = vadd.f32 %v383, %v2126
    %v2178 = vxor.u32 %v2177, 2147483648
    %v2179 = vmul.f32 %v2178, 1.442695
    %v2180 = vpow.pop %v2179
    %v2181 = vadd.f32 %v2180, 1.0
    %v2182 = vrcp.pop %v2181
    %v2183 = vmul.f32 1.0, %v2182
    %v2184 = vadd.f32 %v2165, %v946
    %v2185 = vmul.f32 %v2176, %v2184
    %v2186 = vadd.f32 %v385, %v2185
    %v2187 = vtanh.pop %v2186
    %v2188 = vsub.f32 %v1984, %v2187
    %v2189 = vmul.f32 %v2183, %v2188
    %v2190 = vadd.f32 %v2187, %v2189
    %v2191 = vpack.c.bf16 %v2087, %v2087
    %2192 = vmatprep.subr.bf16.mxu0 %v564
    %2193 = vmatpush1.bf16.msra.mxu0 %v563
    %2194 = vmatprep.subr.bf16.mxu0 %v567
    %2195 = vmatpush1.bf16.msra.mxu0 %v566
    %2196 = vmatprep.subr.bf16.mxu0 %v570
    %2197 = vmatpush1.bf16.msra.mxu0 %v569
    %2198 = vmatprep.subr.bf16.mxu0 %v573
    %2199 = vmatpush1.bf16.msra.mxu0 %v572
    %2200 = vmatprep.subr.bf16.mxu0 %v576
    %2201 = vmatpush1.bf16.msra.mxu0 %v575
    %2202 = vmatprep.subr.bf16.mxu0 %v579
    %2203 = vmatpush1.bf16.msra.mxu0 %v578
    %2204 = vmatprep.subr.bf16.mxu0 %v582
    %2205 = vmatpush1.bf16.msra.mxu0 %v581
    %2206 = vmatprep.subr.bf16.mxu0 %v585
    %2207 = vmatpush1.bf16.msra.mxu0 %v584
    %2208 = vmatprep.subr.bf16.mxu0 0
    %2209 = vmatpush1.bf16.msra.mxu0 0
    %2210 = vmatprep.subr.bf16.mxu0 0
    %2211 = vmatpush1.bf16.msra.mxu0 0
    %2212 = vmatprep.subr.bf16.mxu0 0
    %2213 = vmatpush1.bf16.msra.mxu0 0
    %2214 = vmatprep.subr.bf16.mxu0 0
    %2215 = vmatpush1.bf16.msra.mxu0 0
    %2216 = vmatprep.subr.bf16.mxu0 0
    %2217 = vmatpush1.bf16.msra.mxu0 0
    %2218 = vmatprep.subr.bf16.mxu0 0
    %2219 = vmatpush1.bf16.msra.mxu0 0
    %2220 = vmatprep.subr.bf16.mxu0 0
    %2221 = vmatpush1.bf16.msra.mxu0 0
    %2222 = vmatprep.subr.bf16.mxu0 0
    %2223 = vmatpush1.bf16.msra.mxu0 0
    %2224 = vmatprep.mubr.bf16.mxu0 0
    %2225 = vmatmul.mubr.bf16.gmra.mrb[0].mxu0 %v2191
    %v2226 = vpop.f32.mrb[0].mxu0
    %v2227 = vadd.f32 0.0, %v2226
    %v2228 = vpop.f32.mrb[0].mxu0
    %v2229 = vadd.f32 0.0, %v2228
    %v2230 = vpop.f32.mrb[0].mxu0
    %v2231 = vpop.f32.mrb[0].mxu0
    %2232 = vdwg.mxu0
    %2233 = vmatprep.subr.bf16.mxu0 0
    %2234 = vmatpush1.bf16.msra.mxu0 %v565
    %2235 = vmatprep.subr.bf16.mxu0 0
    %2236 = vmatpush1.bf16.msra.mxu0 %v568
    %2237 = vmatprep.subr.bf16.mxu0 0
    %2238 = vmatpush1.bf16.msra.mxu0 %v571
    %2239 = vmatprep.subr.bf16.mxu0 0
    %2240 = vmatpush1.bf16.msra.mxu0 %v574
    %2241 = vmatprep.subr.bf16.mxu0 0
    %2242 = vmatpush1.bf16.msra.mxu0 %v577
    %2243 = vmatprep.subr.bf16.mxu0 0
    %2244 = vmatpush1.bf16.msra.mxu0 %v580
    %2245 = vmatprep.subr.bf16.mxu0 0
    %2246 = vmatpush1.bf16.msra.mxu0 %v583
    %2247 = vmatprep.subr.bf16.mxu0 0
    %2248 = vmatpush1.bf16.msra.mxu0 %v586
    %2249 = vmatprep.subr.bf16.mxu0 0
    %2250 = vmatpush1.bf16.msra.mxu0 0
    %2251 = vmatprep.subr.bf16.mxu0 0
    %2252 = vmatpush1.bf16.msra.mxu0 0
    %2253 = vmatprep.subr.bf16.mxu0 0
    %2254 = vmatpush1.bf16.msra.mxu0 0
    %2255 = vmatprep.subr.bf16.mxu0 0
    %2256 = vmatpush1.bf16.msra.mxu0 0
    %2257 = vmatprep.subr.bf16.mxu0 0
    %2258 = vmatpush1.bf16.msra.mxu0 0
    %2259 = vmatprep.subr.bf16.mxu0 0
    %2260 = vmatpush1.bf16.msra.mxu0 0
    %2261 = vmatprep.subr.bf16.mxu0 0
    %2262 = vmatpush1.bf16.msra.mxu0 0
    %2263 = vmatprep.subr.bf16.mxu0 0
    %2264 = vmatpush1.bf16.msra.mxu0 0
    %2265 = vmatprep.mubr.bf16.mxu0 0
    %2266 = vmatmul.mubr.bf16.gmra.mrb[0].mxu0 %v2191
    %v2267 = vpop.f32.mrb[0].mxu0
    %v2268 = vadd.f32 0.0, %v2267
    %v2269 = vpop.f32.mrb[0].mxu0
    %v2270 = vpop.f32.mrb[0].mxu0
    %v2271 = vpop.f32.mrb[0].mxu0
    %2272 = vdwg.mxu0
    %v2273 = vadd.f32 %v267, %v2227
    %v2274 = vxor.u32 %v2273, 2147483648
    %v2275 = vmul.f32 %v2274, 1.442695
    %v2276 = vpow.pop %v2275
    %v2277 = vadd.f32 %v2276, 1.0
    %v2278 = vrcp.pop %v2277
    %v2279 = vmul.f32 1.0, %v2278
    %v2280 = vadd.f32 %v269, %v2229
    %v2281 = vxor.u32 %v2280, 2147483648
    %v2282 = vmul.f32 %v2281, 1.442695
    %v2283 = vpow.pop %v2282
    %v2284 = vadd.f32 %v2283, 1.0
    %v2285 = vrcp.pop %v2284
    %v2286 = vmul.f32 1.0, %v2285
    %v2287 = vadd.f32 %v2268, %v710
    %v2288 = vmul.f32 %v2279, %v2287
    %v2289 = vadd.f32 %v340, %v2288
    %v2290 = vtanh.pop %v2289
    %v2291 = vsub.f32 %v2087, %v2290
    %v2292 = vmul.f32 %v2286, %v2291
    %v2293 = vadd.f32 %v2290, %v2292
    %v2294 = vpack.c.bf16 %v2190, %v2190
    %2295 = vmatprep.subr.bf16.mxu0 %v800
    %2296 = vmatpush1.bf16.msra.mxu0 %v799
    %2297 = vmatprep.subr.bf16.mxu0 %v803
    %2298 = vmatpush1.bf16.msra.mxu0 %v802
    %2299 = vmatprep.subr.bf16.mxu0 %v806
    %2300 = vmatpush1.bf16.msra.mxu0 %v805
    %2301 = vmatprep.subr.bf16.mxu0 %v809
    %2302 = vmatpush1.bf16.msra.mxu0 %v808
    %2303 = vmatprep.subr.bf16.mxu0 %v812
    %2304 = vmatpush1.bf16.msra.mxu0 %v811
    %2305 = vmatprep.subr.bf16.mxu0 %v815
    %2306 = vmatpush1.bf16.msra.mxu0 %v814
    %2307 = vmatprep.subr.bf16.mxu0 %v818
    %2308 = vmatpush1.bf16.msra.mxu0 %v817
    %2309 = vmatprep.subr.bf16.mxu0 %v821
    %2310 = vmatpush1.bf16.msra.mxu0 %v820
    %2311 = vmatprep.subr.bf16.mxu0 0
    %2312 = vmatpush1.bf16.msra.mxu0 0
    %2313 = vmatprep.subr.bf16.mxu0 0
    %2314 = vmatpush1.bf16.msra.mxu0 0
    %2315 = vmatprep.subr.bf16.mxu0 0
    %2316 = vmatpush1.bf16.msra.mxu0 0
    %2317 = vmatprep.subr.bf16.mxu0 0
    %2318 = vmatpush1.bf16.msra.mxu0 0
    %2319 = vmatprep.subr.bf16.mxu0 0
    %2320 = vmatpush1.bf16.msra.mxu0 0
    %2321 = vmatprep.subr.bf16.mxu0 0
    %2322 = vmatpush1.bf16.msra.mxu0 0
    %2323 = vmatprep.subr.bf16.mxu0 0
    %2324 = vmatpush1.bf16.msra.mxu0 0
    %2325 = vmatprep.subr.bf16.mxu0 0
    %2326 = vmatpush1.bf16.msra.mxu0 0
    %2327 = vmatprep.mubr.bf16.mxu0 0
    %2328 = vmatmul.mubr.bf16.gmra.mrb[0].mxu0 %v2294
    %v2329 = vpop.f32.mrb[0].mxu0
    %v2330 = vadd.f32 0.0, %v2329
    %v2331 = vpop.f32.mrb[0].mxu0
    %v2332 = vadd.f32 0.0, %v2331
    %v2333 = vpop.f32.mrb[0].mxu0
    %v2334 = vpop.f32.mrb[0].mxu0
    %2335 = vdwg.mxu0
    %2336 = vmatprep.subr.bf16.mxu0 0
    %2337 = vmatpush1.bf16.msra.mxu0 %v801
    %2338 = vmatprep.subr.bf16.mxu0 0
    %2339 = vmatpush1.bf16.msra.mxu0 %v804
    %2340 = vmatprep.subr.bf16.mxu0 0
    %2341 = vmatpush1.bf16.msra.mxu0 %v807
    %2342 = vmatprep.subr.bf16.mxu0 0
    %2343 = vmatpush1.bf16.msra.mxu0 %v810
    %2344 = vmatprep.subr.bf16.mxu0 0
    %2345 = vmatpush1.bf16.msra.mxu0 %v813
    %2346 = vmatprep.subr.bf16.mxu0 0
    %2347 = vmatpush1.bf16.msra.mxu0 %v816
    %2348 = vmatprep.subr.bf16.mxu0 0
    %2349 = vmatpush1.bf16.msra.mxu0 %v819
    %2350 = vmatprep.subr.bf16.mxu0 0
    %2351 = vmatpush1.bf16.msra.mxu0 %v822
    %2352 = vmatprep.subr.bf16.mxu0 0
    %2353 = vmatpush1.bf16.msra.mxu0 0
    %2354 = vmatprep.subr.bf16.mxu0 0
    %2355 = vmatpush1.bf16.msra.mxu0 0
    %2356 = vmatprep.subr.bf16.mxu0 0
    %2357 = vmatpush1.bf16.msra.mxu0 0
    %2358 = vmatprep.subr.bf16.mxu0 0
    %2359 = vmatpush1.bf16.msra.mxu0 0
    %2360 = vmatprep.subr.bf16.mxu0 0
    %2361 = vmatpush1.bf16.msra.mxu0 0
    %2362 = vmatprep.subr.bf16.mxu0 0
    %2363 = vmatpush1.bf16.msra.mxu0 0
    %2364 = vmatprep.subr.bf16.mxu0 0
    %2365 = vmatpush1.bf16.msra.mxu0 0
    %2366 = vmatprep.subr.bf16.mxu0 0
    %2367 = vmatpush1.bf16.msra.mxu0 0
    %2368 = vmatprep.mubr.bf16.mxu0 0
    %2369 = vmatmul.mubr.bf16.gmra.mrb[0].mxu0 %v2294
    %v2370 = vpop.f32.mrb[0].mxu0
    %v2371 = vadd.f32 0.0, %v2370
    %v2372 = vpop.f32.mrb[0].mxu0
    %v2373 = vpop.f32.mrb[0].mxu0
    %v2374 = vpop.f32.mrb[0].mxu0
    %2375 = vdwg.mxu0
    %v2376 = vadd.f32 %v308, %v2330
    %v2377 = vxor.u32 %v2376, 2147483648
    %v2378 = vmul.f32 %v2377, 1.442695
    %v2379 = vpow.pop %v2378
    %v2380 = vadd.f32 %v2379, 1.0
    %v2381 = vrcp.pop %v2380
    %v2382 = vmul.f32 1.0, %v2381
    %v2383 = vadd.f32 %v379, %v2332
    %v2384 = vxor.u32 %v2383, 2147483648
    %v2385 = vmul.f32 %v2384, 1.442695
    %v2386 = vpow.pop %v2385
    %v2387 = vadd.f32 %v2386, 1.0
    %v2388 = vrcp.pop %v2387
    %v2389 = vmul.f32 1.0, %v2388
    %v2390 = vadd.f32 %v2371, %v946
    %v2391 = vmul.f32 %v2382, %v2390
    %v2392 = vadd.f32 %v381, %v2391
    %v2393 = vtanh.pop %v2392
    %v2394 = vsub.f32 %v2190, %v2393
    %v2395 = vmul.f32 %v2389, %v2394
    %v2396 = vadd.f32 %v2393, %v2395
    %v2397 = vpack.c.bf16 %v2396, %v2396
    %v2398 = vpack.c.bf16 %v2293, %v2293
    %v2399 = vld [vmem:[#allocation8] sm:$0xf]
    %v2400 = vld [vmem:[#allocation8 + $0x4] sm:$0xf]
    %v2401 = vld [vmem:[#allocation8 + $0x8] sm:$0xf]
    %v2402 = vld [vmem:[#allocation8 + $0xc] sm:$0xf]
    %v2403 = vld [vmem:[#allocation8 + $0x10] sm:$0xf]
    %v2404 = vld [vmem:[#allocation8 + $0x14] sm:$0xf]
    %v2405 = vld [vmem:[#allocation8 + $0x18] sm:$0xf]
    %v2406 = vld [vmem:[#allocation8 + $0x1c] sm:$0xf]
    %v2407 = vld [vmem:[#allocation8 + $0x20] sm:$0xf]
    %v2408 = vld [vmem:[#allocation8 + $0x24] sm:$0xf]
    %v2409 = vld [vmem:[#allocation8 + $0x28] sm:$0xf]
    %v2410 = vld [vmem:[#allocation8 + $0x2c] sm:$0xf]
    %v2411 = vld [vmem:[#allocation8 + $0x30] sm:$0xf]
    %v2412 = vld [vmem:[#allocation8 + $0x34] sm:$0xf]
    %v2413 = vld [vmem:[#allocation8 + $0x38] sm:$0xf]
    %v2414 = vld [vmem:[#allocation8 + $0x3c] sm:$0xf]
    %v2415 = vld [vmem:[#allocation8 + $0x40] sm:$0xf]
    %v2416 = vld [vmem:[#allocation8 + $0x44] sm:$0xf]
    %v2417 = vld [vmem:[#allocation8 + $0x48] sm:$0xf]
    %v2418 = vld [vmem:[#allocation8 + $0x4c] sm:$0xf]
    %v2419 = vld [vmem:[#allocation8 + $0x50] sm:$0xf]
    %v2420 = vld [vmem:[#allocation8 + $0x54] sm:$0xf]
    %v2421 = vld [vmem:[#allocation8 + $0x58] sm:$0xf]
    %v2422 = vld [vmem:[#allocation8 + $0x5c] sm:$0xf]
    %v2423 = vld [vmem:[#allocation8 + $0x60] sm:$0xf]
    %v2424 = vld [vmem:[#allocation8 + $0x64] sm:$0xf]
    %v2425 = vld [vmem:[#allocation8 + $0x68] sm:$0xf]
    %v2426 = vld [vmem:[#allocation8 + $0x6c] sm:$0xf]
    %v2427 = vld [vmem:[#allocation8 + $0x70] sm:$0xf]
    %v2428 = vld [vmem:[#allocation8 + $0x74] sm:$0xf]
    %v2429 = vld [vmem:[#allocation8 + $0x78] sm:$0xf]
    %v2430 = vld [vmem:[#allocation8 + $0x7c] sm:$0xf]
    %v2431 = vld [vmem:[#allocation8 + $0x80] sm:$0xf]
    %v2432 = vld [vmem:[#allocation8 + $0x84] sm:$0xf]
    %v2433 = vld [vmem:[#allocation8 + $0x88] sm:$0xf]
    %v2434 = vld [vmem:[#allocation8 + $0x8c] sm:$0xf]
    %v2435 = vld [vmem:[#allocation8 + $0x90] sm:$0xf]
    %v2436 = vld [vmem:[#allocation8 + $0x94] sm:$0xf]
    %v2437 = vld [vmem:[#allocation8 + $0x98] sm:$0xf]
    %v2438 = vld [vmem:[#allocation8 + $0x9c] sm:$0xf]
    %v2439 = vld [vmem:[#allocation8 + $0xa0] sm:$0xf]
    %v2440 = vld [vmem:[#allocation8 + $0xa4] sm:$0xf]
    %v2441 = vld [vmem:[#allocation8 + $0xa8] sm:$0xf]
    %v2442 = vld [vmem:[#allocation8 + $0xac] sm:$0xf]
    %v2443 = vld [vmem:[#allocation8 + $0xb0] sm:$0xf]
    %v2444 = vld [vmem:[#allocation8 + $0xb4] sm:$0xf]
    %v2445 = vld [vmem:[#allocation8 + $0xb8] sm:$0xf]
    %v2446 = vld [vmem:[#allocation8 + $0xbc] sm:$0xf]
    %v2447 = vld [vmem:[#allocation8 + $0xc0] sm:$0xf]
    %v2448 = vld [vmem:[#allocation8 + $0xc4] sm:$0xf]
    %v2449 = vld [vmem:[#allocation8 + $0xc8] sm:$0xf]
    %v2450 = vld [vmem:[#allocation8 + $0xcc] sm:$0xf]
    %v2451 = vld [vmem:[#allocation8 + $0xd0] sm:$0xf]
    %v2452 = vld [vmem:[#allocation8 + $0xd4] sm:$0xf]
    %v2453 = vld [vmem:[#allocation8 + $0xd8] sm:$0xf]
    %v2454 = vld [vmem:[#allocation8 + $0xdc] sm:$0xf]
    %v2455 = vld [vmem:[#allocation8 + $0xe0] sm:$0xf]
    %v2456 = vld [vmem:[#allocation8 + $0xe4] sm:$0xf]
    %v2457 = vld [vmem:[#allocation8 + $0xe8] sm:$0xf]
    %v2458 = vld [vmem:[#allocation8 + $0xec] sm:$0xf]
    %v2459 = vld [vmem:[#allocation8 + $0xf0] sm:$0xf]
    %v2460 = vld [vmem:[#allocation8 + $0xf4] sm:$0xf]
    %v2461 = vld [vmem:[#allocation8 + $0xf8] sm:$0xf]
    %v2462 = vld [vmem:[#allocation8 + $0xfc] sm:$0xf]
    %v2463 = vld [vmem:[#allocation8 + $0x100] sm:$0xf]
    %v2464 = vld [vmem:[#allocation8 + $0x104] sm:$0xf]
    %v2465 = vld [vmem:[#allocation8 + $0x108] sm:$0xf]
    %v2466 = vld [vmem:[#allocation8 + $0x10c] sm:$0xf]
    %v2467 = vld [vmem:[#allocation8 + $0x110] sm:$0xf]
    %v2468 = vld [vmem:[#allocation8 + $0x114] sm:$0xf]
    %v2469 = vld [vmem:[#allocation8 + $0x118] sm:$0xf]
    %v2470 = vld [vmem:[#allocation8 + $0x11c] sm:$0xf]
    %v2471 = vld [vmem:[#allocation8 + $0x120] sm:$0xf]
    %v2472 = vld [vmem:[#allocation8 + $0x124] sm:$0xf]
    %v2473 = vld [vmem:[#allocation8 + $0x128] sm:$0xf]
    %v2474 = vld [vmem:[#allocation8 + $0x12c] sm:$0xf]
    %v2475 = vld [vmem:[#allocation8 + $0x130] sm:$0xf]
    %v2476 = vld [vmem:[#allocation8 + $0x134] sm:$0xf]
    %v2477 = vld [vmem:[#allocation8 + $0x138] sm:$0xf]
    %v2478 = vld [vmem:[#allocation8 + $0x13c] sm:$0xf]
    %v2479 = vld [vmem:[#allocation8 + $0x140] sm:$0xf]
    %v2480 = vld [vmem:[#allocation8 + $0x144] sm:$0xf]
    %v2481 = vld [vmem:[#allocation8 + $0x148] sm:$0xf]
    %v2482 = vld [vmem:[#allocation8 + $0x14c] sm:$0xf]
    %v2483 = vld [vmem:[#allocation8 + $0x150] sm:$0xf]
    %v2484 = vld [vmem:[#allocation8 + $0x154] sm:$0xf]
    %v2485 = vld [vmem:[#allocation8 + $0x158] sm:$0xf]
    %v2486 = vld [vmem:[#allocation8 + $0x15c] sm:$0xf]
    %v2487 = vld [vmem:[#allocation8 + $0x160] sm:$0xf]
    %v2488 = vld [vmem:[#allocation8 + $0x164] sm:$0xf]
    %v2489 = vld [vmem:[#allocation8 + $0x168] sm:$0xf]
    %v2490 = vld [vmem:[#allocation8 + $0x16c] sm:$0xf]
    %v2491 = vld [vmem:[#allocation8 + $0x170] sm:$0xf]
    %v2492 = vld [vmem:[#allocation8 + $0x174] sm:$0xf]
    %v2493 = vld [vmem:[#allocation8 + $0x178] sm:$0xf]
    %v2494 = vld [vmem:[#allocation8 + $0x17c] sm:$0xf]
    %v2495 = vld [vmem:[#allocation8 + $0x180] sm:$0xf]
    %v2496 = vld [vmem:[#allocation8 + $0x184] sm:$0xf]
    %v2497 = vld [vmem:[#allocation8 + $0x188] sm:$0xf]
    %v2498 = vld [vmem:[#allocation8 + $0x18c] sm:$0xf]
    %v2499 = vld [vmem:[#allocation8 + $0x190] sm:$0xf]
    %v2500 = vld [vmem:[#allocation8 + $0x194] sm:$0xf]
    %v2501 = vld [vmem:[#allocation8 + $0x198] sm:$0xf]
    %v2502 = vld [vmem:[#allocation8 + $0x19c] sm:$0xf]
    %v2503 = vld [vmem:[#allocation8 + $0x1a0] sm:$0xf]
    %v2504 = vld [vmem:[#allocation8 + $0x1a4] sm:$0xf]
    %v2505 = vld [vmem:[#allocation8 + $0x1a8] sm:$0xf]
    %v2506 = vld [vmem:[#allocation8 + $0x1ac] sm:$0xf]
    %v2507 = vld [vmem:[#allocation8 + $0x1b0] sm:$0xf]
    %v2508 = vld [vmem:[#allocation8 + $0x1b4] sm:$0xf]
    %v2509 = vld [vmem:[#allocation8 + $0x1b8] sm:$0xf]
    %v2510 = vld [vmem:[#allocation8 + $0x1bc] sm:$0xf]
    %v2511 = vld [vmem:[#allocation8 + $0x1c0] sm:$0xf]
    %v2512 = vld [vmem:[#allocation8 + $0x1c4] sm:$0xf]
    %v2513 = vld [vmem:[#allocation8 + $0x1c8] sm:$0xf]
    %v2514 = vld [vmem:[#allocation8 + $0x1cc] sm:$0xf]
    %v2515 = vld [vmem:[#allocation8 + $0x1d0] sm:$0xf]
    %v2516 = vld [vmem:[#allocation8 + $0x1d4] sm:$0xf]
    %v2517 = vld [vmem:[#allocation8 + $0x1d8] sm:$0xf]
    %v2518 = vld [vmem:[#allocation8 + $0x1dc] sm:$0xf]
    %v2519 = vld [vmem:[#allocation8 + $0x1e0] sm:$0xf]
    %v2520 = vld [vmem:[#allocation8 + $0x1e4] sm:$0xf]
    %v2521 = vld [vmem:[#allocation8 + $0x1e8] sm:$0xf]
    %v2522 = vld [vmem:[#allocation8 + $0x1ec] sm:$0xf]
    %v2523 = vld [vmem:[#allocation8 + $0x1f0] sm:$0xf]
    %v2524 = vld [vmem:[#allocation8 + $0x1f4] sm:$0xf]
    %v2525 = vld [vmem:[#allocation8 + $0x1f8] sm:$0xf]
    %v2526 = vld [vmem:[#allocation8 + $0x1fc] sm:$0xf]
    %v2527 = vld [vmem:[#allocation8 + $0x200] sm:$0xf]
    %v2528 = vld [vmem:[#allocation8 + $0x204] sm:$0xf]
    %v2529 = vld [vmem:[#allocation8 + $0x208] sm:$0xf]
    %v2530 = vld [vmem:[#allocation8 + $0x20c] sm:$0xf]
    %v2531 = vld [vmem:[#allocation8 + $0x210] sm:$0xf]
    %v2532 = vld [vmem:[#allocation8 + $0x214] sm:$0xf]
    %v2533 = vld [vmem:[#allocation8 + $0x218] sm:$0xf]
    %v2534 = vld [vmem:[#allocation8 + $0x21c] sm:$0xf]
    %v2535 = vld [vmem:[#allocation8 + $0x220] sm:$0xf]
    %v2536 = vld [vmem:[#allocation8 + $0x224] sm:$0xf]
    %v2537 = vld [vmem:[#allocation8 + $0x228] sm:$0xf]
    %v2538 = vld [vmem:[#allocation8 + $0x22c] sm:$0xf]
    %v2539 = vld [vmem:[#allocation8 + $0x230] sm:$0xf]
    %v2540 = vld [vmem:[#allocation8 + $0x234] sm:$0xf]
    %v2541 = vld [vmem:[#allocation8 + $0x238] sm:$0xf]
    %v2542 = vld [vmem:[#allocation8 + $0x23c] sm:$0xf]
    %v2543 = vld [vmem:[#allocation8 + $0x240] sm:$0xf]
    %v2544 = vld [vmem:[#allocation8 + $0x244] sm:$0xf]
    %v2545 = vld [vmem:[#allocation8 + $0x248] sm:$0xf]
    %v2546 = vld [vmem:[#allocation8 + $0x24c] sm:$0xf]
    %v2547 = vld [vmem:[#allocation8 + $0x250] sm:$0xf]
    %v2548 = vld [vmem:[#allocation8 + $0x254] sm:$0xf]
    %v2549 = vld [vmem:[#allocation8 + $0x258] sm:$0xf]
    %v2550 = vld [vmem:[#allocation8 + $0x25c] sm:$0xf]
    %v2551 = vld [vmem:[#allocation8 + $0x260] sm:$0xf]
    %v2552 = vld [vmem:[#allocation8 + $0x264] sm:$0xf]
    %v2553 = vld [vmem:[#allocation8 + $0x268] sm:$0xf]
    %v2554 = vld [vmem:[#allocation8 + $0x26c] sm:$0xf]
    %v2555 = vld [vmem:[#allocation8 + $0x270] sm:$0xf]
    %v2556 = vld [vmem:[#allocation8 + $0x274] sm:$0xf]
    %v2557 = vld [vmem:[#allocation8 + $0x278] sm:$0xf]
    %v2558 = vld [vmem:[#allocation8 + $0x27c] sm:$0xf]
    %v2559 = vld [vmem:[#allocation8 + $0x280] sm:$0xf]
    %v2560 = vld [vmem:[#allocation8 + $0x284] sm:$0xf]
    %v2561 = vld [vmem:[#allocation8 + $0x288] sm:$0xf]
    %v2562 = vld [vmem:[#allocation8 + $0x28c] sm:$0xf]
    %v2563 = vld [vmem:[#allocation8 + $0x290] sm:$0xf]
    %v2564 = vld [vmem:[#allocation8 + $0x294] sm:$0xf]
    %v2565 = vld [vmem:[#allocation8 + $0x298] sm:$0xf]
    %v2566 = vld [vmem:[#allocation8 + $0x29c] sm:$0xf]
    %v2567 = vld [vmem:[#allocation8 + $0x2a0] sm:$0xf]
    %v2568 = vld [vmem:[#allocation8 + $0x2a4] sm:$0xf]
    %v2569 = vld [vmem:[#allocation8 + $0x2a8] sm:$0xf]
    %v2570 = vld [vmem:[#allocation8 + $0x2ac] sm:$0xf]
    %v2571 = vld [vmem:[#allocation8 + $0x2b0] sm:$0xf]
    %v2572 = vld [vmem:[#allocation8 + $0x2b4] sm:$0xf]
    %v2573 = vld [vmem:[#allocation8 + $0x2b8] sm:$0xf]
    %v2574 = vld [vmem:[#allocation8 + $0x2bc] sm:$0xf]
    %v2575 = vld [vmem:[#allocation8 + $0x2c0] sm:$0xf]
    %v2576 = vld [vmem:[#allocation8 + $0x2c4] sm:$0xf]
    %v2577 = vld [vmem:[#allocation8 + $0x2c8] sm:$0xf]
    %v2578 = vld [vmem:[#allocation8 + $0x2cc] sm:$0xf]
    %v2579 = vld [vmem:[#allocation8 + $0x2d0] sm:$0xf]
    %v2580 = vld [vmem:[#allocation8 + $0x2d4] sm:$0xf]
    %v2581 = vld [vmem:[#allocation8 + $0x2d8] sm:$0xf]
    %v2582 = vld [vmem:[#allocation8 + $0x2dc] sm:$0xf]
    %v2583 = vld [vmem:[#allocation8 + $0x2e0] sm:$0xf]
    %v2584 = vld [vmem:[#allocation8 + $0x2e4] sm:$0xf]
    %v2585 = vld [vmem:[#allocation8 + $0x2e8] sm:$0xf]
    %v2586 = vld [vmem:[#allocation8 + $0x2ec] sm:$0xf]
    %v2587 = vld [vmem:[#allocation8 + $0x2f0] sm:$0xf]
    %v2588 = vld [vmem:[#allocation8 + $0x2f4] sm:$0xf]
    %v2589 = vld [vmem:[#allocation8 + $0x2f8] sm:$0xf]
    %v2590 = vld [vmem:[#allocation8 + $0x2fc] sm:$0xf]
    %v2591 = vld [vmem:[#allocation8 + $0x300] sm:$0xf]
    %v2592 = vld [vmem:[#allocation8 + $0x304] sm:$0xf]
    %v2593 = vld [vmem:[#allocation8 + $0x308] sm:$0xf]
    %v2594 = vld [vmem:[#allocation8 + $0x30c] sm:$0xf]
    %v2595 = vld [vmem:[#allocation8 + $0x310] sm:$0xf]
    %v2596 = vld [vmem:[#allocation8 + $0x314] sm:$0xf]
    %v2597 = vld [vmem:[#allocation8 + $0x318] sm:$0xf]
    %v2598 = vld [vmem:[#allocation8 + $0x31c] sm:$0xf]
    %v2599 = vld [vmem:[#allocation8 + $0x320] sm:$0xf]
    %v2600 = vld [vmem:[#allocation8 + $0x324] sm:$0xf]
    %v2601 = vld [vmem:[#allocation8 + $0x328] sm:$0xf]
    %v2602 = vld [vmem:[#allocation8 + $0x32c] sm:$0xf]
    %v2603 = vld [vmem:[#allocation8 + $0x330] sm:$0xf]
    %v2604 = vld [vmem:[#allocation8 + $0x334] sm:$0xf]
    %v2605 = vld [vmem:[#allocation8 + $0x338] sm:$0xf]
    %v2606 = vld [vmem:[#allocation8 + $0x33c] sm:$0xf]
    %v2607 = vld [vmem:[#allocation8 + $0x340] sm:$0xf]
    %v2608 = vld [vmem:[#allocation8 + $0x344] sm:$0xf]
    %v2609 = vld [vmem:[#allocation8 + $0x348] sm:$0xf]
    %v2610 = vld [vmem:[#allocation8 + $0x34c] sm:$0xf]
    %v2611 = vld [vmem:[#allocation8 + $0x350] sm:$0xf]
    %v2612 = vld [vmem:[#allocation8 + $0x354] sm:$0xf]
    %v2613 = vld [vmem:[#allocation8 + $0x358] sm:$0xf]
    %v2614 = vld [vmem:[#allocation8 + $0x35c] sm:$0xf]
    %v2615 = vld [vmem:[#allocation8 + $0x360] sm:$0xf]
    %v2616 = vld [vmem:[#allocation8 + $0x364] sm:$0xf]
    %v2617 = vld [vmem:[#allocation8 + $0x368] sm:$0xf]
    %v2618 = vld [vmem:[#allocation8 + $0x36c] sm:$0xf]
    %v2619 = vld [vmem:[#allocation8 + $0x370] sm:$0xf]
    %v2620 = vld [vmem:[#allocation8 + $0x374] sm:$0xf]
    %v2621 = vld [vmem:[#allocation8 + $0x378] sm:$0xf]
    %v2622 = vld [vmem:[#allocation8 + $0x37c] sm:$0xf]
    %v2623 = vld [vmem:[#allocation8 + $0x380] sm:$0xf]
    %v2624 = vld [vmem:[#allocation8 + $0x384] sm:$0xf]
    %v2625 = vld [vmem:[#allocation8 + $0x388] sm:$0xf]
    %v2626 = vld [vmem:[#allocation8 + $0x38c] sm:$0xf]
    %v2627 = vld [vmem:[#allocation8 + $0x390] sm:$0xf]
    %v2628 = vld [vmem:[#allocation8 + $0x394] sm:$0xf]
    %v2629 = vld [vmem:[#allocation8 + $0x398] sm:$0xf]
    %v2630 = vld [vmem:[#allocation8 + $0x39c] sm:$0xf]
    %v2631 = vld [vmem:[#allocation8 + $0x3a0] sm:$0xf]
    %v2632 = vld [vmem:[#allocation8 + $0x3a4] sm:$0xf]
    %v2633 = vld [vmem:[#allocation8 + $0x3a8] sm:$0xf]
    %v2634 = vld [vmem:[#allocation8 + $0x3ac] sm:$0xf]
    %v2635 = vld [vmem:[#allocation8 + $0x3b0] sm:$0xf]
    %v2636 = vld [vmem:[#allocation8 + $0x3b4] sm:$0xf]
    %v2637 = vld [vmem:[#allocation8 + $0x3b8] sm:$0xf]
    %v2638 = vld [vmem:[#allocation8 + $0x3bc] sm:$0xf]
    %v2639 = vld [vmem:[#allocation8 + $0x3c0] sm:$0xf]
    %v2640 = vld [vmem:[#allocation8 + $0x3c4] sm:$0xf]
    %v2641 = vld [vmem:[#allocation8 + $0x3c8] sm:$0xf]
    %v2642 = vld [vmem:[#allocation8 + $0x3cc] sm:$0xf]
    %v2643 = vld [vmem:[#allocation8 + $0x3d0] sm:$0xf]
    %v2644 = vld [vmem:[#allocation8 + $0x3d4] sm:$0xf]
    %v2645 = vld [vmem:[#allocation8 + $0x3d8] sm:$0xf]
    %v2646 = vld [vmem:[#allocation8 + $0x3dc] sm:$0xf]
    %v2647 = vld [vmem:[#allocation8 + $0x3e0] sm:$0xf]
    %v2648 = vld [vmem:[#allocation8 + $0x3e4] sm:$0xf]
    %v2649 = vld [vmem:[#allocation8 + $0x3e8] sm:$0xf]
    %v2650 = vld [vmem:[#allocation8 + $0x3ec] sm:$0xf]
    %v2651 = vld [vmem:[#allocation8 + $0x3f0] sm:$0xf]
    %v2652 = vld [vmem:[#allocation8 + $0x3f4] sm:$0xf]
    %v2653 = vld [vmem:[#allocation8 + $0x3f8] sm:$0xf]
    %v2654 = vld [vmem:[#allocation8 + $0x3fc] sm:$0xf]
    %v2655 = vld [vmem:[%s8] sm:$0x1]
    %v2657 = vlaneseq
    %v2658 = vshrl.u32 %v2657, 7
    %v2659 = vsub.s32 0, %v2658
    %v2660 = vrot.slane %v2655, %v2659
    %v2918 = vunpack.c.l.b16 %v2399
    %v2919 = vunpack.c.l.b16 %v2400
    %v2920 = vunpack.c.l.b16 %v2401
    %v2921 = vunpack.c.l.b16 %v2402
    %v2922 = vunpack.c.l.b16 %v2403
    %v2923 = vunpack.c.l.b16 %v2404
    %v2924 = vunpack.c.l.b16 %v2405
    %v2925 = vunpack.c.l.b16 %v2406
    %v2926 = vunpack.c.l.b16 %v2407
    %v2927 = vunpack.c.l.b16 %v2408
    %v2928 = vunpack.c.l.b16 %v2409
    %v2929 = vunpack.c.l.b16 %v2410
    %v2930 = vunpack.c.l.b16 %v2411
    %v2931 = vunpack.c.l.b16 %v2412
    %v2932 = vunpack.c.l.b16 %v2413
    %v2933 = vunpack.c.l.b16 %v2414
    %v2934 = vunpack.c.l.b16 %v2415
    %v2935 = vunpack.c.l.b16 %v2416
    %v2936 = vunpack.c.l.b16 %v2417
    %v2937 = vunpack.c.l.b16 %v2418
    %v2938 = vunpack.c.l.b16 %v2419
    %v2939 = vunpack.c.l.b16 %v2420
    %v2940 = vunpack.c.l.b16 %v2421
    %v2941 = vunpack.c.l.b16 %v2422
    %v2942 = vunpack.c.l.b16 %v2423
    %v2943 = vunpack.c.l.b16 %v2424
    %v2944 = vunpack.c.l.b16 %v2425
    %v2945 = vunpack.c.l.b16 %v2426
    %v2946 = vunpack.c.l.b16 %v2427
    %v2947 = vunpack.c.l.b16 %v2428
    %v2948 = vunpack.c.l.b16 %v2429
    %v2949 = vunpack.c.l.b16 %v2430
    %v2950 = vunpack.c.l.b16 %v2431
    %v2951 = vunpack.c.l.b16 %v2432
    %v2952 = vunpack.c.l.b16 %v2433
    %v2953 = vunpack.c.l.b16 %v2434
    %v2954 = vunpack.c.l.b16 %v2435
    %v2955 = vunpack.c.l.b16 %v2436
    %v2956 = vunpack.c.l.b16 %v2437
    %v2957 = vunpack.c.l.b16 %v2438
    %v2958 = vunpack.c.l.b16 %v2439
    %v2959 = vunpack.c.l.b16 %v2440
    %v2960 = vunpack.c.l.b16 %v2441
    %v2961 = vunpack.c.l.b16 %v2442
    %v2962 = vunpack.c.l.b16 %v2443
    %v2963 = vunpack.c.l.b16 %v2444
    %v2964 = vunpack.c.l.b16 %v2445
    %v2965 = vunpack.c.l.b16 %v2446
    %v2966 = vunpack.c.l.b16 %v2447
    %v2967 = vunpack.c.l.b16 %v2448
    %v2968 = vunpack.c.l.b16 %v2449
    %v2969 = vunpack.c.l.b16 %v2450
    %v2970 = vunpack.c.l.b16 %v2451
    %v2971 = vunpack.c.l.b16 %v2452
    %v2972 = vunpack.c.l.b16 %v2453
    %v2973 = vunpack.c.l.b16 %v2454
    %v2974 = vunpack.c.l.b16 %v2455
    %v2975 = vunpack.c.l.b16 %v2456
    %v2976 = vunpack.c.l.b16 %v2457
    %v2977 = vunpack.c.l.b16 %v2458
    %v2978 = vunpack.c.l.b16 %v2459
    %v2979 = vunpack.c.l.b16 %v2460
    %v2980 = vunpack.c.l.b16 %v2461
    %v2981 = vunpack.c.l.b16 %v2462
    %v2982 = vunpack.c.l.b16 %v2463
    %v2983 = vunpack.c.l.b16 %v2464
    %v2984 = vunpack.c.l.b16 %v2465
    %v2985 = vunpack.c.l.b16 %v2466
    %v2986 = vunpack.c.l.b16 %v2467
    %v2987 = vunpack.c.l.b16 %v2468
    %v2988 = vunpack.c.l.b16 %v2469
    %v2989 = vunpack.c.l.b16 %v2470
    %v2990 = vunpack.c.l.b16 %v2471
    %v2991 = vunpack.c.l.b16 %v2472
    %v2992 = vunpack.c.l.b16 %v2473
    %v2993 = vunpack.c.l.b16 %v2474
    %v2994 = vunpack.c.l.b16 %v2475
    %v2995 = vunpack.c.l.b16 %v2476
    %v2996 = vunpack.c.l.b16 %v2477
    %v2997 = vunpack.c.l.b16 %v2478
    %v2998 = vunpack.c.l.b16 %v2479
    %v2999 = vunpack.c.l.b16 %v2480
    %v3000 = vunpack.c.l.b16 %v2481
    %v3001 = vunpack.c.l.b16 %v2482
    %v3002 = vunpack.c.l.b16 %v2483
    %v3003 = vunpack.c.l.b16 %v2484
    %v3004 = vunpack.c.l.b16 %v2485
    %v3005 = vunpack.c.l.b16 %v2486
    %v3006 = vunpack.c.l.b16 %v2487
    %v3007 = vunpack.c.l.b16 %v2488
    %v3008 = vunpack.c.l.b16 %v2489
    %v3009 = vunpack.c.l.b16 %v2490
    %v3010 = vunpack.c.l.b16 %v2491
    %v3011 = vunpack.c.l.b16 %v2492
    %v3012 = vunpack.c.l.b16 %v2493
    %v3013 = vunpack.c.l.b16 %v2494
    %v3014 = vunpack.c.l.b16 %v2495
    %v3015 = vunpack.c.l.b16 %v2496
    %v3016 = vunpack.c.l.b16 %v2497
    %v3017 = vunpack.c.l.b16 %v2498
    %v3018 = vunpack.c.l.b16 %v2499
    %v3019 = vunpack.c.l.b16 %v2500
    %v3020 = vunpack.c.l.b16 %v2501
    %v3021 = vunpack.c.l.b16 %v2502
    %v3022 = vunpack.c.l.b16 %v2503
    %v3023 = vunpack.c.l.b16 %v2504
    %v3024 = vunpack.c.l.b16 %v2505
    %v3025 = vunpack.c.l.b16 %v2506
    %v3026 = vunpack.c.l.b16 %v2507
    %v3027 = vunpack.c.l.b16 %v2508
    %v3028 = vunpack.c.l.b16 %v2509
    %v3029 = vunpack.c.l.b16 %v2510
    %v3030 = vunpack.c.l.b16 %v2511
    %v3031 = vunpack.c.l.b16 %v2512
    %v3032 = vunpack.c.l.b16 %v2513
    %v3033 = vunpack.c.l.b16 %v2514
    %v3034 = vunpack.c.l.b16 %v2515
    %v3035 = vunpack.c.l.b16 %v2516
    %v3036 = vunpack.c.l.b16 %v2517
    %v3037 = vunpack.c.l.b16 %v2518
    %v3038 = vunpack.c.l.b16 %v2519
    %v3039 = vunpack.c.l.b16 %v2520
    %v3040 = vunpack.c.l.b16 %v2521
    %v3041 = vunpack.c.l.b16 %v2522
    %v3042 = vunpack.c.l.b16 %v2523
    %v3043 = vunpack.c.l.b16 %v2524
    %v3044 = vunpack.c.l.b16 %v2525
    %v3045 = vunpack.c.l.b16 %v2526
    %v3046 = vunpack.c.l.b16 %v2527
    %v3047 = vunpack.c.l.b16 %v2528
    %v3048 = vunpack.c.l.b16 %v2529
    %v3049 = vunpack.c.l.b16 %v2530
    %v3050 = vunpack.c.l.b16 %v2531
    %v3051 = vunpack.c.l.b16 %v2532
    %v3052 = vunpack.c.l.b16 %v2533
    %v3053 = vunpack.c.l.b16 %v2534
    %v3054 = vunpack.c.l.b16 %v2535
    %v3055 = vunpack.c.l.b16 %v2536
    %v3056 = vunpack.c.l.b16 %v2537
    %v3057 = vunpack.c.l.b16 %v2538
    %v3058 = vunpack.c.l.b16 %v2539
    %v3059 = vunpack.c.l.b16 %v2540
    %v3060 = vunpack.c.l.b16 %v2541
    %v3061 = vunpack.c.l.b16 %v2542
    %v3062 = vunpack.c.l.b16 %v2543
    %v3063 = vunpack.c.l.b16 %v2544
    %v3064 = vunpack.c.l.b16 %v2545
    %v3065 = vunpack.c.l.b16 %v2546
    %v3066 = vunpack.c.l.b16 %v2547
    %v3067 = vunpack.c.l.b16 %v2548
    %v3068 = vunpack.c.l.b16 %v2549
    %v3069 = vunpack.c.l.b16 %v2550
    %v3070 = vunpack.c.l.b16 %v2551
    %v3071 = vunpack.c.l.b16 %v2552
    %v3072 = vunpack.c.l.b16 %v2553
    %v3073 = vunpack.c.l.b16 %v2554
    %v3074 = vunpack.c.l.b16 %v2555
    %v3075 = vunpack.c.l.b16 %v2556
    %v3076 = vunpack.c.l.b16 %v2557
    %v3077 = vunpack.c.l.b16 %v2558
    %v3078 = vunpack.c.l.b16 %v2559
    %v3079 = vunpack.c.l.b16 %v2560
    %v3080 = vunpack.c.l.b16 %v2561
    %v3081 = vunpack.c.l.b16 %v2562
    %v3082 = vunpack.c.l.b16 %v2563
    %v3083 = vunpack.c.l.b16 %v2564
    %v3084 = vunpack.c.l.b16 %v2565
    %v3085 = vunpack.c.l.b16 %v2566
    %v3086 = vunpack.c.l.b16 %v2567
    %v3087 = vunpack.c.l.b16 %v2568
    %v3088 = vunpack.c.l.b16 %v2569
    %v3089 = vunpack.c.l.b16 %v2570
    %v3090 = vunpack.c.l.b16 %v2571
    %v3091 = vunpack.c.l.b16 %v2572
    %v3092 = vunpack.c.l.b16 %v2573
    %v3093 = vunpack.c.l.b16 %v2574
    %v3094 = vunpack.c.l.b16 %v2575
    %v3095 = vunpack.c.l.b16 %v2576
    %v3096 = vunpack.c.l.b16 %v2577
    %v3097 = vunpack.c.l.b16 %v2578
    %v3098 = vunpack.c.l.b16 %v2579
    %v3099 = vunpack.c.l.b16 %v2580
    %v3100 = vunpack.c.l.b16 %v2581
    %v3101 = vunpack.c.l.b16 %v2582
    %v3102 = vunpack.c.l.b16 %v2583
    %v3103 = vunpack.c.l.b16 %v2584
    %v3104 = vunpack.c.l.b16 %v2585
    %v3105 = vunpack.c.l.b16 %v2586
    %v3106 = vunpack.c.l.b16 %v2587
    %v3107 = vunpack.c.l.b16 %v2588
    %v3108 = vunpack.c.l.b16 %v2589
    %v3109 = vunpack.c.l.b16 %v2590
    %v3110 = vunpack.c.l.b16 %v2591
    %v3111 = vunpack.c.l.b16 %v2592
    %v3112 = vunpack.c.l.b16 %v2593
    %v3113 = vunpack.c.l.b16 %v2594
    %v3114 = vunpack.c.l.b16 %v2595
    %v3115 = vunpack.c.l.b16 %v2596
    %v3116 = vunpack.c.l.b16 %v2597
    %v3117 = vunpack.c.l.b16 %v2598
    %v3118 = vunpack.c.l.b16 %v2599
    %v3119 = vunpack.c.l.b16 %v2600
    %v3120 = vunpack.c.l.b16 %v2601
    %v3121 = vunpack.c.l.b16 %v2602
    %v3122 = vunpack.c.l.b16 %v2603
    %v3123 = vunpack.c.l.b16 %v2604
    %v3124 = vunpack.c.l.b16 %v2605
    %v3125 = vunpack.c.l.b16 %v2606
    %v3126 = vunpack.c.l.b16 %v2607
    %v3127 = vunpack.c.l.b16 %v2608
    %v3128 = vunpack.c.l.b16 %v2609
    %v3129 = vunpack.c.l.b16 %v2610
    %v3130 = vunpack.c.l.b16 %v2611
    %v3131 = vunpack.c.l.b16 %v2612
    %v3132 = vunpack.c.l.b16 %v2613
    %v3133 = vunpack.c.l.b16 %v2614
    %v3134 = vunpack.c.l.b16 %v2615
    %v3135 = vunpack.c.l.b16 %v2616
    %v3136 = vunpack.c.l.b16 %v2617
    %v3137 = vunpack.c.l.b16 %v2618
    %v3138 = vunpack.c.l.b16 %v2619
    %v3139 = vunpack.c.l.b16 %v2620
    %v3140 = vunpack.c.l.b16 %v2621
    %v3141 = vunpack.c.l.b16 %v2622
    %v3142 = vunpack.c.l.b16 %v2623
    %v3143 = vunpack.c.l.b16 %v2624
    %v3144 = vunpack.c.l.b16 %v2625
    %v3145 = vunpack.c.l.b16 %v2626
    %v3146 = vunpack.c.l.b16 %v2627
    %v3147 = vunpack.c.l.b16 %v2628
    %v3148 = vunpack.c.l.b16 %v2629
    %v3149 = vunpack.c.l.b16 %v2630
    %v3150 = vunpack.c.l.b16 %v2631
    %v3151 = vunpack.c.l.b16 %v2632
    %v3152 = vunpack.c.l.b16 %v2633
    %v3153 = vunpack.c.l.b16 %v2634
    %v3154 = vunpack.c.l.b16 %v2635
    %v3155 = vunpack.c.l.b16 %v2636
    %v3156 = vunpack.c.l.b16 %v2637
    %v3157 = vunpack.c.l.b16 %v2638
    %v3158 = vunpack.c.l.b16 %v2639
    %v3159 = vunpack.c.l.b16 %v2640
    %v3160 = vunpack.c.l.b16 %v2641
    %v3161 = vunpack.c.l.b16 %v2642
    %v3162 = vunpack.c.l.b16 %v2643
    %v3163 = vunpack.c.l.b16 %v2644
    %v3164 = vunpack.c.l.b16 %v2645
    %v3165 = vunpack.c.l.b16 %v2646
    %v3166 = vunpack.c.l.b16 %v2647
    %v3167 = vunpack.c.l.b16 %v2648
    %v3168 = vunpack.c.l.b16 %v2649
    %v3169 = vunpack.c.l.b16 %v2650
    %v3170 = vunpack.c.l.b16 %v2651
    %v3171 = vunpack.c.l.b16 %v2652
    %v3172 = vunpack.c.l.b16 %v2653
    %v3173 = vunpack.c.l.b16 %v2654
    %v3174 = vpack.c.b16 %v2919, %v2918
    %v3175 = vpack.c.b16 %v2921, %v2920
    %v3176 = vpack.c.b16 %v2923, %v2922
    %v3177 = vpack.c.b16 %v2925, %v2924
    %v3178 = vpack.c.b16 %v2927, %v2926
    %v3179 = vpack.c.b16 %v2929, %v2928
    %v3180 = vpack.c.b16 %v2931, %v2930
    %v3181 = vpack.c.b16 %v2933, %v2932
    %v3182 = vpack.c.b16 %v2935, %v2934
    %v3183 = vpack.c.b16 %v2937, %v2936
    %v3184 = vpack.c.b16 %v2939, %v2938
    %v3185 = vpack.c.b16 %v2941, %v2940
    %v3186 = vpack.c.b16 %v2943, %v2942
    %v3187 = vpack.c.b16 %v2945, %v2944
    %v3188 = vpack.c.b16 %v2947, %v2946
    %v3189 = vpack.c.b16 %v2949, %v2948
    %v3190 = vpack.c.b16 %v2951, %v2950
    %v3191 = vpack.c.b16 %v2953, %v2952
    %v3192 = vpack.c.b16 %v2955, %v2954
    %v3193 = vpack.c.b16 %v2957, %v2956
    %v3194 = vpack.c.b16 %v2959, %v2958
    %v3195 = vpack.c.b16 %v2961, %v2960
    %v3196 = vpack.c.b16 %v2963, %v2962
    %v3197 = vpack.c.b16 %v2965, %v2964
    %v3198 = vpack.c.b16 %v2967, %v2966
    %v3199 = vpack.c.b16 %v2969, %v2968
    %v3200 = vpack.c.b16 %v2971, %v2970
    %v3201 = vpack.c.b16 %v2973, %v2972
    %v3202 = vpack.c.b16 %v2975, %v2974
    %v3203 = vpack.c.b16 %v2977, %v2976
    %v3204 = vpack.c.b16 %v2979, %v2978
    %v3205 = vpack.c.b16 %v2981, %v2980
    %v3206 = vpack.c.b16 %v2983, %v2982
    %v3207 = vpack.c.b16 %v2985, %v2984
    %v3208 = vpack.c.b16 %v2987, %v2986
    %v3209 = vpack.c.b16 %v2989, %v2988
    %v3210 = vpack.c.b16 %v2991, %v2990
    %v3211 = vpack.c.b16 %v2993, %v2992
    %v3212 = vpack.c.b16 %v2995, %v2994
    %v3213 = vpack.c.b16 %v2997, %v2996
    %v3214 = vpack.c.b16 %v2999, %v2998
    %v3215 = vpack.c.b16 %v3001, %v3000
    %v3216 = vpack.c.b16 %v3003, %v3002
    %v3217 = vpack.c.b16 %v3005, %v3004
    %v3218 = vpack.c.b16 %v3007, %v3006
    %v3219 = vpack.c.b16 %v3009, %v3008
    %v3220 = vpack.c.b16 %v3011, %v3010
    %v3221 = vpack.c.b16 %v3013, %v3012
    %v3222 = vpack.c.b16 %v3015, %v3014
    %v3223 = vpack.c.b16 %v3017, %v3016
    %v3224 = vpack.c.b16 %v3019, %v3018
    %v3225 = vpack.c.b16 %v3021, %v3020
    %v3226 = vpack.c.b16 %v3023, %v3022
    %v3227 = vpack.c.b16 %v3025, %v3024
    %v3228 = vpack.c.b16 %v3027, %v3026
    %v3229 = vpack.c.b16 %v3029, %v3028
    %v3230 = vpack.c.b16 %v3031, %v3030
    %v3231 = vpack.c.b16 %v3033, %v3032
    %v3232 = vpack.c.b16 %v3035, %v3034
    %v3233 = vpack.c.b16 %v3037, %v3036
    %v3234 = vpack.c.b16 %v3039, %v3038
    %v3235 = vpack.c.b16 %v3041, %v3040
    %v3236 = vpack.c.b16 %v3043, %v3042
    %v3237 = vpack.c.b16 %v3045, %v3044
    %v3238 = vpack.c.b16 %v3047, %v3046
    %v3239 = vpack.c.b16 %v3049, %v3048
    %v3240 = vpack.c.b16 %v3051, %v3050
    %v3241 = vpack.c.b16 %v3053, %v3052
    %v3242 = vpack.c.b16 %v3055, %v3054
    %v3243 = vpack.c.b16 %v3057, %v3056
    %v3244 = vpack.c.b16 %v3059, %v3058
    %v3245 = vpack.c.b16 %v3061, %v3060
    %v3246 = vpack.c.b16 %v3063, %v3062
    %v3247 = vpack.c.b16 %v3065, %v3064
    %v3248 = vpack.c.b16 %v3067, %v3066
    %v3249 = vpack.c.b16 %v3069, %v3068
    %v3250 = vpack.c.b16 %v3071, %v3070
    %v3251 = vpack.c.b16 %v3073, %v3072
    %v3252 = vpack.c.b16 %v3075, %v3074
    %v3253 = vpack.c.b16 %v3077, %v3076
    %v3254 = vpack.c.b16 %v3079, %v3078
    %v3255 = vpack.c.b16 %v3081, %v3080
    %v3256 = vpack.c.b16 %v3083, %v3082
    %v3257 = vpack.c.b16 %v3085, %v3084
    %v3258 = vpack.c.b16 %v3087, %v3086
    %v3259 = vpack.c.b16 %v3089, %v3088
    %v3260 = vpack.c.b16 %v3091, %v3090
    %v3261 = vpack.c.b16 %v3093, %v3092
    %v3262 = vpack.c.b16 %v3095, %v3094
    %v3263 = vpack.c.b16 %v3097, %v3096
    %v3264 = vpack.c.b16 %v3099, %v3098
    %v3265 = vpack.c.b16 %v3101, %v3100
    %v3266 = vpack.c.b16 %v3103, %v3102
    %v3267 = vpack.c.b16 %v3105, %v3104
    %v3268 = vpack.c.b16 %v3107, %v3106
    %v3269 = vpack.c.b16 %v3109, %v3108
    %v3270 = vpack.c.b16 %v3111, %v3110
    %v3271 = vpack.c.b16 %v3113, %v3112
    %v3272 = vpack.c.b16 %v3115, %v3114
    %v3273 = vpack.c.b16 %v3117, %v3116
    %v3274 = vpack.c.b16 %v3119, %v3118
    %v3275 = vpack.c.b16 %v3121, %v3120
    %v3276 = vpack.c.b16 %v3123, %v3122
    %v3277 = vpack.c.b16 %v3125, %v3124
    %v3278 = vpack.c.b16 %v3127, %v3126
    %v3279 = vpack.c.b16 %v3129, %v3128
    %v3280 = vpack.c.b16 %v3131, %v3130
    %v3281 = vpack.c.b16 %v3133, %v3132
    %v3282 = vpack.c.b16 %v3135, %v3134
    %v3283 = vpack.c.b16 %v3137, %v3136
    %v3284 = vpack.c.b16 %v3139, %v3138
    %v3285 = vpack.c.b16 %v3141, %v3140
    %v3286 = vpack.c.b16 %v3143, %v3142
    %v3287 = vpack.c.b16 %v3145, %v3144
    %v3288 = vpack.c.b16 %v3147, %v3146
    %v3289 = vpack.c.b16 %v3149, %v3148
    %v3290 = vpack.c.b16 %v3151, %v3150
    %v3291 = vpack.c.b16 %v3153, %v3152
    %v3292 = vpack.c.b16 %v3155, %v3154
    %v3293 = vpack.c.b16 %v3157, %v3156
    %v3294 = vpack.c.b16 %v3159, %v3158
    %v3295 = vpack.c.b16 %v3161, %v3160
    %v3296 = vpack.c.b16 %v3163, %v3162
    %v3297 = vpack.c.b16 %v3165, %v3164
    %v3298 = vpack.c.b16 %v3167, %v3166
    %v3299 = vpack.c.b16 %v3169, %v3168
    %v3300 = vpack.c.b16 %v3171, %v3170
    %v3301 = vpack.c.b16 %v3173, %v3172
    %3430 = vmatprep.subr.bf16.mxu0 0
    %3431 = vmatpush1.bf16.msra.mxu0 %v3174
    %3432 = vmatprep.subr.bf16.mxu0 0
    %3433 = vmatpush1.bf16.msra.mxu0 %v3175
    %3434 = vmatprep.subr.bf16.mxu0 0
    %3435 = vmatpush1.bf16.msra.mxu0 %v3176
    %3436 = vmatprep.subr.bf16.mxu0 0
    %3437 = vmatpush1.bf16.msra.mxu0 %v3177
    %3438 = vmatprep.subr.bf16.mxu0 0
    %3439 = vmatpush1.bf16.msra.mxu0 %v3178
    %3440 = vmatprep.subr.bf16.mxu0 0
    %3441 = vmatpush1.bf16.msra.mxu0 %v3179
    %3442 = vmatprep.subr.bf16.mxu0 0
    %3443 = vmatpush1.bf16.msra.mxu0 %v3180
    %3444 = vmatprep.subr.bf16.mxu0 0
    %3445 = vmatpush1.bf16.msra.mxu0 %v3181
    %3446 = vmatprep.subr.bf16.mxu0 0
    %3447 = vmatpush1.bf16.msra.mxu0 %v3182
    %3448 = vmatprep.subr.bf16.mxu0 0
    %3449 = vmatpush1.bf16.msra.mxu0 %v3183
    %3450 = vmatprep.subr.bf16.mxu0 0
    %3451 = vmatpush1.bf16.msra.mxu0 %v3184
    %3452 = vmatprep.subr.bf16.mxu0 0
    %3453 = vmatpush1.bf16.msra.mxu0 %v3185
    %3454 = vmatprep.subr.bf16.mxu0 0
    %3455 = vmatpush1.bf16.msra.mxu0 %v3186
    %3456 = vmatprep.subr.bf16.mxu0 0
    %3457 = vmatpush1.bf16.msra.mxu0 %v3187
    %3458 = vmatprep.subr.bf16.mxu0 0
    %3459 = vmatpush1.bf16.msra.mxu0 %v3188
    %3460 = vmatprep.subr.bf16.mxu0 0
    %3461 = vmatpush1.bf16.msra.mxu0 %v3189
    %3462 = vmatprep.mubr.bf16.mxu0 %v2397
    %3463 = vmatmul.mubr.bf16.gmra.mrb[0].mxu0 %v955
    %v3464 = vpop.f32.mrb[0].mxu0
    %v3465 = vadd.f32 %v2660, %v3464
    %v3466 = vpop.f32.mrb[0].mxu0
    %v3467 = vpop.f32.mrb[0].mxu0
    %v3468 = vpop.f32.mrb[0].mxu0
    %3469 = vdwg.mxu0
    %3470 = vmatprep.subr.bf16.mxu0 0
    %3471 = vmatpush1.bf16.msra.mxu0 %v3190
    %3472 = vmatprep.subr.bf16.mxu0 0
    %3473 = vmatpush1.bf16.msra.mxu0 %v3191
    %3474 = vmatprep.subr.bf16.mxu0 0
    %3475 = vmatpush1.bf16.msra.mxu0 %v3192
    %3476 = vmatprep.subr.bf16.mxu0 0
    %3477 = vmatpush1.bf16.msra.mxu0 %v3193
    %3478 = vmatprep.subr.bf16.mxu0 0
    %3479 = vmatpush1.bf16.msra.mxu0 %v3194
    %3480 = vmatprep.subr.bf16.mxu0 0
    %3481 = vmatpush1.bf16.msra.mxu0 %v3195
    %3482 = vmatprep.subr.bf16.mxu0 0
    %3483 = vmatpush1.bf16.msra.mxu0 %v3196
    %3484 = vmatprep.subr.bf16.mxu0 0
    %3485 = vmatpush1.bf16.msra.mxu0 %v3197
    %3486 = vmatprep.subr.bf16.mxu0 0
    %3487 = vmatpush1.bf16.msra.mxu0 %v3198
    %3488 = vmatprep.subr.bf16.mxu0 0
    %3489 = vmatpush1.bf16.msra.mxu0 %v3199
    %3490 = vmatprep.subr.bf16.mxu0 0
    %3491 = vmatpush1.bf16.msra.mxu0 %v3200
    %3492 = vmatprep.subr.bf16.mxu0 0
    %3493 = vmatpush1.bf16.msra.mxu0 %v3201
    %3494 = vmatprep.subr.bf16.mxu0 0
    %3495 = vmatpush1.bf16.msra.mxu0 %v3202
    %3496 = vmatprep.subr.bf16.mxu0 0
    %3497 = vmatpush1.bf16.msra.mxu0 %v3203
    %3498 = vmatprep.subr.bf16.mxu0 0
    %3499 = vmatpush1.bf16.msra.mxu0 %v3204
    %3500 = vmatprep.subr.bf16.mxu0 0
    %3501 = vmatpush1.bf16.msra.mxu0 %v3205
    %3502 = vmatprep.mubr.bf16.mxu0 %v2294
    %3503 = vmatmul.mubr.bf16.gmra.mrb[0].mxu0 %v1161
    %v3504 = vpop.f32.mrb[0].mxu0
    %v3505 = vadd.f32 %v3465, %v3504
    %v3506 = vpop.f32.mrb[0].mxu0
    %v3507 = vpop.f32.mrb[0].mxu0
    %v3508 = vpop.f32.mrb[0].mxu0
    %3509 = vdwg.mxu0
    %3510 = vmatprep.subr.bf16.mxu0 0
    %3511 = vmatpush1.bf16.msra.mxu0 %v3206
    %3512 = vmatprep.subr.bf16.mxu0 0
    %3513 = vmatpush1.bf16.msra.mxu0 %v3207
    %3514 = vmatprep.subr.bf16.mxu0 0
    %3515 = vmatpush1.bf16.msra.mxu0 %v3208
    %3516 = vmatprep.subr.bf16.mxu0 0
    %3517 = vmatpush1.bf16.msra.mxu0 %v3209
    %3518 = vmatprep.subr.bf16.mxu0 0
    %3519 = vmatpush1.bf16.msra.mxu0 %v3210
    %3520 = vmatprep.subr.bf16.mxu0 0
    %3521 = vmatpush1.bf16.msra.mxu0 %v3211
    %3522 = vmatprep.subr.bf16.mxu0 0
    %3523 = vmatpush1.bf16.msra.mxu0 %v3212
    %3524 = vmatprep.subr.bf16.mxu0 0
    %3525 = vmatpush1.bf16.msra.mxu0 %v3213
    %3526 = vmatprep.subr.bf16.mxu0 0
    %3527 = vmatpush1.bf16.msra.mxu0 %v3214
    %3528 = vmatprep.subr.bf16.mxu0 0
    %3529 = vmatpush1.bf16.msra.mxu0 %v3215
    %3530 = vmatprep.subr.bf16.mxu0 0
    %3531 = vmatpush1.bf16.msra.mxu0 %v3216
    %3532 = vmatprep.subr.bf16.mxu0 0
    %3533 = vmatpush1.bf16.msra.mxu0 %v3217
    %3534 = vmatprep.subr.bf16.mxu0 0
    %3535 = vmatpush1.bf16.msra.mxu0 %v3218
    %3536 = vmatprep.subr.bf16.mxu0 0
    %3537 = vmatpush1.bf16.msra.mxu0 %v3219
    %3538 = vmatprep.subr.bf16.mxu0 0
    %3539 = vmatpush1.bf16.msra.mxu0 %v3220
    %3540 = vmatprep.subr.bf16.mxu0 0
    %3541 = vmatpush1.bf16.msra.mxu0 %v3221
    %3542 = vmatprep.mubr.bf16.mxu0 %v2088
    %3543 = vmatmul.mubr.bf16.gmra.mrb[0].mxu0 %v1367
    %v3544 = vpop.f32.mrb[0].mxu0
    %v3545 = vadd.f32 %v3505, %v3544
    %v3546 = vpop.f32.mrb[0].mxu0
    %v3547 = vpop.f32.mrb[0].mxu0
    %v3548 = vpop.f32.mrb[0].mxu0
    %3549 = vdwg.mxu0
    %3550 = vmatprep.subr.bf16.mxu0 0
    %3551 = vmatpush1.bf16.msra.mxu0 %v3222
    %3552 = vmatprep.subr.bf16.mxu0 0
    %3553 = vmatpush1.bf16.msra.mxu0 %v3223
    %3554 = vmatprep.subr.bf16.mxu0 0
    %3555 = vmatpush1.bf16.msra.mxu0 %v3224
    %3556 = vmatprep.subr.bf16.mxu0 0
    %3557 = vmatpush1.bf16.msra.mxu0 %v3225
    %3558 = vmatprep.subr.bf16.mxu0 0
    %3559 = vmatpush1.bf16.msra.mxu0 %v3226
    %3560 = vmatprep.subr.bf16.mxu0 0
    %3561 = vmatpush1.bf16.msra.mxu0 %v3227
    %3562 = vmatprep.subr.bf16.mxu0 0
    %3563 = vmatpush1.bf16.msra.mxu0 %v3228
    %3564 = vmatprep.subr.bf16.mxu0 0
    %3565 = vmatpush1.bf16.msra.mxu0 %v3229
    %3566 = vmatprep.subr.bf16.mxu0 0
    %3567 = vmatpush1.bf16.msra.mxu0 %v3230
    %3568 = vmatprep.subr.bf16.mxu0 0
    %3569 = vmatpush1.bf16.msra.mxu0 %v3231
    %3570 = vmatprep.subr.bf16.mxu0 0
    %3571 = vmatpush1.bf16.msra.mxu0 %v3232
    %3572 = vmatprep.subr.bf16.mxu0 0
    %3573 = vmatpush1.bf16.msra.mxu0 %v3233
    %3574 = vmatprep.subr.bf16.mxu0 0
    %3575 = vmatpush1.bf16.msra.mxu0 %v3234
    %3576 = vmatprep.subr.bf16.mxu0 0
    %3577 = vmatpush1.bf16.msra.mxu0 %v3235
    %3578 = vmatprep.subr.bf16.mxu0 0
    %3579 = vmatpush1.bf16.msra.mxu0 %v3236
    %3580 = vmatprep.subr.bf16.mxu0 0
    %3581 = vmatpush1.bf16.msra.mxu0 %v3237
    %3582 = vmatprep.mubr.bf16.mxu0 %v1882
    %3583 = vmatmul.mubr.bf16.gmra.mrb[0].mxu0 %v1573
    %v3584 = vpop.f32.mrb[0].mxu0
    %v3585 = vadd.f32 %v3545, %v3584
    %v3586 = vpop.f32.mrb[0].mxu0
    %v3587 = vpop.f32.mrb[0].mxu0
    %v3588 = vpop.f32.mrb[0].mxu0
    %3589 = vdwg.mxu0
    %3590 = vmatprep.subr.bf16.mxu0 0
    %3591 = vmatpush1.bf16.msra.mxu0 %v3238
    %3592 = vmatprep.subr.bf16.mxu0 0
    %3593 = vmatpush1.bf16.msra.mxu0 %v3239
    %3594 = vmatprep.subr.bf16.mxu0 0
    %3595 = vmatpush1.bf16.msra.mxu0 %v3240
    %3596 = vmatprep.subr.bf16.mxu0 0
    %3597 = vmatpush1.bf16.msra.mxu0 %v3241
    %3598 = vmatprep.subr.bf16.mxu0 0
    %3599 = vmatpush1.bf16.msra.mxu0 %v3242
    %3600 = vmatprep.subr.bf16.mxu0 0
    %3601 = vmatpush1.bf16.msra.mxu0 %v3243
    %3602 = vmatprep.subr.bf16.mxu0 0
    %3603 = vmatpush1.bf16.msra.mxu0 %v3244
    %3604 = vmatprep.subr.bf16.mxu0 0
    %3605 = vmatpush1.bf16.msra.mxu0 %v3245
    %3606 = vmatprep.subr.bf16.mxu0 0
    %3607 = vmatpush1.bf16.msra.mxu0 %v3246
    %3608 = vmatprep.subr.bf16.mxu0 0
    %3609 = vmatpush1.bf16.msra.mxu0 %v3247
    %3610 = vmatprep.subr.bf16.mxu0 0
    %3611 = vmatpush1.bf16.msra.mxu0 %v3248
    %3612 = vmatprep.subr.bf16.mxu0 0
    %3613 = vmatpush1.bf16.msra.mxu0 %v3249
    %3614 = vmatprep.subr.bf16.mxu0 0
    %3615 = vmatpush1.bf16.msra.mxu0 %v3250
    %3616 = vmatprep.subr.bf16.mxu0 0
    %3617 = vmatpush1.bf16.msra.mxu0 %v3251
    %3618 = vmatprep.subr.bf16.mxu0 0
    %3619 = vmatpush1.bf16.msra.mxu0 %v3252
    %3620 = vmatprep.subr.bf16.mxu0 0
    %3621 = vmatpush1.bf16.msra.mxu0 %v3253
    %3622 = vmatprep.mubr.bf16.mxu0 %v1676
    %3623 = vmatmul.mubr.bf16.gmra.mrb[0].mxu0 %v1779
    %v3624 = vpop.f32.mrb[0].mxu0
    %v3625 = vadd.f32 %v3585, %v3624
    %v3626 = vpop.f32.mrb[0].mxu0
    %v3627 = vpop.f32.mrb[0].mxu0
    %v3628 = vpop.f32.mrb[0].mxu0
    %3629 = vdwg.mxu0
    %3630 = vmatprep.subr.bf16.mxu0 0
    %3631 = vmatpush1.bf16.msra.mxu0 %v3254
    %3632 = vmatprep.subr.bf16.mxu0 0
    %3633 = vmatpush1.bf16.msra.mxu0 %v3255
    %3634 = vmatprep.subr.bf16.mxu0 0
    %3635 = vmatpush1.bf16.msra.mxu0 %v3256
    %3636 = vmatprep.subr.bf16.mxu0 0
    %3637 = vmatpush1.bf16.msra.mxu0 %v3257
    %3638 = vmatprep.subr.bf16.mxu0 0
    %3639 = vmatpush1.bf16.msra.mxu0 %v3258
    %3640 = vmatprep.subr.bf16.mxu0 0
    %3641 = vmatpush1.bf16.msra.mxu0 %v3259
    %3642 = vmatprep.subr.bf16.mxu0 0
    %3643 = vmatpush1.bf16.msra.mxu0 %v3260
    %3644 = vmatprep.subr.bf16.mxu0 0
    %3645 = vmatpush1.bf16.msra.mxu0 %v3261
    %3646 = vmatprep.subr.bf16.mxu0 0
    %3647 = vmatpush1.bf16.msra.mxu0 %v3262
    %3648 = vmatprep.subr.bf16.mxu0 0
    %3649 = vmatpush1.bf16.msra.mxu0 %v3263
    %3650 = vmatprep.subr.bf16.mxu0 0
    %3651 = vmatpush1.bf16.msra.mxu0 %v3264
    %3652 = vmatprep.subr.bf16.mxu0 0
    %3653 = vmatpush1.bf16.msra.mxu0 %v3265
    %3654 = vmatprep.subr.bf16.mxu0 0
    %3655 = vmatpush1.bf16.msra.mxu0 %v3266
    %3656 = vmatprep.subr.bf16.mxu0 0
    %3657 = vmatpush1.bf16.msra.mxu0 %v3267
    %3658 = vmatprep.subr.bf16.mxu0 0
    %3659 = vmatpush1.bf16.msra.mxu0 %v3268
    %3660 = vmatprep.subr.bf16.mxu0 0
    %3661 = vmatpush1.bf16.msra.mxu0 %v3269
    %3662 = vmatprep.mubr.bf16.mxu0 %v1470
    %3663 = vmatmul.mubr.bf16.gmra.mrb[0].mxu0 %v1985
    %v3664 = vpop.f32.mrb[0].mxu0
    %v3665 = vadd.f32 %v3625, %v3664
    %v3666 = vpop.f32.mrb[0].mxu0
    %v3667 = vpop.f32.mrb[0].mxu0
    %v3668 = vpop.f32.mrb[0].mxu0
    %3669 = vdwg.mxu0
    %3670 = vmatprep.subr.bf16.mxu0 0
    %3671 = vmatpush1.bf16.msra.mxu0 %v3270
    %3672 = vmatprep.subr.bf16.mxu0 0
    %3673 = vmatpush1.bf16.msra.mxu0 %v3271
    %3674 = vmatprep.subr.bf16.mxu0 0
    %3675 = vmatpush1.bf16.msra.mxu0 %v3272
    %3676 = vmatprep.subr.bf16.mxu0 0
    %3677 = vmatpush1.bf16.msra.mxu0 %v3273
    %3678 = vmatprep.subr.bf16.mxu0 0
    %3679 = vmatpush1.bf16.msra.mxu0 %v3274
    %3680 = vmatprep.subr.bf16.mxu0 0
    %3681 = vmatpush1.bf16.msra.mxu0 %v3275
    %3682 = vmatprep.subr.bf16.mxu0 0
    %3683 = vmatpush1.bf16.msra.mxu0 %v3276
    %3684 = vmatprep.subr.bf16.mxu0 0
    %3685 = vmatpush1.bf16.msra.mxu0 %v3277
    %3686 = vmatprep.subr.bf16.mxu0 0
    %3687 = vmatpush1.bf16.msra.mxu0 %v3278
    %3688 = vmatprep.subr.bf16.mxu0 0
    %3689 = vmatpush1.bf16.msra.mxu0 %v3279
    %3690 = vmatprep.subr.bf16.mxu0 0
    %3691 = vmatpush1.bf16.msra.mxu0 %v3280
    %3692 = vmatprep.subr.bf16.mxu0 0
    %3693 = vmatpush1.bf16.msra.mxu0 %v3281
    %3694 = vmatprep.subr.bf16.mxu0 0
    %3695 = vmatpush1.bf16.msra.mxu0 %v3282
    %3696 = vmatprep.subr.bf16.mxu0 0
    %3697 = vmatpush1.bf16.msra.mxu0 %v3283
    %3698 = vmatprep.subr.bf16.mxu0 0
    %3699 = vmatpush1.bf16.msra.mxu0 %v3284
    %3700 = vmatprep.subr.bf16.mxu0 0
    %3701 = vmatpush1.bf16.msra.mxu0 %v3285
    %3702 = vmatprep.mubr.bf16.mxu0 %v1264
    %3703 = vmatmul.mubr.bf16.gmra.mrb[0].mxu0 %v2191
    %v3704 = vpop.f32.mrb[0].mxu0
    %v3705 = vadd.f32 %v3665, %v3704
    %v3706 = vpop.f32.mrb[0].mxu0
    %v3707 = vpop.f32.mrb[0].mxu0
    %v3708 = vpop.f32.mrb[0].mxu0
    %3709 = vdwg.mxu0
    %3710 = vmatprep.subr.bf16.mxu0 0
    %3711 = vmatpush1.bf16.msra.mxu0 %v3286
    %3712 = vmatprep.subr.bf16.mxu0 0
    %3713 = vmatpush1.bf16.msra.mxu0 %v3287
    %3714 = vmatprep.subr.bf16.mxu0 0
    %3715 = vmatpush1.bf16.msra.mxu0 %v3288
    %3716 = vmatprep.subr.bf16.mxu0 0
    %3717 = vmatpush1.bf16.msra.mxu0 %v3289
    %3718 = vmatprep.subr.bf16.mxu0 0
    %3719 = vmatpush1.bf16.msra.mxu0 %v3290
    %3720 = vmatprep.subr.bf16.mxu0 0
    %3721 = vmatpush1.bf16.msra.mxu0 %v3291
    %3722 = vmatprep.subr.bf16.mxu0 0
    %3723 = vmatpush1.bf16.msra.mxu0 %v3292
    %3724 = vmatprep.subr.bf16.mxu0 0
    %3725 = vmatpush1.bf16.msra.mxu0 %v3293
    %3726 = vmatprep.subr.bf16.mxu0 0
    %3727 = vmatpush1.bf16.msra.mxu0 %v3294
    %3728 = vmatprep.subr.bf16.mxu0 0
    %3729 = vmatpush1.bf16.msra.mxu0 %v3295
    %3730 = vmatprep.subr.bf16.mxu0 0
    %3731 = vmatpush1.bf16.msra.mxu0 %v3296
    %3732 = vmatprep.subr.bf16.mxu0 0
    %3733 = vmatpush1.bf16.msra.mxu0 %v3297
    %3734 = vmatprep.subr.bf16.mxu0 0
    %3735 = vmatpush1.bf16.msra.mxu0 %v3298
    %3736 = vmatprep.subr.bf16.mxu0 0
    %3737 = vmatpush1.bf16.msra.mxu0 %v3299
    %3738 = vmatprep.subr.bf16.mxu0 0
    %3739 = vmatpush1.bf16.msra.mxu0 %v3300
    %3740 = vmatprep.subr.bf16.mxu0 0
    %3741 = vmatpush1.bf16.msra.mxu0 %v3301
    %3742 = vmatprep.mubr.bf16.mxu0 %v1058
    %3743 = vmatmul.mubr.bf16.gmra.mrb[0].mxu0 %v2398
    %v3744 = vpop.f32.mrb[0].mxu0
    %v3745 = vadd.f32 %v3705, %v3744
    %v3746 = vpop.f32.mrb[0].mxu0
    %v3747 = vpop.f32.mrb[0].mxu0
    %v3748 = vpop.f32.mrb[0].mxu0
    %3749 = vdwg.mxu0
    %3750 = vst [vmem:[#allocation10] sm:$0xff] %v3745
    // Predicated region
    $region54: #{tpu_custom_call.1} parent=1 // pred_check
      _
    $region55: #{tpu_custom_call.1} parent=1 // pred_check_branch
      %3752 = sbr.rel (0) target = $region57
    $region56: #{tpu_custom_call.1} parent=1 // pred_region
      %s3754 = ssub.s32 128, 128
      %3755 = vsyncadd [#allocation4], %s3754
      %s3757 = sshll.u32 [#allocation10], 4
      %s3758 = int_to_ptr.vmem [resolvable:$true] %s3757
      %3760 = dma.vmem_to_hbm [thread:$0]  %s3758, 128, %s9, [#allocation4]
    $region57: #{tpu_custom_call.1} parent=1 // pred_fallthru
      _
    // Predicated region
    $region58: #{tpu_custom_call.1} parent=1 // pred_check
      _
    $region59: #{tpu_custom_call.1} parent=1 // pred_check_branch
      %3762 = sbr.rel (0) target = $region61
    $region60: #{tpu_custom_call.1} parent=1 // pred_region
      %3763 = dma.done [#allocation4], 128
    $region61: #{tpu_custom_call.1} parent=1 // pred_fallthru
      _
    %3764 = vsyncpa [#allocation3], 1
    %3765 = vsyncpa [#allocation6], 1
    %3766 = vsyncpa [#allocation9], 1
    %3767 = vsyncpa [#allocation4], 1

</llo_original>
